<compile_context>
chip_gen: v7x
topology: tpu7x:2x2x1
jax: 0.10.0
libtpu: 0.0.40
codegen_flags: <defaults>
</compile_context>

<pallas_src>
import functools

import jax
import jax.numpy as jnp
from jax import lax
from jax.experimental import pallas as pl
from jax.experimental.pallas import tpu as pltpu


def _basic_block_kernel(x_ref, w1_ref, w2_ref, out_ref, *, H, W, Wp):
    # x_ref  : (nb, Cin, L)    per-image flat padded slab, row stride Wp, L >= S1 + 2*Wp + 2
    # w1_ref : (9, Cout, Cin)  tap-major weights, k = ky*3 + kx
    # w2_ref : (9, Cout, Cout)
    # out_ref: (nb, Cout, S2)  S2 = H*Wp  (4 garbage columns per row, cropped by wrapper)
    nb = x_ref.shape[0]
    Cout = w1_ref.shape[1]
    He, We = H + 2, W + 2
    S2 = H * Wp                    # conv2 / output domain (stride Wp)
    S1 = S2 + 2 * Wp + 2           # extended conv1 domain (covers every conv2 tap window)

    # Interior mask of the padded conv1 intermediate, built in-kernel (no HBM mask input).
    # row/col recovered from the flat lane index with an exact float floor-div (no int div).
    p = lax.broadcasted_iota(jnp.int32, (1, S1), 1).astype(jnp.float32)
    row = jnp.floor((p + 0.5) * (1.0 / Wp))
    col = p - row * Wp
    interior = ((row >= 1.0) & (row <= float(He - 2)) &
                (col >= 1.0) & (col <= float(We - 2)))

    for n in range(nb):                                   # static unroll over block batch
        # ---- conv1 on the extended stride-Wp domain; bn1 identity; ReLU ----
        acc1 = jnp.zeros((Cout, S1), jnp.float32)
        for k in range(9):
            i, j = divmod(k, 3)
            tap = x_ref[n, :, i * Wp + j: i * Wp + j + S1]            # (Cin, S1) contiguous
            acc1 = acc1 + jnp.dot(w1_ref[k], tap,
                                  preferred_element_type=jnp.float32)
        # Zeroed border == the zero-padded relu(conv1(x)) that conv2 needs (registers only).
        mid = jnp.where(interior, jnp.maximum(acc1, 0.0), 0.0).astype(x_ref.dtype)

        # ---- conv2 on the stride-Wp output domain; bn2 identity ----
        acc2 = jnp.zeros((Cout, S2), jnp.float32)
        for k in range(9):
            i, j = divmod(k, 3)
            tap = mid[:, i * Wp + j: i * Wp + j + S2]                 # (Cout, S2) contiguous
            acc2 = acc2 + jnp.dot(w2_ref[k], tap,
                                  preferred_element_type=jnp.float32)

        # residual = centre window of the same padded slab; final ReLU; NCHW-native store
        res = x_ref[n, :, 2 * Wp + 2: 2 * Wp + 2 + S2].astype(jnp.float32)
        out_ref[n] = jnp.maximum(acc2 + res, 0.0).astype(out_ref.dtype)


@functools.partial(jax.jit, static_argnames=("images_per_block",))
def basic_block_pallas(x, w1_oihw, w2_oihw, *, images_per_block=1):
    """BasicBlock forward. x: (N, C, H, W) NCHW, weights OIHW (PyTorch conv layout)."""
    N, C, H, W = x.shape
    Cout = w1_oihw.shape[0]
    assert Cout == C, "stride=1 / no-downsample BasicBlock requires inplanes == planes"
    nb = images_per_block
    assert N % nb == 0, "images_per_block must divide the batch"

    Hp, Wp = H + 4, W + 4
    S2 = H * Wp
    S1 = S2 + 2 * Wp + 2
    L_need = S1 + 2 * Wp + 2
    extra_rows = -(-max(L_need - Hp * Wp, 0) // Wp)       # slack rows so all taps stay in-bounds
    L = (Hp + extra_rows) * Wp

    # Single fused layout pass: pad NCHW by 2 (plus slack rows) and flatten H,W.
    # No NHWC transpose anywhere; the kernel's output is already NCHW.
    xpad = jnp.pad(x, ((0, 0), (0, 0), (2, 2 + extra_rows), (2, 2))).reshape(N, C, L)
    # OIHW -> (ky*3+kx, Cout, Cin): one leading tap index, minor dims feed the MXU lhs.
    w1 = jnp.transpose(w1_oihw, (2, 3, 0, 1)).reshape(9, Cout, C)
    w2 = jnp.transpose(w2_oihw, (2, 3, 0, 1)).reshape(9, Cout, Cout)

    kernel = functools.partial(_basic_block_kernel, H=H, W=W, Wp=Wp)
    out_flat = pl.pallas_call(
        kernel,
        out_shape=jax.ShapeDtypeStruct((N, Cout, S2), x.dtype),
        grid=(N // nb,),
        in_specs=[
            pl.BlockSpec((nb, C, L), lambda g: (g, 0, 0)),
            pl.BlockSpec((9, Cout, C), lambda g: (0, 0, 0)),       # VMEM-resident weights
            pl.BlockSpec((9, Cout, Cout), lambda g: (0, 0, 0)),
        ],
        out_specs=pl.BlockSpec((nb, Cout, S2), lambda g: (g, 0, 0)),
        compiler_params=pltpu.CompilerParams(
            dimension_semantics=("parallel",)),
    )(xpad, w1, w2)

    # Crop the 4 stride-garbage columns per row (free reshape + tiny slice, fused by XLA).
    return out_flat.reshape(N, Cout, H, Wp)[:, :, :, :W]


def basic_block_reference(x_nchw, w1_oihw, w2_oihw):
    """Pure-JAX reference (lax conv) for verification."""
    dn = lax.conv_dimension_numbers(x_nchw.shape, w1_oihw.shape, ("NCHW", "OIHW", "NCHW"))
    out = lax.conv_general_dilated(x_nchw, w1_oihw, (1, 1), ((1, 1), (1, 1)),
                                   dimension_numbers=dn)
    out = jnp.maximum(out, 0.0)
    out = lax.conv_general_dilated(out, w2_oihw, (1, 1), ((1, 1), (1, 1)),
                                   dimension_numbers=dn)
    out = out + x_nchw
    return jnp.maximum(out, 0.0)


if __name__ == "__main__":
    key = jax.random.PRNGKey(0)
    kx, k1, k2 = jax.random.split(key, 3)

    N, C, H, W = 2, 4, 16, 16   # inplanes = planes = 4, stride = 1, downsample = None
    x = jax.random.normal(kx, (N, C, H, W), dtype=jnp.float32)
    # PyTorch OIHW weights (planes, inplanes, 3, 3), no bias
    w1 = 0.1 * jax.random.normal(k1, (C, C, 3, 3), dtype=jnp.float32)
    w2 = 0.1 * jax.random.normal(k2, (C, C, 3, 3), dtype=jnp.float32)

    # nb=1 -> grid (2,): keeps both v7x TensorCores busy at this tiny batch; raise
    # images_per_block for larger N to amortize per-grid-step overhead with bigger DMAs.
    out = jax.block_until_ready(basic_block_pallas(x, w1, w2, images_per_block=1))

    ref = basic_block_reference(x, w1, w2)
    assert out.shape == (N, C, H, W)
    assert jnp.allclose(out, ref, atol=1e-4, rtol=1e-4), "mismatch vs reference"

    print("KERNEL_OK")
</pallas_src>

<mosaic_0001>
module attributes {stable_mosaic.version = 11 : i64} {
  func.func @_basic_block_kernel(%arg0: i32, %arg1: memref<1x4x420xf32, #tpu.memory_space<vmem>>, %arg2: memref<9x4x4xf32, #tpu.memory_space<vmem>>, %arg3: memref<9x4x4xf32, #tpu.memory_space<vmem>>, %arg4: memref<1x4x320xf32, #tpu.memory_space<vmem>>) attributes {dimension_semantics = [#tpu.dimension_semantics<parallel>], iteration_bounds = array<i64: 2>, scalar_prefetch = 0 : i64, scratch_operands = 0 : i64, tpu.core_type = #tpu.core_type<tc>, window_params = [{transform_indices = @transform_0, window_bounds = array<i64: 1, 4, 420>}, {pipeline_mode = #tpu.pipeline_mode<synchronous>, transform_indices = @transform_1, window_bounds = array<i64: 9, 4, 4>}, {pipeline_mode = #tpu.pipeline_mode<synchronous>, transform_indices = @transform_2, window_bounds = array<i64: 9, 4, 4>}, {transform_indices = @transform_3, window_bounds = array<i64: 1, 4, 320>}]} {
    %0 = tpu.iota {dimensions = array<i32: 1>} : vector<1x362xi32>
    %1 = arith.sitofp %0 : vector<1x362xi32> to vector<1x362xf32>
    %cst = arith.constant 5.000000e-01 : f32
    %2 = vector.broadcast %cst : f32 to vector<1x362xf32>
    %3 = arith.addf %1, %2 : vector<1x362xf32>
    %cst_0 = arith.constant 5.000000e-02 : f32
    %4 = vector.broadcast %cst_0 : f32 to vector<1x362xf32>
    %5 = arith.mulf %3, %4 : vector<1x362xf32>
    %6 = math.floor %5 : vector<1x362xf32>
    %cst_1 = arith.constant 2.000000e+01 : f32
    %7 = vector.broadcast %cst_1 : f32 to vector<1x362xf32>
    %8 = arith.mulf %6, %7 : vector<1x362xf32>
    %9 = arith.subf %1, %8 : vector<1x362xf32>
    %cst_2 = arith.constant 1.000000e+00 : f32
    %10 = vector.broadcast %cst_2 : f32 to vector<1x362xf32>
    %11 = arith.cmpf oge, %6, %10 : vector<1x362xf32>
    %cst_3 = arith.constant 1.600000e+01 : f32
    %12 = vector.broadcast %cst_3 : f32 to vector<1x362xf32>
    %13 = arith.cmpf ole, %6, %12 : vector<1x362xf32>
    %14 = arith.andi %11, %13 : vector<1x362xi1>
    %cst_4 = arith.constant 1.000000e+00 : f32
    %15 = vector.broadcast %cst_4 : f32 to vector<1x362xf32>
    %16 = arith.cmpf oge, %9, %15 : vector<1x362xf32>
    %17 = arith.andi %14, %16 : vector<1x362xi1>
    %cst_5 = arith.constant 1.600000e+01 : f32
    %18 = vector.broadcast %cst_5 : f32 to vector<1x362xf32>
    %19 = arith.cmpf ole, %9, %18 : vector<1x362xf32>
    %20 = arith.andi %17, %19 : vector<1x362xi1>
    %cst_6 = arith.constant 0.000000e+00 : f32
    %21 = vector.broadcast %cst_6 : f32 to vector<4x362xf32>
    %c0 = arith.constant 0 : index
    %c0_7 = arith.constant 0 : index
    %c0_8 = arith.constant 0 : index
    %22 = vector.load %arg1[%c0, %c0_7, %c0_8] : memref<1x4x420xf32, #tpu.memory_space<vmem>>, vector<1x4x362xf32>
    %23 = vector.shape_cast %22 : vector<1x4x362xf32> to vector<4x362xf32>
    %c0_9 = arith.constant 0 : index
    %c0_10 = arith.constant 0 : index
    %c0_11 = arith.constant 0 : index
    %24 = vector.load %arg2[%c0_9, %c0_10, %c0_11] : memref<9x4x4xf32, #tpu.memory_space<vmem>>, vector<1x4x4xf32>
    %25 = vector.shape_cast %24 : vector<1x4x4xf32> to vector<4x4xf32>
    %cst_12 = arith.constant dense<0.000000e+00> : vector<4x362xf32>
    %26 = tpu.matmul %25, %23, %cst_12 {dimension_numbers = #tpu.dot_dimension_numbers<[1], [0], [0], [1], [0, 0, 1, 1], [], []>} : vector<4x4xf32>, vector<4x362xf32>, vector<4x362xf32> -> vector<4x362xf32>
    %27 = arith.addf %21, %26 : vector<4x362xf32>
    %c0_13 = arith.constant 0 : index
    %c0_14 = arith.constant 0 : index
    %c1 = arith.constant 1 : index
    %28 = vector.load %arg1[%c0_13, %c0_14, %c1] : memref<1x4x420xf32, #tpu.memory_space<vmem>>, vector<1x4x362xf32>
    %29 = vector.shape_cast %28 : vector<1x4x362xf32> to vector<4x362xf32>
    %c1_15 = arith.constant 1 : index
    %c0_16 = arith.constant 0 : index
    %c0_17 = arith.constant 0 : index
    %30 = vector.load %arg2[%c1_15, %c0_16, %c0_17] : memref<9x4x4xf32, #tpu.memory_space<vmem>>, vector<1x4x4xf32>
    %31 = vector.shape_cast %30 : vector<1x4x4xf32> to vector<4x4xf32>
    %cst_18 = arith.constant dense<0.000000e+00> : vector<4x362xf32>
    %32 = tpu.matmul %31, %29, %cst_18 {dimension_numbers = #tpu.dot_dimension_numbers<[1], [0], [0], [1], [0, 0, 1, 1], [], []>} : vector<4x4xf32>, vector<4x362xf32>, vector<4x362xf32> -> vector<4x362xf32>
    %33 = arith.addf %27, %32 : vector<4x362xf32>
    %c0_19 = arith.constant 0 : index
    %c0_20 = arith.constant 0 : index
    %c2 = arith.constant 2 : index
    %34 = vector.load %arg1[%c0_19, %c0_20, %c2] : memref<1x4x420xf32, #tpu.memory_space<vmem>>, vector<1x4x362xf32>
    %35 = vector.shape_cast %34 : vector<1x4x362xf32> to vector<4x362xf32>
    %c2_21 = arith.constant 2 : index
    %c0_22 = arith.constant 0 : index
    %c0_23 = arith.constant 0 : index
    %36 = vector.load %arg2[%c2_21, %c0_22, %c0_23] : memref<9x4x4xf32, #tpu.memory_space<vmem>>, vector<1x4x4xf32>
    %37 = vector.shape_cast %36 : vector<1x4x4xf32> to vector<4x4xf32>
    %cst_24 = arith.constant dense<0.000000e+00> : vector<4x362xf32>
    %38 = tpu.matmul %37, %35, %cst_24 {dimension_numbers = #tpu.dot_dimension_numbers<[1], [0], [0], [1], [0, 0, 1, 1], [], []>} : vector<4x4xf32>, vector<4x362xf32>, vector<4x362xf32> -> vector<4x362xf32>
    %39 = arith.addf %33, %38 : vector<4x362xf32>
    %c0_25 = arith.constant 0 : index
    %c0_26 = arith.constant 0 : index
    %c20 = arith.constant 20 : index
    %40 = vector.load %arg1[%c0_25, %c0_26, %c20] : memref<1x4x420xf32, #tpu.memory_space<vmem>>, vector<1x4x362xf32>
    %41 = vector.shape_cast %40 : vector<1x4x362xf32> to vector<4x362xf32>
    %c3 = arith.constant 3 : index
    %c0_27 = arith.constant 0 : index
    %c0_28 = arith.constant 0 : index
    %42 = vector.load %arg2[%c3, %c0_27, %c0_28] : memref<9x4x4xf32, #tpu.memory_space<vmem>>, vector<1x4x4xf32>
    %43 = vector.shape_cast %42 : vector<1x4x4xf32> to vector<4x4xf32>
    %cst_29 = arith.constant dense<0.000000e+00> : vector<4x362xf32>
    %44 = tpu.matmul %43, %41, %cst_29 {dimension_numbers = #tpu.dot_dimension_numbers<[1], [0], [0], [1], [0, 0, 1, 1], [], []>} : vector<4x4xf32>, vector<4x362xf32>, vector<4x362xf32> -> vector<4x362xf32>
    %45 = arith.addf %39, %44 : vector<4x362xf32>
    %c0_30 = arith.constant 0 : index
    %c0_31 = arith.constant 0 : index
    %c21 = arith.constant 21 : index
    %46 = vector.load %arg1[%c0_30, %c0_31, %c21] : memref<1x4x420xf32, #tpu.memory_space<vmem>>, vector<1x4x362xf32>
    %47 = vector.shape_cast %46 : vector<1x4x362xf32> to vector<4x362xf32>
    %c4 = arith.constant 4 : index
    %c0_32 = arith.constant 0 : index
    %c0_33 = arith.constant 0 : index
    %48 = vector.load %arg2[%c4, %c0_32, %c0_33] : memref<9x4x4xf32, #tpu.memory_space<vmem>>, vector<1x4x4xf32>
    %49 = vector.shape_cast %48 : vector<1x4x4xf32> to vector<4x4xf32>
    %cst_34 = arith.constant dense<0.000000e+00> : vector<4x362xf32>
    %50 = tpu.matmul %49, %47, %cst_34 {dimension_numbers = #tpu.dot_dimension_numbers<[1], [0], [0], [1], [0, 0, 1, 1], [], []>} : vector<4x4xf32>, vector<4x362xf32>, vector<4x362xf32> -> vector<4x362xf32>
    %51 = arith.addf %45, %50 : vector<4x362xf32>
    %c0_35 = arith.constant 0 : index
    %c0_36 = arith.constant 0 : index
    %c22 = arith.constant 22 : index
    %52 = vector.load %arg1[%c0_35, %c0_36, %c22] : memref<1x4x420xf32, #tpu.memory_space<vmem>>, vector<1x4x362xf32>
    %53 = vector.shape_cast %52 : vector<1x4x362xf32> to vector<4x362xf32>
    %c5 = arith.constant 5 : index
    %c0_37 = arith.constant 0 : index
    %c0_38 = arith.constant 0 : index
    %54 = vector.load %arg2[%c5, %c0_37, %c0_38] : memref<9x4x4xf32, #tpu.memory_space<vmem>>, vector<1x4x4xf32>
    %55 = vector.shape_cast %54 : vector<1x4x4xf32> to vector<4x4xf32>
    %cst_39 = arith.constant dense<0.000000e+00> : vector<4x362xf32>
    %56 = tpu.matmul %55, %53, %cst_39 {dimension_numbers = #tpu.dot_dimension_numbers<[1], [0], [0], [1], [0, 0, 1, 1], [], []>} : vector<4x4xf32>, vector<4x362xf32>, vector<4x362xf32> -> vector<4x362xf32>
    %57 = arith.addf %51, %56 : vector<4x362xf32>
    %c0_40 = arith.constant 0 : index
    %c0_41 = arith.constant 0 : index
    %c40 = arith.constant 40 : index
    %58 = vector.load %arg1[%c0_40, %c0_41, %c40] : memref<1x4x420xf32, #tpu.memory_space<vmem>>, vector<1x4x362xf32>
    %59 = vector.shape_cast %58 : vector<1x4x362xf32> to vector<4x362xf32>
    %c6 = arith.constant 6 : index
    %c0_42 = arith.constant 0 : index
    %c0_43 = arith.constant 0 : index
    %60 = vector.load %arg2[%c6, %c0_42, %c0_43] : memref<9x4x4xf32, #tpu.memory_space<vmem>>, vector<1x4x4xf32>
    %61 = vector.shape_cast %60 : vector<1x4x4xf32> to vector<4x4xf32>
    %cst_44 = arith.constant dense<0.000000e+00> : vector<4x362xf32>
    %62 = tpu.matmul %61, %59, %cst_44 {dimension_numbers = #tpu.dot_dimension_numbers<[1], [0], [0], [1], [0, 0, 1, 1], [], []>} : vector<4x4xf32>, vector<4x362xf32>, vector<4x362xf32> -> vector<4x362xf32>
    %63 = arith.addf %57, %62 : vector<4x362xf32>
    %c0_45 = arith.constant 0 : index
    %c0_46 = arith.constant 0 : index
    %c41 = arith.constant 41 : index
    %64 = vector.load %arg1[%c0_45, %c0_46, %c41] : memref<1x4x420xf32, #tpu.memory_space<vmem>>, vector<1x4x362xf32>
    %65 = vector.shape_cast %64 : vector<1x4x362xf32> to vector<4x362xf32>
    %c7 = arith.constant 7 : index
    %c0_47 = arith.constant 0 : index
    %c0_48 = arith.constant 0 : index
    %66 = vector.load %arg2[%c7, %c0_47, %c0_48] : memref<9x4x4xf32, #tpu.memory_space<vmem>>, vector<1x4x4xf32>
    %67 = vector.shape_cast %66 : vector<1x4x4xf32> to vector<4x4xf32>
    %cst_49 = arith.constant dense<0.000000e+00> : vector<4x362xf32>
    %68 = tpu.matmul %67, %65, %cst_49 {dimension_numbers = #tpu.dot_dimension_numbers<[1], [0], [0], [1], [0, 0, 1, 1], [], []>} : vector<4x4xf32>, vector<4x362xf32>, vector<4x362xf32> -> vector<4x362xf32>
    %69 = arith.addf %63, %68 : vector<4x362xf32>
    %c0_50 = arith.constant 0 : index
    %c0_51 = arith.constant 0 : index
    %c42 = arith.constant 42 : index
    %70 = vector.load %arg1[%c0_50, %c0_51, %c42] : memref<1x4x420xf32, #tpu.memory_space<vmem>>, vector<1x4x362xf32>
    %71 = vector.shape_cast %70 : vector<1x4x362xf32> to vector<4x362xf32>
    %c8 = arith.constant 8 : index
    %c0_52 = arith.constant 0 : index
    %c0_53 = arith.constant 0 : index
    %72 = vector.load %arg2[%c8, %c0_52, %c0_53] : memref<9x4x4xf32, #tpu.memory_space<vmem>>, vector<1x4x4xf32>
    %73 = vector.shape_cast %72 : vector<1x4x4xf32> to vector<4x4xf32>
    %cst_54 = arith.constant dense<0.000000e+00> : vector<4x362xf32>
    %74 = tpu.matmul %73, %71, %cst_54 {dimension_numbers = #tpu.dot_dimension_numbers<[1], [0], [0], [1], [0, 0, 1, 1], [], []>} : vector<4x4xf32>, vector<4x362xf32>, vector<4x362xf32> -> vector<4x362xf32>
    %75 = arith.addf %69, %74 : vector<4x362xf32>
    %cst_55 = arith.constant 0.000000e+00 : f32
    %76 = vector.broadcast %cst_55 : f32 to vector<4x362xf32>
    %77 = arith.maximumf %75, %76 : vector<4x362xf32>
    %cst_56 = arith.constant 0.000000e+00 : f32
    %78 = vector.shape_cast %20 : vector<1x362xi1> to vector<1x362xi1>
    %79 = vector.broadcast %78 : vector<1x362xi1> to vector<4x362xi1>
    %80 = vector.broadcast %cst_56 : f32 to vector<4x362xf32>
    %81 = arith.select %79, %77, %80 : vector<4x362xi1>, vector<4x362xf32>
    %cst_57 = arith.constant 0.000000e+00 : f32
    %82 = vector.broadcast %cst_57 : f32 to vector<4x320xf32>
    %83 = vector.extract_strided_slice %81 {offsets = [0, 0], sizes = [4, 320], strides = [1, 1]} : vector<4x362xf32> to vector<4x320xf32>
    %c0_58 = arith.constant 0 : index
    %c0_59 = arith.constant 0 : index
    %c0_60 = arith.constant 0 : index
    %84 = vector.load %arg3[%c0_58, %c0_59, %c0_60] : memref<9x4x4xf32, #tpu.memory_space<vmem>>, vector<1x4x4xf32>
    %85 = vector.shape_cast %84 : vector<1x4x4xf32> to vector<4x4xf32>
    %cst_61 = arith.constant dense<0.000000e+00> : vector<4x320xf32>
    %86 = tpu.matmul %85, %83, %cst_61 {dimension_numbers = #tpu.dot_dimension_numbers<[1], [0], [0], [1], [0, 0, 1, 1], [], []>} : vector<4x4xf32>, vector<4x320xf32>, vector<4x320xf32> -> vector<4x320xf32>
    %87 = arith.addf %82, %86 : vector<4x320xf32>
    %88 = vector.extract_strided_slice %81 {offsets = [0, 1], sizes = [4, 320], strides = [1, 1]} : vector<4x362xf32> to vector<4x320xf32>
    %c1_62 = arith.constant 1 : index
    %c0_63 = arith.constant 0 : index
    %c0_64 = arith.constant 0 : index
    %89 = vector.load %arg3[%c1_62, %c0_63, %c0_64] : memref<9x4x4xf32, #tpu.memory_space<vmem>>, vector<1x4x4xf32>
    %90 = vector.shape_cast %89 : vector<1x4x4xf32> to vector<4x4xf32>
    %cst_65 = arith.constant dense<0.000000e+00> : vector<4x320xf32>
    %91 = tpu.matmul %90, %88, %cst_65 {dimension_numbers = #tpu.dot_dimension_numbers<[1], [0], [0], [1], [0, 0, 1, 1], [], []>} : vector<4x4xf32>, vector<4x320xf32>, vector<4x320xf32> -> vector<4x320xf32>
    %92 = arith.addf %87, %91 : vector<4x320xf32>
    %93 = vector.extract_strided_slice %81 {offsets = [0, 2], sizes = [4, 320], strides = [1, 1]} : vector<4x362xf32> to vector<4x320xf32>
    %c2_66 = arith.constant 2 : index
    %c0_67 = arith.constant 0 : index
    %c0_68 = arith.constant 0 : index
    %94 = vector.load %arg3[%c2_66, %c0_67, %c0_68] : memref<9x4x4xf32, #tpu.memory_space<vmem>>, vector<1x4x4xf32>
    %95 = vector.shape_cast %94 : vector<1x4x4xf32> to vector<4x4xf32>
    %cst_69 = arith.constant dense<0.000000e+00> : vector<4x320xf32>
    %96 = tpu.matmul %95, %93, %cst_69 {dimension_numbers = #tpu.dot_dimension_numbers<[1], [0], [0], [1], [0, 0, 1, 1], [], []>} : vector<4x4xf32>, vector<4x320xf32>, vector<4x320xf32> -> vector<4x320xf32>
    %97 = arith.addf %92, %96 : vector<4x320xf32>
    %98 = vector.extract_strided_slice %81 {offsets = [0, 20], sizes = [4, 320], strides = [1, 1]} : vector<4x362xf32> to vector<4x320xf32>
    %c3_70 = arith.constant 3 : index
    %c0_71 = arith.constant 0 : index
    %c0_72 = arith.constant 0 : index
    %99 = vector.load %arg3[%c3_70, %c0_71, %c0_72] : memref<9x4x4xf32, #tpu.memory_space<vmem>>, vector<1x4x4xf32>
    %100 = vector.shape_cast %99 : vector<1x4x4xf32> to vector<4x4xf32>
    %cst_73 = arith.constant dense<0.000000e+00> : vector<4x320xf32>
    %101 = tpu.matmul %100, %98, %cst_73 {dimension_numbers = #tpu.dot_dimension_numbers<[1], [0], [0], [1], [0, 0, 1, 1], [], []>} : vector<4x4xf32>, vector<4x320xf32>, vector<4x320xf32> -> vector<4x320xf32>
    %102 = arith.addf %97, %101 : vector<4x320xf32>
    %103 = vector.extract_strided_slice %81 {offsets = [0, 21], sizes = [4, 320], strides = [1, 1]} : vector<4x362xf32> to vector<4x320xf32>
    %c4_74 = arith.constant 4 : index
    %c0_75 = arith.constant 0 : index
    %c0_76 = arith.constant 0 : index
    %104 = vector.load %arg3[%c4_74, %c0_75, %c0_76] : memref<9x4x4xf32, #tpu.memory_space<vmem>>, vector<1x4x4xf32>
    %105 = vector.shape_cast %104 : vector<1x4x4xf32> to vector<4x4xf32>
    %cst_77 = arith.constant dense<0.000000e+00> : vector<4x320xf32>
    %106 = tpu.matmul %105, %103, %cst_77 {dimension_numbers = #tpu.dot_dimension_numbers<[1], [0], [0], [1], [0, 0, 1, 1], [], []>} : vector<4x4xf32>, vector<4x320xf32>, vector<4x320xf32> -> vector<4x320xf32>
    %107 = arith.addf %102, %106 : vector<4x320xf32>
    %108 = vector.extract_strided_slice %81 {offsets = [0, 22], sizes = [4, 320], strides = [1, 1]} : vector<4x362xf32> to vector<4x320xf32>
    %c5_78 = arith.constant 5 : index
    %c0_79 = arith.constant 0 : index
    %c0_80 = arith.constant 0 : index
    %109 = vector.load %arg3[%c5_78, %c0_79, %c0_80] : memref<9x4x4xf32, #tpu.memory_space<vmem>>, vector<1x4x4xf32>
    %110 = vector.shape_cast %109 : vector<1x4x4xf32> to vector<4x4xf32>
    %cst_81 = arith.constant dense<0.000000e+00> : vector<4x320xf32>
    %111 = tpu.matmul %110, %108, %cst_81 {dimension_numbers = #tpu.dot_dimension_numbers<[1], [0], [0], [1], [0, 0, 1, 1], [], []>} : vector<4x4xf32>, vector<4x320xf32>, vector<4x320xf32> -> vector<4x320xf32>
    %112 = arith.addf %107, %111 : vector<4x320xf32>
    %113 = vector.extract_strided_slice %81 {offsets = [0, 40], sizes = [4, 320], strides = [1, 1]} : vector<4x362xf32> to vector<4x320xf32>
    %c6_82 = arith.constant 6 : index
    %c0_83 = arith.constant 0 : index
    %c0_84 = arith.constant 0 : index
    %114 = vector.load %arg3[%c6_82, %c0_83, %c0_84] : memref<9x4x4xf32, #tpu.memory_space<vmem>>, vector<1x4x4xf32>
    %115 = vector.shape_cast %114 : vector<1x4x4xf32> to vector<4x4xf32>
    %cst_85 = arith.constant dense<0.000000e+00> : vector<4x320xf32>
    %116 = tpu.matmul %115, %113, %cst_85 {dimension_numbers = #tpu.dot_dimension_numbers<[1], [0], [0], [1], [0, 0, 1, 1], [], []>} : vector<4x4xf32>, vector<4x320xf32>, vector<4x320xf32> -> vector<4x320xf32>
    %117 = arith.addf %112, %116 : vector<4x320xf32>
    %118 = vector.extract_strided_slice %81 {offsets = [0, 41], sizes = [4, 320], strides = [1, 1]} : vector<4x362xf32> to vector<4x320xf32>
    %c7_86 = arith.constant 7 : index
    %c0_87 = arith.constant 0 : index
    %c0_88 = arith.constant 0 : index
    %119 = vector.load %arg3[%c7_86, %c0_87, %c0_88] : memref<9x4x4xf32, #tpu.memory_space<vmem>>, vector<1x4x4xf32>
    %120 = vector.shape_cast %119 : vector<1x4x4xf32> to vector<4x4xf32>
    %cst_89 = arith.constant dense<0.000000e+00> : vector<4x320xf32>
    %121 = tpu.matmul %120, %118, %cst_89 {dimension_numbers = #tpu.dot_dimension_numbers<[1], [0], [0], [1], [0, 0, 1, 1], [], []>} : vector<4x4xf32>, vector<4x320xf32>, vector<4x320xf32> -> vector<4x320xf32>
    %122 = arith.addf %117, %121 : vector<4x320xf32>
    %123 = vector.extract_strided_slice %81 {offsets = [0, 42], sizes = [4, 320], strides = [1, 1]} : vector<4x362xf32> to vector<4x320xf32>
    %c8_90 = arith.constant 8 : index
    %c0_91 = arith.constant 0 : index
    %c0_92 = arith.constant 0 : index
    %124 = vector.load %arg3[%c8_90, %c0_91, %c0_92] : memref<9x4x4xf32, #tpu.memory_space<vmem>>, vector<1x4x4xf32>
    %125 = vector.shape_cast %124 : vector<1x4x4xf32> to vector<4x4xf32>
    %cst_93 = arith.constant dense<0.000000e+00> : vector<4x320xf32>
    %126 = tpu.matmul %125, %123, %cst_93 {dimension_numbers = #tpu.dot_dimension_numbers<[1], [0], [0], [1], [0, 0, 1, 1], [], []>} : vector<4x4xf32>, vector<4x320xf32>, vector<4x320xf32> -> vector<4x320xf32>
    %127 = arith.addf %122, %126 : vector<4x320xf32>
    %c0_94 = arith.constant 0 : index
    %c0_95 = arith.constant 0 : index
    %c42_96 = arith.constant 42 : index
    %128 = vector.load %arg1[%c0_94, %c0_95, %c42_96] : memref<1x4x420xf32, #tpu.memory_space<vmem>>, vector<1x4x320xf32>
    %129 = vector.shape_cast %128 : vector<1x4x320xf32> to vector<4x320xf32>
    %130 = arith.addf %127, %129 : vector<4x320xf32>
    %cst_97 = arith.constant 0.000000e+00 : f32
    %131 = vector.broadcast %cst_97 : f32 to vector<4x320xf32>
    %132 = arith.maximumf %130, %131 : vector<4x320xf32>
    %c0_98 = arith.constant 0 : index
    %c0_99 = arith.constant 0 : index
    %c0_100 = arith.constant 0 : index
    %133 = vector.load %arg4[%c0_98, %c0_99, %c0_100] : memref<1x4x320xf32, #tpu.memory_space<vmem>>, vector<1x4x320xf32>
    %134 = vector.shape_cast %133 : vector<1x4x320xf32> to vector<4x320xf32>
    %135 = vector.shape_cast %132 : vector<4x320xf32> to vector<1x4x320xf32>
    tpu.vector_store %arg4[%c0_98, %c0_99, %c0_100], %135 {strides = array<i32>} : memref<1x4x320xf32, #tpu.memory_space<vmem>>, vector<1x4x320xf32>,
    return
  }
  func.func @transform_0(%arg0: i32) -> (i32, i32, i32) {
    %c0_i32 = arith.constant 0 : i32
    %c0_i32_0 = arith.constant 0 : i32
    %c0_i32_1 = arith.constant 0 : i32
    return %arg0, %c0_i32, %c0_i32_0 : i32, i32, i32
  }
  func.func @transform_1(%arg0: i32) -> (i32, i32, i32) {
    %c0_i32 = arith.constant 0 : i32
    %c0_i32_0 = arith.constant 0 : i32
    %c0_i32_1 = arith.constant 0 : i32
    %c0_i32_2 = arith.constant 0 : i32
    return %c0_i32, %c0_i32_0, %c0_i32_1 : i32, i32, i32
  }
  func.func @transform_2(%arg0: i32) -> (i32, i32, i32) {
    %c0_i32 = arith.constant 0 : i32
    %c0_i32_0 = arith.constant 0 : i32
    %c0_i32_1 = arith.constant 0 : i32
    %c0_i32_2 = arith.constant 0 : i32
    return %c0_i32, %c0_i32_0, %c0_i32_1 : i32, i32, i32
  }
  func.func @transform_3(%arg0: i32) -> (i32, i32, i32) {
    %c0_i32 = arith.constant 0 : i32
    %c0_i32_0 = arith.constant 0 : i32
    %c0_i32_1 = arith.constant 0 : i32
    return %arg0, %c0_i32, %c0_i32_0 : i32, i32, i32
  }
}

</mosaic_0001>

<llo_original>
// kernel: basic_block_pallas.1
$region0: #{basic_block_pallas.1}
  #allocation0 [shape = 'u32[]', space=smem, size = 0x4, offset = 0x4, fixed_abs, tag = 'smem constant byte address 0x4 - core index']
  #allocation1 [shape = 'u32[144,128]{1,0:T(1,128)}', space=vmem, size = 0x12000, scoped, tag = 'internal scratch']
  %s0 = inlined_call_operand.vmem [shape: f32[2,4,420], index: 0, kind: input, shape index: {}]
  %s1 = inlined_call_operand.vmem [shape: f32[9,4,4], index: 1, kind: input, shape index: {}]
  %s2 = inlined_call_operand.vmem [shape: f32[9,4,4], index: 2, kind: input, shape index: {}]
  %s3 = inlined_call_operand.vmem [shape: f32[2,4,320], index: 3, kind: output, shape index: {}]
  %s4 = sld [smem:[#allocation0]]
  $region45: #{basic_block_pallas.1} parent=0
    _
  %s6 = ssub.s32 1, %s4
  %s7 = scalar_select 0, %s6, %s4
  loop: start=0, step=1, limit=4
  $region2: #{basic_block_pallas.1} parent=0 // loop_pre_header
    _
  $region3: #{basic_block_pallas.1} parent=0 // loop_header
    %s9 = sphi 0, %s13
    %p10 = scmp.ge.s32.totalorder %s9, 4
    %s19 = sphi 0, %s21
    %s22 = sphi 0, %s19
    %s23 = sphi 0, %s22
    %s39 = sphi 0, %s23
    %s43 = sphi 0, %s43
    %s45 = sphi 0, %s43
    %s46 = sphi 0, %s45
    %s60 = sphi 0, %s46
    %s64 = sphi 0, %s64
    %s66 = sphi 0, %s64
    %s67 = sphi 0, %s66
    %s81 = sphi 0, %s67
    %s87 = sphi 0, %s89
    %s90 = sphi 0, %s87
    %s91 = sphi 0, %s90
    %s107 = sphi 0, %s91
  $region4: #{basic_block_pallas.1} parent=0 // loop_header_branch
    %12 = sbr.rel (%p10) target = $region8
  $region5: #{basic_block_pallas.1} parent=0 // loop_body
    %s14 = ssub.s32 %s9, 1
    %s15 = ssub.s32 %s9, 2
    %s16 = sadd.s32 %s9, 1
    %s17 = ssub.s32 %s9, %s16
    %p18 = scmp.eq.s32.totalorder %s17, 0
    %s20 = sadd.s32 %s19, 1
    %s21 = scalar_select %p18, %s19, %s20
    %p24 = pneg %p18
    %p25 = scmp.eq.s32.totalorder %s9, 1
    %p26 = por %p24, %p25
    %p27 = scmp.ne.s32.totalorder %s19, %s22
    %p28 = scmp.eq.s32.totalorder %s9, 0
    %p29 = por %p27, %p28
    %p30 = scmp.ne.s32.totalorder %s19, %s22
    %p31 = scmp.eq.s32.totalorder %s14, 1
    %p32 = por %p30, %p31
    %p33 = scmp.ne.s32.totalorder %s22, %s23
    %p34 = scmp.eq.s32.totalorder %s14, 0
    %p35 = por %p33, %p34
    %p36 = scmp.ne.s32.totalorder %s22, %s23
    %p37 = scmp.eq.s32.totalorder %s15, 1
    %p38 = por %p36, %p37
    %p40 = scmp.ne.s32.totalorder %s23, %s39
    %p41 = scmp.eq.s32.totalorder %s15, 0
    %p42 = por %p40, %p41
    %s44 = sadd.s32 %s43, 1
    %p47 = scmp.eq.s32.totalorder %s9, 1
    %p48 = scmp.ne.s32.totalorder %s43, %s45
    %p49 = scmp.eq.s32.totalorder %s9, 0
    %p50 = por %p48, %p49
    %p51 = scmp.ne.s32.totalorder %s43, %s45
    %p52 = scmp.eq.s32.totalorder %s14, 1
    %p53 = por %p51, %p52
    %p54 = scmp.ne.s32.totalorder %s45, %s46
    %p55 = scmp.eq.s32.totalorder %s14, 0
    %p56 = por %p54, %p55
    %p57 = scmp.ne.s32.totalorder %s45, %s46
    %p58 = scmp.eq.s32.totalorder %s15, 1
    %p59 = por %p57, %p58
    %p61 = scmp.ne.s32.totalorder %s46, %s60
    %p62 = scmp.eq.s32.totalorder %s15, 0
    %p63 = por %p61, %p62
    %s65 = sadd.s32 %s64, 1
    %p68 = scmp.eq.s32.totalorder %s9, 1
    %p69 = scmp.ne.s32.totalorder %s64, %s66
    %p70 = scmp.eq.s32.totalorder %s9, 0
    %p71 = por %p69, %p70
    %p72 = scmp.ne.s32.totalorder %s64, %s66
    %p73 = scmp.eq.s32.totalorder %s14, 1
    %p74 = por %p72, %p73
    %p75 = scmp.ne.s32.totalorder %s66, %s67
    %p76 = scmp.eq.s32.totalorder %s14, 0
    %p77 = por %p75, %p76
    %p78 = scmp.ne.s32.totalorder %s66, %s67
    %p79 = scmp.eq.s32.totalorder %s15, 1
    %p80 = por %p78, %p79
    %p82 = scmp.ne.s32.totalorder %s67, %s81
    %p83 = scmp.eq.s32.totalorder %s15, 0
    %p84 = por %p82, %p83
    %s85 = ssub.s32 %s9, %s16
    %p86 = scmp.eq.s32.totalorder %s85, 0
    %s88 = sadd.s32 %s87, 1
    %s89 = scalar_select %p86, %s87, %s88
    %p92 = pneg %p86
    %p93 = scmp.eq.s32.totalorder %s9, 1
    %p94 = por %p92, %p93
    %p95 = scmp.ne.s32.totalorder %s87, %s90
    %p96 = scmp.eq.s32.totalorder %s9, 0
    %p97 = por %p95, %p96
    %p98 = scmp.ne.s32.totalorder %s87, %s90
    %p99 = scmp.eq.s32.totalorder %s14, 1
    %p100 = por %p98, %p99
    %p101 = scmp.ne.s32.totalorder %s90, %s91
    %p102 = scmp.eq.s32.totalorder %s14, 0
    %p103 = por %p101, %p102
    %p104 = scmp.ne.s32.totalorder %s90, %s91
    %p105 = scmp.eq.s32.totalorder %s15, 1
    %p106 = por %p104, %p105
    %p108 = scmp.ne.s32.totalorder %s91, %s107
    %p109 = scmp.eq.s32.totalorder %s15, 0
    %p110 = por %p108, %p109
    %p111 = scmp.le.s32.totalorder 1, %s9
    %p112 = scmp.lt.s32.totalorder %s9, 3
    %p113 = pnand %p111, %p112
    %p114 = pneg %p113
    // Predicated region
    $region9: #{basic_block_pallas.1} parent=5 // pred_check
      _
    $region10: #{basic_block_pallas.1} parent=5 // pred_check_branch
      %116 = sbr.rel (%p113) target = $region12
    $region11: #{basic_block_pallas.1} parent=5 // pred_region
      %s117 = ssub.s32 %s9, 1
      // Predicated region
      $region13: #{basic_block_pallas.1} parent=11 // pred_check
        %p118 = pneg %p56
      $region14: #{basic_block_pallas.1} parent=11 // pred_check_branch
        %120 = sbr.rel (%p118) target = $region16
      $region15: #{basic_block_pallas.1} parent=11 // pred_region
        _
      $region16: #{basic_block_pallas.1} parent=11 // pred_fallthru
        _
      // Predicated region
      $region17: #{basic_block_pallas.1} parent=11 // pred_check
        %p121 = pneg %p77
      $region18: #{basic_block_pallas.1} parent=11 // pred_check_branch
        %123 = sbr.rel (%p121) target = $region20
      $region19: #{basic_block_pallas.1} parent=11 // pred_region
        _
      $region20: #{basic_block_pallas.1} parent=11 // pred_fallthru
        _
    $region12: #{basic_block_pallas.1} parent=5 // pred_fallthru
      _
    %p124 = scmp.lt.s32.totalorder %s9, 2
    // Predicated region
    $region21: #{basic_block_pallas.1} parent=5 // pred_check
      %p125 = pneg %p124
    $region22: #{basic_block_pallas.1} parent=5 // pred_check_branch
      %127 = sbr.rel (%p125) target = $region24
    $region23: #{basic_block_pallas.1} parent=5 // pred_region
      // Predicated region
      $region25: #{basic_block_pallas.1} parent=23 // pred_check
        %p128 = pneg %p29
      $region26: #{basic_block_pallas.1} parent=23 // pred_check_branch
        %130 = sbr.rel (%p128) target = $region28
      $region27: #{basic_block_pallas.1} parent=23 // pred_region
        %p131 = scmp.lt.s32.totalorder %s9, 1
        %s132 = scalar_select %p131, %s9, 1
        %s133 = smul.addr %s132, 4
        %s134 = smul.addr %s133, 4
        %s135 = scalar_lea.vmem %s0, %s134
      $region28: #{basic_block_pallas.1} parent=23 // pred_fallthru
        _
    $region24: #{basic_block_pallas.1} parent=5 // pred_fallthru
      _
    %p136 = scmp.le.s32.totalorder 1, %s9
    %p137 = scmp.lt.s32.totalorder %s9, 3
    %p138 = pnand %p136, %p137
    %p139 = pneg %p138
    // Predicated region
    $region29: #{basic_block_pallas.1} parent=5 // pred_check
      _
    $region30: #{basic_block_pallas.1} parent=5 // pred_check_branch
      %141 = sbr.rel (%p138) target = $region32
    $region31: #{basic_block_pallas.1} parent=5 // pred_region
      %s142 = ssub.s32 %s9, 1
      %p143 = scmp.lt.s32.totalorder %s14, 1
      %s144 = scalar_select %p143, %s14, 1
      %s145 = smul.addr %s144, 4
      %s146 = smul.addr %s145, 4
      %s147 = scalar_lea.vmem %s0, %s146
      %p148 = pneg %p35
      %p149 = pneg %p32
      %p150 = pneg %p56
      %p151 = pneg %p53
      %p152 = pneg %p77
      %p153 = pneg %p74
      %p154 = pneg %p103
      %p155 = pneg %p100
      %p156 = scmp.lt.s32.totalorder %s14, 1
      %s157 = scalar_select %p156, %s14, 1
      %s158 = smul.addr %s157, 3
      %s159 = smul.addr %s158, 4
      %s160 = scalar_lea.vmem %s3, %s159
      %p161 = scmp.lt.s32.totalorder %s14, 1
      %s162 = scalar_select %p161, %s14, 1
      %s163 = smul.addr %s162, 4
      %s164 = smul.addr %s163, 4
      %s165 = scalar_lea.vmem %s0, %s164
      %p166 = scmp.lt.s32.totalorder %s14, 1
      %s167 = scalar_select %p166, %s14, 1
      %s168 = smul.addr %s167, 3
      %s169 = smul.addr %s168, 4
      %s170 = scalar_lea.vmem %s3, %s169
      %v171 = vlaneseq
      %v172 = vand.u32 %v171, 127
      %v173 = vadd.s32 %v172, 128
      %v174 = vadd.s32 %v172, 256
      %v175 = vcvt.s32.f32 %v172
      %v176 = vcvt.s32.f32 %v173
      %v177 = vcvt.s32.f32 %v174
      %v178 = vadd.f32 %v175, 0.5
      %v179 = vadd.f32 %v176, 0.5
      %v180 = vadd.f32 %v177, 0.5
      %v181 = vmul.f32 %v178, 0.05
      %v182 = vmul.f32 %v179, 0.05
      %v183 = vmul.f32 %v180, 0.05
      %v184 = vfloor.f32 %v181
      %v185 = vfloor.f32 %v182
      %v186 = vfloor.f32 %v183
      %v187 = vmul.f32 %v184, 20.0
      %v188 = vmul.f32 %v185, 20.0
      %v189 = vmul.f32 %v186, 20.0
      %v190 = vsub.f32 %v175, %v187
      %v191 = vsub.f32 %v176, %v188
      %v192 = vsub.f32 %v177, %v189
      %vm193 = vcmp.ge.f32.partialorder %v184, 1.0
      %vm194 = vcmp.ge.f32.partialorder %v185, 1.0
      %vm195 = vcmp.ge.f32.partialorder %v186, 1.0
      %vm196 = vcmp.le.f32.partialorder %v184, 16.0
      %vm197 = vcmp.le.f32.partialorder %v185, 16.0
      %vm198 = vcmp.le.f32.partialorder %v186, 16.0
      %vm199 = vmand %vm193, %vm196
      %vm200 = vmand %vm194, %vm197
      %vm201 = vmand %vm195, %vm198
      %vm202 = vcmp.ge.f32.partialorder %v190, 1.0
      %vm203 = vcmp.ge.f32.partialorder %v191, 1.0
      %vm204 = vcmp.ge.f32.partialorder %v192, 1.0
      %vm205 = vmand %vm199, %vm202
      %vm206 = vmand %vm200, %vm203
      %vm207 = vmand %vm201, %vm204
      %vm208 = vcmp.le.f32.partialorder %v190, 16.0
      %vm209 = vcmp.le.f32.partialorder %v191, 16.0
      %vm210 = vcmp.le.f32.partialorder %v192, 16.0
      %vm211 = vmand %vm205, %vm208
      %vm212 = vmand %vm206, %vm209
      %vm213 = vmand %vm207, %vm210
      %v214 = vld [vmem:[%s165] sm:$0xff]
      %v215 = vld [vmem:[%s165 + $0x8] sm:$0xf]
      %v216 = vld [vmem:[%s1] sm:$0xf]
      %s217 = scalar_lea.vmem %s1, 4
      %v218 = vld [vmem:[%s217] sm:$0xf]
      %v221 = vcombine.high %v214, %v214
      %222 = vrot.lane.b32.xlu0 %v214, 127
      %v223 = vpop.permute.xlu0 %222
      %224 = vrot.lane.b32.xlu0 %v221, 127
      %v225 = vpop.permute.xlu0 %224
      %226 = vrot.lane.b32.xlu0 %v215, 127
      %v227 = vpop.permute.xlu0 %226
      %vm228 = vcmask 1039360
      %v229 = vsel %vm228, %v223, %v225
      %v230 = vsel %vm228, %v225, %v227
      %vm231 = vcmask 31744
      %v233 = vsel %vm231, %v218, 0
      %vm235 = vcmask 1043456
      %v236 = vsel %vm235, %v229, 0
      %v238 = vsel %vm235, %v230, 0
      %v240 = vsel %vm235, %v227, 0
      %242 = vmatprep.subr.mxu0 %v238
      %243 = vmatpush1.msra.mxu0 %v236
      %244 = vmatprep.subr.mxu0 0.0
      %245 = vmatpush1.msra.mxu0 0.0
      %246 = vmatprep.subr.mxu0 0.0
      %247 = vmatpush1.msra.mxu0 0.0
      %248 = vmatprep.subr.mxu0 0.0
      %249 = vmatpush1.msra.mxu0 0.0
      %250 = vmatprep.subr.mxu0 0.0
      %251 = vmatpush1.msra.mxu0 0.0
      %252 = vmatprep.subr.mxu0 0.0
      %253 = vmatpush1.msra.mxu0 0.0
      %254 = vmatprep.subr.mxu0 0.0
      %255 = vmatpush1.msra.mxu0 0.0
      %256 = vmatprep.subr.mxu0 0.0
      %257 = vmatpush1.msra.mxu0 0.0
      %258 = vmatprep.subr.mxu0 0.0
      %259 = vmatpush1.msra.mxu0 0.0
      %260 = vmatprep.subr.mxu0 0.0
      %261 = vmatpush1.msra.mxu0 0.0
      %262 = vmatprep.subr.mxu0 0.0
      %263 = vmatpush1.msra.mxu0 0.0
      %264 = vmatprep.subr.mxu0 0.0
      %265 = vmatpush1.msra.mxu0 0.0
      %266 = vmatprep.subr.mxu0 0.0
      %267 = vmatpush1.msra.mxu0 0.0
      %268 = vmatprep.subr.mxu0 0.0
      %269 = vmatpush1.msra.mxu0 0.0
      %270 = vmatprep.subr.mxu0 0.0
      %271 = vmatpush1.msra.mxu0 0.0
      %272 = vmatprep.subr.mxu0 0.0
      %273 = vmatpush1.msra.mxu0 0.0
      %274 = vmatprep.subr.mxu0 0.0
      %275 = vmatpush1.msra.mxu0 0.0
      %276 = vmatprep.subr.mxu0 0.0
      %277 = vmatpush1.msra.mxu0 0.0
      %278 = vmatprep.subr.mxu0 0.0
      %279 = vmatpush1.msra.mxu0 0.0
      %280 = vmatprep.subr.mxu0 0.0
      %281 = vmatpush1.msra.mxu0 0.0
      %282 = vmatprep.subr.mxu0 0.0
      %283 = vmatpush1.msra.mxu0 0.0
      %284 = vmatprep.subr.mxu0 0.0
      %285 = vmatpush1.msra.mxu0 0.0
      %286 = vmatprep.subr.mxu0 0.0
      %287 = vmatpush1.msra.mxu0 0.0
      %288 = vmatprep.subr.mxu0 0.0
      %289 = vmatpush1.msra.mxu0 0.0
      %290 = vmatprep.subr.mxu0 0.0
      %291 = vmatpush1.msra.mxu0 0.0
      %292 = vmatprep.subr.mxu0 0.0
      %293 = vmatpush1.msra.mxu0 0.0
      %294 = vmatprep.subr.mxu0 0.0
      %295 = vmatpush1.msra.mxu0 0.0
      %296 = vmatprep.subr.mxu0 0.0
      %297 = vmatpush1.msra.mxu0 0.0
      %298 = vmatprep.subr.mxu0 0.0
      %299 = vmatpush1.msra.mxu0 0.0
      %300 = vmatprep.subr.mxu0 0.0
      %301 = vmatpush1.msra.mxu0 0.0
      %302 = vmatprep.subr.mxu0 0.0
      %303 = vmatpush1.msra.mxu0 0.0
      %304 = vmatprep.subr.mxu0 0.0
      %305 = vmatpush1.msra.mxu0 0.0
      %306 = vmatprep.mubr.f32.mxu0 0.0
      %307 = vmatmul.mubr.f32.gmra.mrb[0].mxu0 %v233
      %v308 = vpop.f32.mrb[0].mxu0
      %v309 = vadd.f32 0.0, %v308
      %v310 = vpop.f32.mrb[0].mxu0
      %v311 = vadd.f32 0.0, %v310
      %312 = vdwg.mxu0
      %313 = vmatprep.subr.mxu0 0.0
      %314 = vmatpush1.msra.mxu0 %v240
      %315 = vmatprep.subr.mxu0 0.0
      %316 = vmatpush1.msra.mxu0 0.0
      %317 = vmatprep.subr.mxu0 0.0
      %318 = vmatpush1.msra.mxu0 0.0
      %319 = vmatprep.subr.mxu0 0.0
      %320 = vmatpush1.msra.mxu0 0.0
      %321 = vmatprep.subr.mxu0 0.0
      %322 = vmatpush1.msra.mxu0 0.0
      %323 = vmatprep.subr.mxu0 0.0
      %324 = vmatpush1.msra.mxu0 0.0
      %325 = vmatprep.subr.mxu0 0.0
      %326 = vmatpush1.msra.mxu0 0.0
      %327 = vmatprep.subr.mxu0 0.0
      %328 = vmatpush1.msra.mxu0 0.0
      %329 = vmatprep.subr.mxu0 0.0
      %330 = vmatpush1.msra.mxu0 0.0
      %331 = vmatprep.subr.mxu0 0.0
      %332 = vmatpush1.msra.mxu0 0.0
      %333 = vmatprep.subr.mxu0 0.0
      %334 = vmatpush1.msra.mxu0 0.0
      %335 = vmatprep.subr.mxu0 0.0
      %336 = vmatpush1.msra.mxu0 0.0
      %337 = vmatprep.subr.mxu0 0.0
      %338 = vmatpush1.msra.mxu0 0.0
      %339 = vmatprep.subr.mxu0 0.0
      %340 = vmatpush1.msra.mxu0 0.0
      %341 = vmatprep.subr.mxu0 0.0
      %342 = vmatpush1.msra.mxu0 0.0
      %343 = vmatprep.subr.mxu0 0.0
      %344 = vmatpush1.msra.mxu0 0.0
      %345 = vmatprep.subr.mxu0 0.0
      %346 = vmatpush1.msra.mxu0 0.0
      %347 = vmatprep.subr.mxu0 0.0
      %348 = vmatpush1.msra.mxu0 0.0
      %349 = vmatprep.subr.mxu0 0.0
      %350 = vmatpush1.msra.mxu0 0.0
      %351 = vmatprep.subr.mxu0 0.0
      %352 = vmatpush1.msra.mxu0 0.0
      %353 = vmatprep.subr.mxu0 0.0
      %354 = vmatpush1.msra.mxu0 0.0
      %355 = vmatprep.subr.mxu0 0.0
      %356 = vmatpush1.msra.mxu0 0.0
      %357 = vmatprep.subr.mxu0 0.0
      %358 = vmatpush1.msra.mxu0 0.0
      %359 = vmatprep.subr.mxu0 0.0
      %360 = vmatpush1.msra.mxu0 0.0
      %361 = vmatprep.subr.mxu0 0.0
      %362 = vmatpush1.msra.mxu0 0.0
      %363 = vmatprep.subr.mxu0 0.0
      %364 = vmatpush1.msra.mxu0 0.0
      %365 = vmatprep.subr.mxu0 0.0
      %366 = vmatpush1.msra.mxu0 0.0
      %367 = vmatprep.subr.mxu0 0.0
      %368 = vmatpush1.msra.mxu0 0.0
      %369 = vmatprep.subr.mxu0 0.0
      %370 = vmatpush1.msra.mxu0 0.0
      %371 = vmatprep.subr.mxu0 0.0
      %372 = vmatpush1.msra.mxu0 0.0
      %373 = vmatprep.subr.mxu0 0.0
      %374 = vmatpush1.msra.mxu0 0.0
      %375 = vmatprep.subr.mxu0 0.0
      %376 = vmatpush1.msra.mxu0 0.0
      %377 = vmatprep.mubr.f32.mxu0 0.0
      %378 = vmatmul.mubr.f32.gmra.mrb[0].mxu0 %v233
      %v379 = vpop.f32.mrb[0].mxu0
      %v380 = vadd.f32 0.0, %v379
      %v381 = vpop.f32.mrb[0].mxu0
      %382 = vdwg.mxu0
      %v384 = vsel %vm231, %v216, 0
      %v386 = vsel %vm235, %v214, 0
      %v388 = vsel %vm235, %v221, 0
      %v390 = vsel %vm235, %v215, 0
      %392 = vmatprep.subr.mxu0 %v388
      %393 = vmatpush1.msra.mxu0 %v386
      %394 = vmatprep.subr.mxu0 0.0
      %395 = vmatpush1.msra.mxu0 0.0
      %396 = vmatprep.subr.mxu0 0.0
      %397 = vmatpush1.msra.mxu0 0.0
      %398 = vmatprep.subr.mxu0 0.0
      %399 = vmatpush1.msra.mxu0 0.0
      %400 = vmatprep.subr.mxu0 0.0
      %401 = vmatpush1.msra.mxu0 0.0
      %402 = vmatprep.subr.mxu0 0.0
      %403 = vmatpush1.msra.mxu0 0.0
      %404 = vmatprep.subr.mxu0 0.0
      %405 = vmatpush1.msra.mxu0 0.0
      %406 = vmatprep.subr.mxu0 0.0
      %407 = vmatpush1.msra.mxu0 0.0
      %408 = vmatprep.subr.mxu0 0.0
      %409 = vmatpush1.msra.mxu0 0.0
      %410 = vmatprep.subr.mxu0 0.0
      %411 = vmatpush1.msra.mxu0 0.0
      %412 = vmatprep.subr.mxu0 0.0
      %413 = vmatpush1.msra.mxu0 0.0
      %414 = vmatprep.subr.mxu0 0.0
      %415 = vmatpush1.msra.mxu0 0.0
      %416 = vmatprep.subr.mxu0 0.0
      %417 = vmatpush1.msra.mxu0 0.0
      %418 = vmatprep.subr.mxu0 0.0
      %419 = vmatpush1.msra.mxu0 0.0
      %420 = vmatprep.subr.mxu0 0.0
      %421 = vmatpush1.msra.mxu0 0.0
      %422 = vmatprep.subr.mxu0 0.0
      %423 = vmatpush1.msra.mxu0 0.0
      %424 = vmatprep.subr.mxu0 0.0
      %425 = vmatpush1.msra.mxu0 0.0
      %426 = vmatprep.subr.mxu0 0.0
      %427 = vmatpush1.msra.mxu0 0.0
      %428 = vmatprep.subr.mxu0 0.0
      %429 = vmatpush1.msra.mxu0 0.0
      %430 = vmatprep.subr.mxu0 0.0
      %431 = vmatpush1.msra.mxu0 0.0
      %432 = vmatprep.subr.mxu0 0.0
      %433 = vmatpush1.msra.mxu0 0.0
      %434 = vmatprep.subr.mxu0 0.0
      %435 = vmatpush1.msra.mxu0 0.0
      %436 = vmatprep.subr.mxu0 0.0
      %437 = vmatpush1.msra.mxu0 0.0
      %438 = vmatprep.subr.mxu0 0.0
      %439 = vmatpush1.msra.mxu0 0.0
      %440 = vmatprep.subr.mxu0 0.0
      %441 = vmatpush1.msra.mxu0 0.0
      %442 = vmatprep.subr.mxu0 0.0
      %443 = vmatpush1.msra.mxu0 0.0
      %444 = vmatprep.subr.mxu0 0.0
      %445 = vmatpush1.msra.mxu0 0.0
      %446 = vmatprep.subr.mxu0 0.0
      %447 = vmatpush1.msra.mxu0 0.0
      %448 = vmatprep.subr.mxu0 0.0
      %449 = vmatpush1.msra.mxu0 0.0
      %450 = vmatprep.subr.mxu0 0.0
      %451 = vmatpush1.msra.mxu0 0.0
      %452 = vmatprep.subr.mxu0 0.0
      %453 = vmatpush1.msra.mxu0 0.0
      %454 = vmatprep.subr.mxu0 0.0
      %455 = vmatpush1.msra.mxu0 0.0
      %456 = vmatprep.mubr.f32.mxu0 0.0
      %457 = vmatmul.mubr.f32.gmra.mrb[0].mxu0 %v384
      %v458 = vpop.f32.mrb[0].mxu0
      %v459 = vadd.f32 %v309, %v458
      %v460 = vpop.f32.mrb[0].mxu0
      %v461 = vadd.f32 %v311, %v460
      %462 = vdwg.mxu0
      %463 = vmatprep.subr.mxu0 0.0
      %464 = vmatpush1.msra.mxu0 %v390
      %465 = vmatprep.subr.mxu0 0.0
      %466 = vmatpush1.msra.mxu0 0.0
      %467 = vmatprep.subr.mxu0 0.0
      %468 = vmatpush1.msra.mxu0 0.0
      %469 = vmatprep.subr.mxu0 0.0
      %470 = vmatpush1.msra.mxu0 0.0
      %471 = vmatprep.subr.mxu0 0.0
      %472 = vmatpush1.msra.mxu0 0.0
      %473 = vmatprep.subr.mxu0 0.0
      %474 = vmatpush1.msra.mxu0 0.0
      %475 = vmatprep.subr.mxu0 0.0
      %476 = vmatpush1.msra.mxu0 0.0
      %477 = vmatprep.subr.mxu0 0.0
      %478 = vmatpush1.msra.mxu0 0.0
      %479 = vmatprep.subr.mxu0 0.0
      %480 = vmatpush1.msra.mxu0 0.0
      %481 = vmatprep.subr.mxu0 0.0
      %482 = vmatpush1.msra.mxu0 0.0
      %483 = vmatprep.subr.mxu0 0.0
      %484 = vmatpush1.msra.mxu0 0.0
      %485 = vmatprep.subr.mxu0 0.0
      %486 = vmatpush1.msra.mxu0 0.0
      %487 = vmatprep.subr.mxu0 0.0
      %488 = vmatpush1.msra.mxu0 0.0
      %489 = vmatprep.subr.mxu0 0.0
      %490 = vmatpush1.msra.mxu0 0.0
      %491 = vmatprep.subr.mxu0 0.0
      %492 = vmatpush1.msra.mxu0 0.0
      %493 = vmatprep.subr.mxu0 0.0
      %494 = vmatpush1.msra.mxu0 0.0
      %495 = vmatprep.subr.mxu0 0.0
      %496 = vmatpush1.msra.mxu0 0.0
      %497 = vmatprep.subr.mxu0 0.0
      %498 = vmatpush1.msra.mxu0 0.0
      %499 = vmatprep.subr.mxu0 0.0
      %500 = vmatpush1.msra.mxu0 0.0
      %501 = vmatprep.subr.mxu0 0.0
      %502 = vmatpush1.msra.mxu0 0.0
      %503 = vmatprep.subr.mxu0 0.0
      %504 = vmatpush1.msra.mxu0 0.0
      %505 = vmatprep.subr.mxu0 0.0
      %506 = vmatpush1.msra.mxu0 0.0
      %507 = vmatprep.subr.mxu0 0.0
      %508 = vmatpush1.msra.mxu0 0.0
      %509 = vmatprep.subr.mxu0 0.0
      %510 = vmatpush1.msra.mxu0 0.0
      %511 = vmatprep.subr.mxu0 0.0
      %512 = vmatpush1.msra.mxu0 0.0
      %513 = vmatprep.subr.mxu0 0.0
      %514 = vmatpush1.msra.mxu0 0.0
      %515 = vmatprep.subr.mxu0 0.0
      %516 = vmatpush1.msra.mxu0 0.0
      %517 = vmatprep.subr.mxu0 0.0
      %518 = vmatpush1.msra.mxu0 0.0
      %519 = vmatprep.subr.mxu0 0.0
      %520 = vmatpush1.msra.mxu0 0.0
      %521 = vmatprep.subr.mxu0 0.0
      %522 = vmatpush1.msra.mxu0 0.0
      %523 = vmatprep.subr.mxu0 0.0
      %524 = vmatpush1.msra.mxu0 0.0
      %525 = vmatprep.subr.mxu0 0.0
      %526 = vmatpush1.msra.mxu0 0.0
      %527 = vmatprep.mubr.f32.mxu0 0.0
      %528 = vmatmul.mubr.f32.gmra.mrb[0].mxu0 %v384
      %v529 = vpop.f32.mrb[0].mxu0
      %v530 = vadd.f32 %v380, %v529
      %v531 = vpop.f32.mrb[0].mxu0
      %532 = vdwg.mxu0
      %v533 = vld [vmem:[%s165] sm:$0xff]
      %v534 = vld [vmem:[%s165 + $0x8] sm:$0xf]
      %s535 = scalar_lea.vmem %s1, 8
      %v536 = vld [vmem:[%s535] sm:$0xf]
      %v539 = vcombine.high %v533, %v533
      %540 = vrot.lane.b32.xlu0 %v533, 126
      %v541 = vpop.permute.xlu0 %540
      %542 = vrot.lane.b32.xlu0 %v539, 126
      %v543 = vpop.permute.xlu0 %542
      %544 = vrot.lane.b32.xlu0 %v534, 126
      %v545 = vpop.permute.xlu0 %544
      %vm546 = vcmask 1031168
      %v547 = vsel %vm546, %v541, %v543
      %v548 = vsel %vm546, %v543, %v545
      %v550 = vsel %vm231, %v536, 0
      %v552 = vsel %vm235, %v547, 0
      %v554 = vsel %vm235, %v548, 0
      %v556 = vsel %vm235, %v545, 0
      %558 = vmatprep.subr.mxu0 %v554
      %559 = vmatpush1.msra.mxu0 %v552
      %560 = vmatprep.subr.mxu0 0.0
      %561 = vmatpush1.msra.mxu0 0.0
      %562 = vmatprep.subr.mxu0 0.0
      %563 = vmatpush1.msra.mxu0 0.0
      %564 = vmatprep.subr.mxu0 0.0
      %565 = vmatpush1.msra.mxu0 0.0
      %566 = vmatprep.subr.mxu0 0.0
      %567 = vmatpush1.msra.mxu0 0.0
      %568 = vmatprep.subr.mxu0 0.0
      %569 = vmatpush1.msra.mxu0 0.0
      %570 = vmatprep.subr.mxu0 0.0
      %571 = vmatpush1.msra.mxu0 0.0
      %572 = vmatprep.subr.mxu0 0.0
      %573 = vmatpush1.msra.mxu0 0.0
      %574 = vmatprep.subr.mxu0 0.0
      %575 = vmatpush1.msra.mxu0 0.0
      %576 = vmatprep.subr.mxu0 0.0
      %577 = vmatpush1.msra.mxu0 0.0
      %578 = vmatprep.subr.mxu0 0.0
      %579 = vmatpush1.msra.mxu0 0.0
      %580 = vmatprep.subr.mxu0 0.0
      %581 = vmatpush1.msra.mxu0 0.0
      %582 = vmatprep.subr.mxu0 0.0
      %583 = vmatpush1.msra.mxu0 0.0
      %584 = vmatprep.subr.mxu0 0.0
      %585 = vmatpush1.msra.mxu0 0.0
      %586 = vmatprep.subr.mxu0 0.0
      %587 = vmatpush1.msra.mxu0 0.0
      %588 = vmatprep.subr.mxu0 0.0
      %589 = vmatpush1.msra.mxu0 0.0
      %590 = vmatprep.subr.mxu0 0.0
      %591 = vmatpush1.msra.mxu0 0.0
      %592 = vmatprep.subr.mxu0 0.0
      %593 = vmatpush1.msra.mxu0 0.0
      %594 = vmatprep.subr.mxu0 0.0
      %595 = vmatpush1.msra.mxu0 0.0
      %596 = vmatprep.subr.mxu0 0.0
      %597 = vmatpush1.msra.mxu0 0.0
      %598 = vmatprep.subr.mxu0 0.0
      %599 = vmatpush1.msra.mxu0 0.0
      %600 = vmatprep.subr.mxu0 0.0
      %601 = vmatpush1.msra.mxu0 0.0
      %602 = vmatprep.subr.mxu0 0.0
      %603 = vmatpush1.msra.mxu0 0.0
      %604 = vmatprep.subr.mxu0 0.0
      %605 = vmatpush1.msra.mxu0 0.0
      %606 = vmatprep.subr.mxu0 0.0
      %607 = vmatpush1.msra.mxu0 0.0
      %608 = vmatprep.subr.mxu0 0.0
      %609 = vmatpush1.msra.mxu0 0.0
      %610 = vmatprep.subr.mxu0 0.0
      %611 = vmatpush1.msra.mxu0 0.0
      %612 = vmatprep.subr.mxu0 0.0
      %613 = vmatpush1.msra.mxu0 0.0
      %614 = vmatprep.subr.mxu0 0.0
      %615 = vmatpush1.msra.mxu0 0.0
      %616 = vmatprep.subr.mxu0 0.0
      %617 = vmatpush1.msra.mxu0 0.0
      %618 = vmatprep.subr.mxu0 0.0
      %619 = vmatpush1.msra.mxu0 0.0
      %620 = vmatprep.subr.mxu0 0.0
      %621 = vmatpush1.msra.mxu0 0.0
      %622 = vmatprep.mubr.f32.mxu0 0.0
      %623 = vmatmul.mubr.f32.gmra.mrb[0].mxu0 %v550
      %v624 = vpop.f32.mrb[0].mxu0
      %v625 = vadd.f32 0.0, %v624
      %v626 = vpop.f32.mrb[0].mxu0
      %v627 = vadd.f32 0.0, %v626
      %628 = vdwg.mxu0
      %629 = vmatprep.subr.mxu0 0.0
      %630 = vmatpush1.msra.mxu0 %v556
      %631 = vmatprep.subr.mxu0 0.0
      %632 = vmatpush1.msra.mxu0 0.0
      %633 = vmatprep.subr.mxu0 0.0
      %634 = vmatpush1.msra.mxu0 0.0
      %635 = vmatprep.subr.mxu0 0.0
      %636 = vmatpush1.msra.mxu0 0.0
      %637 = vmatprep.subr.mxu0 0.0
      %638 = vmatpush1.msra.mxu0 0.0
      %639 = vmatprep.subr.mxu0 0.0
      %640 = vmatpush1.msra.mxu0 0.0
      %641 = vmatprep.subr.mxu0 0.0
      %642 = vmatpush1.msra.mxu0 0.0
      %643 = vmatprep.subr.mxu0 0.0
      %644 = vmatpush1.msra.mxu0 0.0
      %645 = vmatprep.subr.mxu0 0.0
      %646 = vmatpush1.msra.mxu0 0.0
      %647 = vmatprep.subr.mxu0 0.0
      %648 = vmatpush1.msra.mxu0 0.0
      %649 = vmatprep.subr.mxu0 0.0
      %650 = vmatpush1.msra.mxu0 0.0
      %651 = vmatprep.subr.mxu0 0.0
      %652 = vmatpush1.msra.mxu0 0.0
      %653 = vmatprep.subr.mxu0 0.0
      %654 = vmatpush1.msra.mxu0 0.0
      %655 = vmatprep.subr.mxu0 0.0
      %656 = vmatpush1.msra.mxu0 0.0
      %657 = vmatprep.subr.mxu0 0.0
      %658 = vmatpush1.msra.mxu0 0.0
      %659 = vmatprep.subr.mxu0 0.0
      %660 = vmatpush1.msra.mxu0 0.0
      %661 = vmatprep.subr.mxu0 0.0
      %662 = vmatpush1.msra.mxu0 0.0
      %663 = vmatprep.subr.mxu0 0.0
      %664 = vmatpush1.msra.mxu0 0.0
      %665 = vmatprep.subr.mxu0 0.0
      %666 = vmatpush1.msra.mxu0 0.0
      %667 = vmatprep.subr.mxu0 0.0
      %668 = vmatpush1.msra.mxu0 0.0
      %669 = vmatprep.subr.mxu0 0.0
      %670 = vmatpush1.msra.mxu0 0.0
      %671 = vmatprep.subr.mxu0 0.0
      %672 = vmatpush1.msra.mxu0 0.0
      %673 = vmatprep.subr.mxu0 0.0
      %674 = vmatpush1.msra.mxu0 0.0
      %675 = vmatprep.subr.mxu0 0.0
      %676 = vmatpush1.msra.mxu0 0.0
      %677 = vmatprep.subr.mxu0 0.0
      %678 = vmatpush1.msra.mxu0 0.0
      %679 = vmatprep.subr.mxu0 0.0
      %680 = vmatpush1.msra.mxu0 0.0
      %681 = vmatprep.subr.mxu0 0.0
      %682 = vmatpush1.msra.mxu0 0.0
      %683 = vmatprep.subr.mxu0 0.0
      %684 = vmatpush1.msra.mxu0 0.0
      %685 = vmatprep.subr.mxu0 0.0
      %686 = vmatpush1.msra.mxu0 0.0
      %687 = vmatprep.subr.mxu0 0.0
      %688 = vmatpush1.msra.mxu0 0.0
      %689 = vmatprep.subr.mxu0 0.0
      %690 = vmatpush1.msra.mxu0 0.0
      %691 = vmatprep.subr.mxu0 0.0
      %692 = vmatpush1.msra.mxu0 0.0
      %693 = vmatprep.mubr.f32.mxu0 0.0
      %694 = vmatmul.mubr.f32.gmra.mrb[0].mxu0 %v550
      %v695 = vpop.f32.mrb[0].mxu0
      %v696 = vadd.f32 0.0, %v695
      %v697 = vpop.f32.mrb[0].mxu0
      %698 = vdwg.mxu0
      %v699 = vadd.f32 %v459, %v625
      %v700 = vadd.f32 %v461, %v627
      %v701 = vadd.f32 %v530, %v696
      %v702 = vld [vmem:[%s165] sm:$0xff]
      %v703 = vld [vmem:[%s165 + $0x8] sm:$0xf]
      %s704 = scalar_lea.vmem %s1, 12
      %v705 = vld [vmem:[%s704] sm:$0xf]
      %v708 = vcombine.high %v702, %v702
      %709 = vrot.lane.b32.xlu0 %v702, 108
      %v710 = vpop.permute.xlu0 %709
      %711 = vrot.lane.b32.xlu0 %v708, 108
      %v712 = vpop.permute.xlu0 %711
      %713 = vrot.lane.b32.xlu0 %v703, 108
      %v714 = vpop.permute.xlu0 %713
      %vm715 = vcmask 883712
      %v716 = vsel %vm715, %v710, %v712
      %v717 = vsel %vm715, %v712, %v714
      %v719 = vsel %vm231, %v705, 0
      %v721 = vsel %vm235, %v716, 0
      %v723 = vsel %vm235, %v717, 0
      %v725 = vsel %vm235, %v714, 0
      %727 = vmatprep.subr.mxu0 %v723
      %728 = vmatpush1.msra.mxu0 %v721
      %729 = vmatprep.subr.mxu0 0.0
      %730 = vmatpush1.msra.mxu0 0.0
      %731 = vmatprep.subr.mxu0 0.0
      %732 = vmatpush1.msra.mxu0 0.0
      %733 = vmatprep.subr.mxu0 0.0
      %734 = vmatpush1.msra.mxu0 0.0
      %735 = vmatprep.subr.mxu0 0.0
      %736 = vmatpush1.msra.mxu0 0.0
      %737 = vmatprep.subr.mxu0 0.0
      %738 = vmatpush1.msra.mxu0 0.0
      %739 = vmatprep.subr.mxu0 0.0
      %740 = vmatpush1.msra.mxu0 0.0
      %741 = vmatprep.subr.mxu0 0.0
      %742 = vmatpush1.msra.mxu0 0.0
      %743 = vmatprep.subr.mxu0 0.0
      %744 = vmatpush1.msra.mxu0 0.0
      %745 = vmatprep.subr.mxu0 0.0
      %746 = vmatpush1.msra.mxu0 0.0
      %747 = vmatprep.subr.mxu0 0.0
      %748 = vmatpush1.msra.mxu0 0.0
      %749 = vmatprep.subr.mxu0 0.0
      %750 = vmatpush1.msra.mxu0 0.0
      %751 = vmatprep.subr.mxu0 0.0
      %752 = vmatpush1.msra.mxu0 0.0
      %753 = vmatprep.subr.mxu0 0.0
      %754 = vmatpush1.msra.mxu0 0.0
      %755 = vmatprep.subr.mxu0 0.0
      %756 = vmatpush1.msra.mxu0 0.0
      %757 = vmatprep.subr.mxu0 0.0
      %758 = vmatpush1.msra.mxu0 0.0
      %759 = vmatprep.subr.mxu0 0.0
      %760 = vmatpush1.msra.mxu0 0.0
      %761 = vmatprep.subr.mxu0 0.0
      %762 = vmatpush1.msra.mxu0 0.0
      %763 = vmatprep.subr.mxu0 0.0
      %764 = vmatpush1.msra.mxu0 0.0
      %765 = vmatprep.subr.mxu0 0.0
      %766 = vmatpush1.msra.mxu0 0.0
      %767 = vmatprep.subr.mxu0 0.0
      %768 = vmatpush1.msra.mxu0 0.0
      %769 = vmatprep.subr.mxu0 0.0
      %770 = vmatpush1.msra.mxu0 0.0
      %771 = vmatprep.subr.mxu0 0.0
      %772 = vmatpush1.msra.mxu0 0.0
      %773 = vmatprep.subr.mxu0 0.0
      %774 = vmatpush1.msra.mxu0 0.0
      %775 = vmatprep.subr.mxu0 0.0
      %776 = vmatpush1.msra.mxu0 0.0
      %777 = vmatprep.subr.mxu0 0.0
      %778 = vmatpush1.msra.mxu0 0.0
      %779 = vmatprep.subr.mxu0 0.0
      %780 = vmatpush1.msra.mxu0 0.0
      %781 = vmatprep.subr.mxu0 0.0
      %782 = vmatpush1.msra.mxu0 0.0
      %783 = vmatprep.subr.mxu0 0.0
      %784 = vmatpush1.msra.mxu0 0.0
      %785 = vmatprep.subr.mxu0 0.0
      %786 = vmatpush1.msra.mxu0 0.0
      %787 = vmatprep.subr.mxu0 0.0
      %788 = vmatpush1.msra.mxu0 0.0
      %789 = vmatprep.subr.mxu0 0.0
      %790 = vmatpush1.msra.mxu0 0.0
      %791 = vmatprep.mubr.f32.mxu0 0.0
      %792 = vmatmul.mubr.f32.gmra.mrb[0].mxu0 %v719
      %v793 = vpop.f32.mrb[0].mxu0
      %v794 = vadd.f32 0.0, %v793
      %v795 = vpop.f32.mrb[0].mxu0
      %v796 = vadd.f32 0.0, %v795
      %797 = vdwg.mxu0
      %798 = vmatprep.subr.mxu0 0.0
      %799 = vmatpush1.msra.mxu0 %v725
      %800 = vmatprep.subr.mxu0 0.0
      %801 = vmatpush1.msra.mxu0 0.0
      %802 = vmatprep.subr.mxu0 0.0
      %803 = vmatpush1.msra.mxu0 0.0
      %804 = vmatprep.subr.mxu0 0.0
      %805 = vmatpush1.msra.mxu0 0.0
      %806 = vmatprep.subr.mxu0 0.0
      %807 = vmatpush1.msra.mxu0 0.0
      %808 = vmatprep.subr.mxu0 0.0
      %809 = vmatpush1.msra.mxu0 0.0
      %810 = vmatprep.subr.mxu0 0.0
      %811 = vmatpush1.msra.mxu0 0.0
      %812 = vmatprep.subr.mxu0 0.0
      %813 = vmatpush1.msra.mxu0 0.0
      %814 = vmatprep.subr.mxu0 0.0
      %815 = vmatpush1.msra.mxu0 0.0
      %816 = vmatprep.subr.mxu0 0.0
      %817 = vmatpush1.msra.mxu0 0.0
      %818 = vmatprep.subr.mxu0 0.0
      %819 = vmatpush1.msra.mxu0 0.0
      %820 = vmatprep.subr.mxu0 0.0
      %821 = vmatpush1.msra.mxu0 0.0
      %822 = vmatprep.subr.mxu0 0.0
      %823 = vmatpush1.msra.mxu0 0.0
      %824 = vmatprep.subr.mxu0 0.0
      %825 = vmatpush1.msra.mxu0 0.0
      %826 = vmatprep.subr.mxu0 0.0
      %827 = vmatpush1.msra.mxu0 0.0
      %828 = vmatprep.subr.mxu0 0.0
      %829 = vmatpush1.msra.mxu0 0.0
      %830 = vmatprep.subr.mxu0 0.0
      %831 = vmatpush1.msra.mxu0 0.0
      %832 = vmatprep.subr.mxu0 0.0
      %833 = vmatpush1.msra.mxu0 0.0
      %834 = vmatprep.subr.mxu0 0.0
      %835 = vmatpush1.msra.mxu0 0.0
      %836 = vmatprep.subr.mxu0 0.0
      %837 = vmatpush1.msra.mxu0 0.0
      %838 = vmatprep.subr.mxu0 0.0
      %839 = vmatpush1.msra.mxu0 0.0
      %840 = vmatprep.subr.mxu0 0.0
      %841 = vmatpush1.msra.mxu0 0.0
      %842 = vmatprep.subr.mxu0 0.0
      %843 = vmatpush1.msra.mxu0 0.0
      %844 = vmatprep.subr.mxu0 0.0
      %845 = vmatpush1.msra.mxu0 0.0
      %846 = vmatprep.subr.mxu0 0.0
      %847 = vmatpush1.msra.mxu0 0.0
      %848 = vmatprep.subr.mxu0 0.0
      %849 = vmatpush1.msra.mxu0 0.0
      %850 = vmatprep.subr.mxu0 0.0
      %851 = vmatpush1.msra.mxu0 0.0
      %852 = vmatprep.subr.mxu0 0.0
      %853 = vmatpush1.msra.mxu0 0.0
      %854 = vmatprep.subr.mxu0 0.0
      %855 = vmatpush1.msra.mxu0 0.0
      %856 = vmatprep.subr.mxu0 0.0
      %857 = vmatpush1.msra.mxu0 0.0
      %858 = vmatprep.subr.mxu0 0.0
      %859 = vmatpush1.msra.mxu0 0.0
      %860 = vmatprep.subr.mxu0 0.0
      %861 = vmatpush1.msra.mxu0 0.0
      %862 = vmatprep.mubr.f32.mxu0 0.0
      %863 = vmatmul.mubr.f32.gmra.mrb[0].mxu0 %v719
      %v864 = vpop.f32.mrb[0].mxu0
      %v865 = vadd.f32 0.0, %v864
      %v866 = vpop.f32.mrb[0].mxu0
      %867 = vdwg.mxu0
      %v868 = vadd.f32 %v699, %v794
      %v869 = vadd.f32 %v700, %v796
      %v870 = vadd.f32 %v701, %v865
      %v871 = vld [vmem:[%s165] sm:$0xff]
      %v872 = vld [vmem:[%s165 + $0x8] sm:$0xf]
      %s873 = scalar_lea.vmem %s1, 16
      %v874 = vld [vmem:[%s873] sm:$0xf]
      %v877 = vcombine.high %v871, %v871
      %878 = vrot.lane.b32.xlu0 %v871, 107
      %v879 = vpop.permute.xlu0 %878
      %880 = vrot.lane.b32.xlu0 %v877, 107
      %v881 = vpop.permute.xlu0 %880
      %882 = vrot.lane.b32.xlu0 %v872, 107
      %v883 = vpop.permute.xlu0 %882
      %vm884 = vcmask 875520
      %v885 = vsel %vm884, %v879, %v881
      %v886 = vsel %vm884, %v881, %v883
      %v888 = vsel %vm231, %v874, 0
      %v890 = vsel %vm235, %v885, 0
      %v892 = vsel %vm235, %v886, 0
      %v894 = vsel %vm235, %v883, 0
      %896 = vmatprep.subr.mxu0 %v892
      %897 = vmatpush1.msra.mxu0 %v890
      %898 = vmatprep.subr.mxu0 0.0
      %899 = vmatpush1.msra.mxu0 0.0
      %900 = vmatprep.subr.mxu0 0.0
      %901 = vmatpush1.msra.mxu0 0.0
      %902 = vmatprep.subr.mxu0 0.0
      %903 = vmatpush1.msra.mxu0 0.0
      %904 = vmatprep.subr.mxu0 0.0
      %905 = vmatpush1.msra.mxu0 0.0
      %906 = vmatprep.subr.mxu0 0.0
      %907 = vmatpush1.msra.mxu0 0.0
      %908 = vmatprep.subr.mxu0 0.0
      %909 = vmatpush1.msra.mxu0 0.0
      %910 = vmatprep.subr.mxu0 0.0
      %911 = vmatpush1.msra.mxu0 0.0
      %912 = vmatprep.subr.mxu0 0.0
      %913 = vmatpush1.msra.mxu0 0.0
      %914 = vmatprep.subr.mxu0 0.0
      %915 = vmatpush1.msra.mxu0 0.0
      %916 = vmatprep.subr.mxu0 0.0
      %917 = vmatpush1.msra.mxu0 0.0
      %918 = vmatprep.subr.mxu0 0.0
      %919 = vmatpush1.msra.mxu0 0.0
      %920 = vmatprep.subr.mxu0 0.0
      %921 = vmatpush1.msra.mxu0 0.0
      %922 = vmatprep.subr.mxu0 0.0
      %923 = vmatpush1.msra.mxu0 0.0
      %924 = vmatprep.subr.mxu0 0.0
      %925 = vmatpush1.msra.mxu0 0.0
      %926 = vmatprep.subr.mxu0 0.0
      %927 = vmatpush1.msra.mxu0 0.0
      %928 = vmatprep.subr.mxu0 0.0
      %929 = vmatpush1.msra.mxu0 0.0
      %930 = vmatprep.subr.mxu0 0.0
      %931 = vmatpush1.msra.mxu0 0.0
      %932 = vmatprep.subr.mxu0 0.0
      %933 = vmatpush1.msra.mxu0 0.0
      %934 = vmatprep.subr.mxu0 0.0
      %935 = vmatpush1.msra.mxu0 0.0
      %936 = vmatprep.subr.mxu0 0.0
      %937 = vmatpush1.msra.mxu0 0.0
      %938 = vmatprep.subr.mxu0 0.0
      %939 = vmatpush1.msra.mxu0 0.0
      %940 = vmatprep.subr.mxu0 0.0
      %941 = vmatpush1.msra.mxu0 0.0
      %942 = vmatprep.subr.mxu0 0.0
      %943 = vmatpush1.msra.mxu0 0.0
      %944 = vmatprep.subr.mxu0 0.0
      %945 = vmatpush1.msra.mxu0 0.0
      %946 = vmatprep.subr.mxu0 0.0
      %947 = vmatpush1.msra.mxu0 0.0
      %948 = vmatprep.subr.mxu0 0.0
      %949 = vmatpush1.msra.mxu0 0.0
      %950 = vmatprep.subr.mxu0 0.0
      %951 = vmatpush1.msra.mxu0 0.0
      %952 = vmatprep.subr.mxu0 0.0
      %953 = vmatpush1.msra.mxu0 0.0
      %954 = vmatprep.subr.mxu0 0.0
      %955 = vmatpush1.msra.mxu0 0.0
      %956 = vmatprep.subr.mxu0 0.0
      %957 = vmatpush1.msra.mxu0 0.0
      %958 = vmatprep.subr.mxu0 0.0
      %959 = vmatpush1.msra.mxu0 0.0
      %960 = vmatprep.mubr.f32.mxu0 0.0
      %961 = vmatmul.mubr.f32.gmra.mrb[0].mxu0 %v888
      %v962 = vpop.f32.mrb[0].mxu0
      %v963 = vadd.f32 0.0, %v962
      %v964 = vpop.f32.mrb[0].mxu0
      %v965 = vadd.f32 0.0, %v964
      %966 = vdwg.mxu0
      %967 = vmatprep.subr.mxu0 0.0
      %968 = vmatpush1.msra.mxu0 %v894
      %969 = vmatprep.subr.mxu0 0.0
      %970 = vmatpush1.msra.mxu0 0.0
      %971 = vmatprep.subr.mxu0 0.0
      %972 = vmatpush1.msra.mxu0 0.0
      %973 = vmatprep.subr.mxu0 0.0
      %974 = vmatpush1.msra.mxu0 0.0
      %975 = vmatprep.subr.mxu0 0.0
      %976 = vmatpush1.msra.mxu0 0.0
      %977 = vmatprep.subr.mxu0 0.0
      %978 = vmatpush1.msra.mxu0 0.0
      %979 = vmatprep.subr.mxu0 0.0
      %980 = vmatpush1.msra.mxu0 0.0
      %981 = vmatprep.subr.mxu0 0.0
      %982 = vmatpush1.msra.mxu0 0.0
      %983 = vmatprep.subr.mxu0 0.0
      %984 = vmatpush1.msra.mxu0 0.0
      %985 = vmatprep.subr.mxu0 0.0
      %986 = vmatpush1.msra.mxu0 0.0
      %987 = vmatprep.subr.mxu0 0.0
      %988 = vmatpush1.msra.mxu0 0.0
      %989 = vmatprep.subr.mxu0 0.0
      %990 = vmatpush1.msra.mxu0 0.0
      %991 = vmatprep.subr.mxu0 0.0
      %992 = vmatpush1.msra.mxu0 0.0
      %993 = vmatprep.subr.mxu0 0.0
      %994 = vmatpush1.msra.mxu0 0.0
      %995 = vmatprep.subr.mxu0 0.0
      %996 = vmatpush1.msra.mxu0 0.0
      %997 = vmatprep.subr.mxu0 0.0
      %998 = vmatpush1.msra.mxu0 0.0
      %999 = vmatprep.subr.mxu0 0.0
      %1000 = vmatpush1.msra.mxu0 0.0
      %1001 = vmatprep.subr.mxu0 0.0
      %1002 = vmatpush1.msra.mxu0 0.0
      %1003 = vmatprep.subr.mxu0 0.0
      %1004 = vmatpush1.msra.mxu0 0.0
      %1005 = vmatprep.subr.mxu0 0.0
      %1006 = vmatpush1.msra.mxu0 0.0
      %1007 = vmatprep.subr.mxu0 0.0
      %1008 = vmatpush1.msra.mxu0 0.0
      %1009 = vmatprep.subr.mxu0 0.0
      %1010 = vmatpush1.msra.mxu0 0.0
      %1011 = vmatprep.subr.mxu0 0.0
      %1012 = vmatpush1.msra.mxu0 0.0
      %1013 = vmatprep.subr.mxu0 0.0
      %1014 = vmatpush1.msra.mxu0 0.0
      %1015 = vmatprep.subr.mxu0 0.0
      %1016 = vmatpush1.msra.mxu0 0.0
      %1017 = vmatprep.subr.mxu0 0.0
      %1018 = vmatpush1.msra.mxu0 0.0
      %1019 = vmatprep.subr.mxu0 0.0
      %1020 = vmatpush1.msra.mxu0 0.0
      %1021 = vmatprep.subr.mxu0 0.0
      %1022 = vmatpush1.msra.mxu0 0.0
      %1023 = vmatprep.subr.mxu0 0.0
      %1024 = vmatpush1.msra.mxu0 0.0
      %1025 = vmatprep.subr.mxu0 0.0
      %1026 = vmatpush1.msra.mxu0 0.0
      %1027 = vmatprep.subr.mxu0 0.0
      %1028 = vmatpush1.msra.mxu0 0.0
      %1029 = vmatprep.subr.mxu0 0.0
      %1030 = vmatpush1.msra.mxu0 0.0
      %1031 = vmatprep.mubr.f32.mxu0 0.0
      %1032 = vmatmul.mubr.f32.gmra.mrb[0].mxu0 %v888
      %v1033 = vpop.f32.mrb[0].mxu0
      %v1034 = vadd.f32 0.0, %v1033
      %v1035 = vpop.f32.mrb[0].mxu0
      %1036 = vdwg.mxu0
      %v1037 = vadd.f32 %v868, %v963
      %v1038 = vadd.f32 %v869, %v965
      %v1039 = vadd.f32 %v870, %v1034
      %v1040 = vld [vmem:[%s165] sm:$0xff]
      %v1041 = vld [vmem:[%s165 + $0x8] sm:$0xf]
      %s1042 = scalar_lea.vmem %s1, 20
      %v1043 = vld [vmem:[%s1042] sm:$0xf]
      %v1046 = vcombine.high %v1040, %v1040
      %1047 = vrot.lane.b32.xlu0 %v1040, 106
      %v1048 = vpop.permute.xlu0 %1047
      %1049 = vrot.lane.b32.xlu0 %v1046, 106
      %v1050 = vpop.permute.xlu0 %1049
      %1051 = vrot.lane.b32.xlu0 %v1041, 106
      %v1052 = vpop.permute.xlu0 %1051
      %vm1053 = vcmask 867328
      %v1054 = vsel %vm1053, %v1048, %v1050
      %v1055 = vsel %vm1053, %v1050, %v1052
      %v1057 = vsel %vm231, %v1043, 0
      %v1059 = vsel %vm235, %v1054, 0
      %v1061 = vsel %vm235, %v1055, 0
      %v1063 = vsel %vm235, %v1052, 0
      %1065 = vmatprep.subr.mxu0 %v1061
      %1066 = vmatpush1.msra.mxu0 %v1059
      %1067 = vmatprep.subr.mxu0 0.0
      %1068 = vmatpush1.msra.mxu0 0.0
      %1069 = vmatprep.subr.mxu0 0.0
      %1070 = vmatpush1.msra.mxu0 0.0
      %1071 = vmatprep.subr.mxu0 0.0
      %1072 = vmatpush1.msra.mxu0 0.0
      %1073 = vmatprep.subr.mxu0 0.0
      %1074 = vmatpush1.msra.mxu0 0.0
      %1075 = vmatprep.subr.mxu0 0.0
      %1076 = vmatpush1.msra.mxu0 0.0
      %1077 = vmatprep.subr.mxu0 0.0
      %1078 = vmatpush1.msra.mxu0 0.0
      %1079 = vmatprep.subr.mxu0 0.0
      %1080 = vmatpush1.msra.mxu0 0.0
      %1081 = vmatprep.subr.mxu0 0.0
      %1082 = vmatpush1.msra.mxu0 0.0
      %1083 = vmatprep.subr.mxu0 0.0
      %1084 = vmatpush1.msra.mxu0 0.0
      %1085 = vmatprep.subr.mxu0 0.0
      %1086 = vmatpush1.msra.mxu0 0.0
      %1087 = vmatprep.subr.mxu0 0.0
      %1088 = vmatpush1.msra.mxu0 0.0
      %1089 = vmatprep.subr.mxu0 0.0
      %1090 = vmatpush1.msra.mxu0 0.0
      %1091 = vmatprep.subr.mxu0 0.0
      %1092 = vmatpush1.msra.mxu0 0.0
      %1093 = vmatprep.subr.mxu0 0.0
      %1094 = vmatpush1.msra.mxu0 0.0
      %1095 = vmatprep.subr.mxu0 0.0
      %1096 = vmatpush1.msra.mxu0 0.0
      %1097 = vmatprep.subr.mxu0 0.0
      %1098 = vmatpush1.msra.mxu0 0.0
      %1099 = vmatprep.subr.mxu0 0.0
      %1100 = vmatpush1.msra.mxu0 0.0
      %1101 = vmatprep.subr.mxu0 0.0
      %1102 = vmatpush1.msra.mxu0 0.0
      %1103 = vmatprep.subr.mxu0 0.0
      %1104 = vmatpush1.msra.mxu0 0.0
      %1105 = vmatprep.subr.mxu0 0.0
      %1106 = vmatpush1.msra.mxu0 0.0
      %1107 = vmatprep.subr.mxu0 0.0
      %1108 = vmatpush1.msra.mxu0 0.0
      %1109 = vmatprep.subr.mxu0 0.0
      %1110 = vmatpush1.msra.mxu0 0.0
      %1111 = vmatprep.subr.mxu0 0.0
      %1112 = vmatpush1.msra.mxu0 0.0
      %1113 = vmatprep.subr.mxu0 0.0
      %1114 = vmatpush1.msra.mxu0 0.0
      %1115 = vmatprep.subr.mxu0 0.0
      %1116 = vmatpush1.msra.mxu0 0.0
      %1117 = vmatprep.subr.mxu0 0.0
      %1118 = vmatpush1.msra.mxu0 0.0
      %1119 = vmatprep.subr.mxu0 0.0
      %1120 = vmatpush1.msra.mxu0 0.0
      %1121 = vmatprep.subr.mxu0 0.0
      %1122 = vmatpush1.msra.mxu0 0.0
      %1123 = vmatprep.subr.mxu0 0.0
      %1124 = vmatpush1.msra.mxu0 0.0
      %1125 = vmatprep.subr.mxu0 0.0
      %1126 = vmatpush1.msra.mxu0 0.0
      %1127 = vmatprep.subr.mxu0 0.0
      %1128 = vmatpush1.msra.mxu0 0.0
      %1129 = vmatprep.mubr.f32.mxu0 0.0
      %1130 = vmatmul.mubr.f32.gmra.mrb[0].mxu0 %v1057
      %v1131 = vpop.f32.mrb[0].mxu0
      %v1132 = vadd.f32 0.0, %v1131
      %v1133 = vpop.f32.mrb[0].mxu0
      %v1134 = vadd.f32 0.0, %v1133
      %1135 = vdwg.mxu0
      %1136 = vmatprep.subr.mxu0 0.0
      %1137 = vmatpush1.msra.mxu0 %v1063
      %1138 = vmatprep.subr.mxu0 0.0
      %1139 = vmatpush1.msra.mxu0 0.0
      %1140 = vmatprep.subr.mxu0 0.0
      %1141 = vmatpush1.msra.mxu0 0.0
      %1142 = vmatprep.subr.mxu0 0.0
      %1143 = vmatpush1.msra.mxu0 0.0
      %1144 = vmatprep.subr.mxu0 0.0
      %1145 = vmatpush1.msra.mxu0 0.0
      %1146 = vmatprep.subr.mxu0 0.0
      %1147 = vmatpush1.msra.mxu0 0.0
      %1148 = vmatprep.subr.mxu0 0.0
      %1149 = vmatpush1.msra.mxu0 0.0
      %1150 = vmatprep.subr.mxu0 0.0
      %1151 = vmatpush1.msra.mxu0 0.0
      %1152 = vmatprep.subr.mxu0 0.0
      %1153 = vmatpush1.msra.mxu0 0.0
      %1154 = vmatprep.subr.mxu0 0.0
      %1155 = vmatpush1.msra.mxu0 0.0
      %1156 = vmatprep.subr.mxu0 0.0
      %1157 = vmatpush1.msra.mxu0 0.0
      %1158 = vmatprep.subr.mxu0 0.0
      %1159 = vmatpush1.msra.mxu0 0.0
      %1160 = vmatprep.subr.mxu0 0.0
      %1161 = vmatpush1.msra.mxu0 0.0
      %1162 = vmatprep.subr.mxu0 0.0
      %1163 = vmatpush1.msra.mxu0 0.0
      %1164 = vmatprep.subr.mxu0 0.0
      %1165 = vmatpush1.msra.mxu0 0.0
      %1166 = vmatprep.subr.mxu0 0.0
      %1167 = vmatpush1.msra.mxu0 0.0
      %1168 = vmatprep.subr.mxu0 0.0
      %1169 = vmatpush1.msra.mxu0 0.0
      %1170 = vmatprep.subr.mxu0 0.0
      %1171 = vmatpush1.msra.mxu0 0.0
      %1172 = vmatprep.subr.mxu0 0.0
      %1173 = vmatpush1.msra.mxu0 0.0
      %1174 = vmatprep.subr.mxu0 0.0
      %1175 = vmatpush1.msra.mxu0 0.0
      %1176 = vmatprep.subr.mxu0 0.0
      %1177 = vmatpush1.msra.mxu0 0.0
      %1178 = vmatprep.subr.mxu0 0.0
      %1179 = vmatpush1.msra.mxu0 0.0
      %1180 = vmatprep.subr.mxu0 0.0
      %1181 = vmatpush1.msra.mxu0 0.0
      %1182 = vmatprep.subr.mxu0 0.0
      %1183 = vmatpush1.msra.mxu0 0.0
      %1184 = vmatprep.subr.mxu0 0.0
      %1185 = vmatpush1.msra.mxu0 0.0
      %1186 = vmatprep.subr.mxu0 0.0
      %1187 = vmatpush1.msra.mxu0 0.0
      %1188 = vmatprep.subr.mxu0 0.0
      %1189 = vmatpush1.msra.mxu0 0.0
      %1190 = vmatprep.subr.mxu0 0.0
      %1191 = vmatpush1.msra.mxu0 0.0
      %1192 = vmatprep.subr.mxu0 0.0
      %1193 = vmatpush1.msra.mxu0 0.0
      %1194 = vmatprep.subr.mxu0 0.0
      %1195 = vmatpush1.msra.mxu0 0.0
      %1196 = vmatprep.subr.mxu0 0.0
      %1197 = vmatpush1.msra.mxu0 0.0
      %1198 = vmatprep.subr.mxu0 0.0
      %1199 = vmatpush1.msra.mxu0 0.0
      %1200 = vmatprep.mubr.f32.mxu0 0.0
      %1201 = vmatmul.mubr.f32.gmra.mrb[0].mxu0 %v1057
      %v1202 = vpop.f32.mrb[0].mxu0
      %v1203 = vadd.f32 0.0, %v1202
      %v1204 = vpop.f32.mrb[0].mxu0
      %1205 = vdwg.mxu0
      %v1206 = vadd.f32 %v1037, %v1132
      %v1207 = vadd.f32 %v1038, %v1134
      %v1208 = vadd.f32 %v1039, %v1203
      %v1209 = vld [vmem:[%s165] sm:$0xff]
      %v1210 = vld [vmem:[%s165 + $0x8] sm:$0xff]
      %s1211 = scalar_lea.vmem %s1, 24
      %v1212 = vld [vmem:[%s1211] sm:$0xf]
      %v1215 = vcombine.high %v1209, %v1209
      %v1216 = vcombine.high %v1210, %v1210
      %1217 = vrot.lane.b32.xlu0 %v1209, 88
      %v1218 = vpop.permute.xlu0 %1217
      %1219 = vrot.lane.b32.xlu0 %v1215, 88
      %v1220 = vpop.permute.xlu0 %1219
      %1221 = vrot.lane.b32.xlu0 %v1210, 88
      %v1222 = vpop.permute.xlu0 %1221
      %1223 = vrot.lane.b32.xlu0 %v1216, 88
      %v1224 = vpop.permute.xlu0 %1223
      %vm1225 = vcmask 719872
      %v1226 = vsel %vm1225, %v1218, %v1220
      %v1227 = vsel %vm1225, %v1220, %v1222
      %v1228 = vsel %vm1225, %v1222, %v1224
      %v1230 = vsel %vm231, %v1212, 0
      %v1232 = vsel %vm235, %v1226, 0
      %v1234 = vsel %vm235, %v1227, 0
      %v1236 = vsel %vm235, %v1228, 0
      %1238 = vmatprep.subr.mxu0 %v1234
      %1239 = vmatpush1.msra.mxu0 %v1232
      %1240 = vmatprep.subr.mxu0 0.0
      %1241 = vmatpush1.msra.mxu0 0.0
      %1242 = vmatprep.subr.mxu0 0.0
      %1243 = vmatpush1.msra.mxu0 0.0
      %1244 = vmatprep.subr.mxu0 0.0
      %1245 = vmatpush1.msra.mxu0 0.0
      %1246 = vmatprep.subr.mxu0 0.0
      %1247 = vmatpush1.msra.mxu0 0.0
      %1248 = vmatprep.subr.mxu0 0.0
      %1249 = vmatpush1.msra.mxu0 0.0
      %1250 = vmatprep.subr.mxu0 0.0
      %1251 = vmatpush1.msra.mxu0 0.0
      %1252 = vmatprep.subr.mxu0 0.0
      %1253 = vmatpush1.msra.mxu0 0.0
      %1254 = vmatprep.subr.mxu0 0.0
      %1255 = vmatpush1.msra.mxu0 0.0
      %1256 = vmatprep.subr.mxu0 0.0
      %1257 = vmatpush1.msra.mxu0 0.0
      %1258 = vmatprep.subr.mxu0 0.0
      %1259 = vmatpush1.msra.mxu0 0.0
      %1260 = vmatprep.subr.mxu0 0.0
      %1261 = vmatpush1.msra.mxu0 0.0
      %1262 = vmatprep.subr.mxu0 0.0
      %1263 = vmatpush1.msra.mxu0 0.0
      %1264 = vmatprep.subr.mxu0 0.0
      %1265 = vmatpush1.msra.mxu0 0.0
      %1266 = vmatprep.subr.mxu0 0.0
      %1267 = vmatpush1.msra.mxu0 0.0
      %1268 = vmatprep.subr.mxu0 0.0
      %1269 = vmatpush1.msra.mxu0 0.0
      %1270 = vmatprep.subr.mxu0 0.0
      %1271 = vmatpush1.msra.mxu0 0.0
      %1272 = vmatprep.subr.mxu0 0.0
      %1273 = vmatpush1.msra.mxu0 0.0
      %1274 = vmatprep.subr.mxu0 0.0
      %1275 = vmatpush1.msra.mxu0 0.0
      %1276 = vmatprep.subr.mxu0 0.0
      %1277 = vmatpush1.msra.mxu0 0.0
      %1278 = vmatprep.subr.mxu0 0.0
      %1279 = vmatpush1.msra.mxu0 0.0
      %1280 = vmatprep.subr.mxu0 0.0
      %1281 = vmatpush1.msra.mxu0 0.0
      %1282 = vmatprep.subr.mxu0 0.0
      %1283 = vmatpush1.msra.mxu0 0.0
      %1284 = vmatprep.subr.mxu0 0.0
      %1285 = vmatpush1.msra.mxu0 0.0
      %1286 = vmatprep.subr.mxu0 0.0
      %1287 = vmatpush1.msra.mxu0 0.0
      %1288 = vmatprep.subr.mxu0 0.0
      %1289 = vmatpush1.msra.mxu0 0.0
      %1290 = vmatprep.subr.mxu0 0.0
      %1291 = vmatpush1.msra.mxu0 0.0
      %1292 = vmatprep.subr.mxu0 0.0
      %1293 = vmatpush1.msra.mxu0 0.0
      %1294 = vmatprep.subr.mxu0 0.0
      %1295 = vmatpush1.msra.mxu0 0.0
      %1296 = vmatprep.subr.mxu0 0.0
      %1297 = vmatpush1.msra.mxu0 0.0
      %1298 = vmatprep.subr.mxu0 0.0
      %1299 = vmatpush1.msra.mxu0 0.0
      %1300 = vmatprep.subr.mxu0 0.0
      %1301 = vmatpush1.msra.mxu0 0.0
      %1302 = vmatprep.mubr.f32.mxu0 0.0
      %1303 = vmatmul.mubr.f32.gmra.mrb[0].mxu0 %v1230
      %v1304 = vpop.f32.mrb[0].mxu0
      %v1305 = vadd.f32 0.0, %v1304
      %v1306 = vpop.f32.mrb[0].mxu0
      %v1307 = vadd.f32 0.0, %v1306
      %1308 = vdwg.mxu0
      %1309 = vmatprep.subr.mxu0 0.0
      %1310 = vmatpush1.msra.mxu0 %v1236
      %1311 = vmatprep.subr.mxu0 0.0
      %1312 = vmatpush1.msra.mxu0 0.0
      %1313 = vmatprep.subr.mxu0 0.0
      %1314 = vmatpush1.msra.mxu0 0.0
      %1315 = vmatprep.subr.mxu0 0.0
      %1316 = vmatpush1.msra.mxu0 0.0
      %1317 = vmatprep.subr.mxu0 0.0
      %1318 = vmatpush1.msra.mxu0 0.0
      %1319 = vmatprep.subr.mxu0 0.0
      %1320 = vmatpush1.msra.mxu0 0.0
      %1321 = vmatprep.subr.mxu0 0.0
      %1322 = vmatpush1.msra.mxu0 0.0
      %1323 = vmatprep.subr.mxu0 0.0
      %1324 = vmatpush1.msra.mxu0 0.0
      %1325 = vmatprep.subr.mxu0 0.0
      %1326 = vmatpush1.msra.mxu0 0.0
      %1327 = vmatprep.subr.mxu0 0.0
      %1328 = vmatpush1.msra.mxu0 0.0
      %1329 = vmatprep.subr.mxu0 0.0
      %1330 = vmatpush1.msra.mxu0 0.0
      %1331 = vmatprep.subr.mxu0 0.0
      %1332 = vmatpush1.msra.mxu0 0.0
      %1333 = vmatprep.subr.mxu0 0.0
      %1334 = vmatpush1.msra.mxu0 0.0
      %1335 = vmatprep.subr.mxu0 0.0
      %1336 = vmatpush1.msra.mxu0 0.0
      %1337 = vmatprep.subr.mxu0 0.0
      %1338 = vmatpush1.msra.mxu0 0.0
      %1339 = vmatprep.subr.mxu0 0.0
      %1340 = vmatpush1.msra.mxu0 0.0
      %1341 = vmatprep.subr.mxu0 0.0
      %1342 = vmatpush1.msra.mxu0 0.0
      %1343 = vmatprep.subr.mxu0 0.0
      %1344 = vmatpush1.msra.mxu0 0.0
      %1345 = vmatprep.subr.mxu0 0.0
      %1346 = vmatpush1.msra.mxu0 0.0
      %1347 = vmatprep.subr.mxu0 0.0
      %1348 = vmatpush1.msra.mxu0 0.0
      %1349 = vmatprep.subr.mxu0 0.0
      %1350 = vmatpush1.msra.mxu0 0.0
      %1351 = vmatprep.subr.mxu0 0.0
      %1352 = vmatpush1.msra.mxu0 0.0
      %1353 = vmatprep.subr.mxu0 0.0
      %1354 = vmatpush1.msra.mxu0 0.0
      %1355 = vmatprep.subr.mxu0 0.0
      %1356 = vmatpush1.msra.mxu0 0.0
      %1357 = vmatprep.subr.mxu0 0.0
      %1358 = vmatpush1.msra.mxu0 0.0
      %1359 = vmatprep.subr.mxu0 0.0
      %1360 = vmatpush1.msra.mxu0 0.0
      %1361 = vmatprep.subr.mxu0 0.0
      %1362 = vmatpush1.msra.mxu0 0.0
      %1363 = vmatprep.subr.mxu0 0.0
      %1364 = vmatpush1.msra.mxu0 0.0
      %1365 = vmatprep.subr.mxu0 0.0
      %1366 = vmatpush1.msra.mxu0 0.0
      %1367 = vmatprep.subr.mxu0 0.0
      %1368 = vmatpush1.msra.mxu0 0.0
      %1369 = vmatprep.subr.mxu0 0.0
      %1370 = vmatpush1.msra.mxu0 0.0
      %1371 = vmatprep.subr.mxu0 0.0
      %1372 = vmatpush1.msra.mxu0 0.0
      %1373 = vmatprep.mubr.f32.mxu0 0.0
      %1374 = vmatmul.mubr.f32.gmra.mrb[0].mxu0 %v1230
      %v1375 = vpop.f32.mrb[0].mxu0
      %v1376 = vadd.f32 0.0, %v1375
      %v1377 = vpop.f32.mrb[0].mxu0
      %1378 = vdwg.mxu0
      %v1379 = vadd.f32 %v1206, %v1305
      %v1380 = vadd.f32 %v1207, %v1307
      %v1381 = vadd.f32 %v1208, %v1376
      %v1382 = vld [vmem:[%s165] sm:$0xff]
      %v1383 = vld [vmem:[%s165 + $0x8] sm:$0xff]
      %s1384 = scalar_lea.vmem %s1, 28
      %v1385 = vld [vmem:[%s1384] sm:$0xf]
      %v1388 = vcombine.high %v1382, %v1382
      %v1389 = vcombine.high %v1383, %v1383
      %1390 = vrot.lane.b32.xlu0 %v1382, 87
      %v1391 = vpop.permute.xlu0 %1390
      %1392 = vrot.lane.b32.xlu0 %v1388, 87
      %v1393 = vpop.permute.xlu0 %1392
      %1394 = vrot.lane.b32.xlu0 %v1383, 87
      %v1395 = vpop.permute.xlu0 %1394
      %1396 = vrot.lane.b32.xlu0 %v1389, 87
      %v1397 = vpop.permute.xlu0 %1396
      %vm1398 = vcmask 711680
      %v1399 = vsel %vm1398, %v1391, %v1393
      %v1400 = vsel %vm1398, %v1393, %v1395
      %v1401 = vsel %vm1398, %v1395, %v1397
      %v1403 = vsel %vm231, %v1385, 0
      %v1405 = vsel %vm235, %v1399, 0
      %v1407 = vsel %vm235, %v1400, 0
      %v1409 = vsel %vm235, %v1401, 0
      %1411 = vmatprep.subr.mxu0 %v1407
      %1412 = vmatpush1.msra.mxu0 %v1405
      %1413 = vmatprep.subr.mxu0 0.0
      %1414 = vmatpush1.msra.mxu0 0.0
      %1415 = vmatprep.subr.mxu0 0.0
      %1416 = vmatpush1.msra.mxu0 0.0
      %1417 = vmatprep.subr.mxu0 0.0
      %1418 = vmatpush1.msra.mxu0 0.0
      %1419 = vmatprep.subr.mxu0 0.0
      %1420 = vmatpush1.msra.mxu0 0.0
      %1421 = vmatprep.subr.mxu0 0.0
      %1422 = vmatpush1.msra.mxu0 0.0
      %1423 = vmatprep.subr.mxu0 0.0
      %1424 = vmatpush1.msra.mxu0 0.0
      %1425 = vmatprep.subr.mxu0 0.0
      %1426 = vmatpush1.msra.mxu0 0.0
      %1427 = vmatprep.subr.mxu0 0.0
      %1428 = vmatpush1.msra.mxu0 0.0
      %1429 = vmatprep.subr.mxu0 0.0
      %1430 = vmatpush1.msra.mxu0 0.0
      %1431 = vmatprep.subr.mxu0 0.0
      %1432 = vmatpush1.msra.mxu0 0.0
      %1433 = vmatprep.subr.mxu0 0.0
      %1434 = vmatpush1.msra.mxu0 0.0
      %1435 = vmatprep.subr.mxu0 0.0
      %1436 = vmatpush1.msra.mxu0 0.0
      %1437 = vmatprep.subr.mxu0 0.0
      %1438 = vmatpush1.msra.mxu0 0.0
      %1439 = vmatprep.subr.mxu0 0.0
      %1440 = vmatpush1.msra.mxu0 0.0
      %1441 = vmatprep.subr.mxu0 0.0
      %1442 = vmatpush1.msra.mxu0 0.0
      %1443 = vmatprep.subr.mxu0 0.0
      %1444 = vmatpush1.msra.mxu0 0.0
      %1445 = vmatprep.subr.mxu0 0.0
      %1446 = vmatpush1.msra.mxu0 0.0
      %1447 = vmatprep.subr.mxu0 0.0
      %1448 = vmatpush1.msra.mxu0 0.0
      %1449 = vmatprep.subr.mxu0 0.0
      %1450 = vmatpush1.msra.mxu0 0.0
      %1451 = vmatprep.subr.mxu0 0.0
      %1452 = vmatpush1.msra.mxu0 0.0
      %1453 = vmatprep.subr.mxu0 0.0
      %1454 = vmatpush1.msra.mxu0 0.0
      %1455 = vmatprep.subr.mxu0 0.0
      %1456 = vmatpush1.msra.mxu0 0.0
      %1457 = vmatprep.subr.mxu0 0.0
      %1458 = vmatpush1.msra.mxu0 0.0
      %1459 = vmatprep.subr.mxu0 0.0
      %1460 = vmatpush1.msra.mxu0 0.0
      %1461 = vmatprep.subr.mxu0 0.0
      %1462 = vmatpush1.msra.mxu0 0.0
      %1463 = vmatprep.subr.mxu0 0.0
      %1464 = vmatpush1.msra.mxu0 0.0
      %1465 = vmatprep.subr.mxu0 0.0
      %1466 = vmatpush1.msra.mxu0 0.0
      %1467 = vmatprep.subr.mxu0 0.0
      %1468 = vmatpush1.msra.mxu0 0.0
      %1469 = vmatprep.subr.mxu0 0.0
      %1470 = vmatpush1.msra.mxu0 0.0
      %1471 = vmatprep.subr.mxu0 0.0
      %1472 = vmatpush1.msra.mxu0 0.0
      %1473 = vmatprep.subr.mxu0 0.0
      %1474 = vmatpush1.msra.mxu0 0.0
      %1475 = vmatprep.mubr.f32.mxu0 0.0
      %1476 = vmatmul.mubr.f32.gmra.mrb[0].mxu0 %v1403
      %v1477 = vpop.f32.mrb[0].mxu0
      %v1478 = vadd.f32 0.0, %v1477
      %v1479 = vpop.f32.mrb[0].mxu0
      %v1480 = vadd.f32 0.0, %v1479
      %1481 = vdwg.mxu0
      %1482 = vmatprep.subr.mxu0 0.0
      %1483 = vmatpush1.msra.mxu0 %v1409
      %1484 = vmatprep.subr.mxu0 0.0
      %1485 = vmatpush1.msra.mxu0 0.0
      %1486 = vmatprep.subr.mxu0 0.0
      %1487 = vmatpush1.msra.mxu0 0.0
      %1488 = vmatprep.subr.mxu0 0.0
      %1489 = vmatpush1.msra.mxu0 0.0
      %1490 = vmatprep.subr.mxu0 0.0
      %1491 = vmatpush1.msra.mxu0 0.0
      %1492 = vmatprep.subr.mxu0 0.0
      %1493 = vmatpush1.msra.mxu0 0.0
      %1494 = vmatprep.subr.mxu0 0.0
      %1495 = vmatpush1.msra.mxu0 0.0
      %1496 = vmatprep.subr.mxu0 0.0
      %1497 = vmatpush1.msra.mxu0 0.0
      %1498 = vmatprep.subr.mxu0 0.0
      %1499 = vmatpush1.msra.mxu0 0.0
      %1500 = vmatprep.subr.mxu0 0.0
      %1501 = vmatpush1.msra.mxu0 0.0
      %1502 = vmatprep.subr.mxu0 0.0
      %1503 = vmatpush1.msra.mxu0 0.0
      %1504 = vmatprep.subr.mxu0 0.0
      %1505 = vmatpush1.msra.mxu0 0.0
      %1506 = vmatprep.subr.mxu0 0.0
      %1507 = vmatpush1.msra.mxu0 0.0
      %1508 = vmatprep.subr.mxu0 0.0
      %1509 = vmatpush1.msra.mxu0 0.0
      %1510 = vmatprep.subr.mxu0 0.0
      %1511 = vmatpush1.msra.mxu0 0.0
      %1512 = vmatprep.subr.mxu0 0.0
      %1513 = vmatpush1.msra.mxu0 0.0
      %1514 = vmatprep.subr.mxu0 0.0
      %1515 = vmatpush1.msra.mxu0 0.0
      %1516 = vmatprep.subr.mxu0 0.0
      %1517 = vmatpush1.msra.mxu0 0.0
      %1518 = vmatprep.subr.mxu0 0.0
      %1519 = vmatpush1.msra.mxu0 0.0
      %1520 = vmatprep.subr.mxu0 0.0
      %1521 = vmatpush1.msra.mxu0 0.0
      %1522 = vmatprep.subr.mxu0 0.0
      %1523 = vmatpush1.msra.mxu0 0.0
      %1524 = vmatprep.subr.mxu0 0.0
      %1525 = vmatpush1.msra.mxu0 0.0
      %1526 = vmatprep.subr.mxu0 0.0
      %1527 = vmatpush1.msra.mxu0 0.0
      %1528 = vmatprep.subr.mxu0 0.0
      %1529 = vmatpush1.msra.mxu0 0.0
      %1530 = vmatprep.subr.mxu0 0.0
      %1531 = vmatpush1.msra.mxu0 0.0
      %1532 = vmatprep.subr.mxu0 0.0
      %1533 = vmatpush1.msra.mxu0 0.0
      %1534 = vmatprep.subr.mxu0 0.0
      %1535 = vmatpush1.msra.mxu0 0.0
      %1536 = vmatprep.subr.mxu0 0.0
      %1537 = vmatpush1.msra.mxu0 0.0
      %1538 = vmatprep.subr.mxu0 0.0
      %1539 = vmatpush1.msra.mxu0 0.0
      %1540 = vmatprep.subr.mxu0 0.0
      %1541 = vmatpush1.msra.mxu0 0.0
      %1542 = vmatprep.subr.mxu0 0.0
      %1543 = vmatpush1.msra.mxu0 0.0
      %1544 = vmatprep.subr.mxu0 0.0
      %1545 = vmatpush1.msra.mxu0 0.0
      %1546 = vmatprep.mubr.f32.mxu0 0.0
      %1547 = vmatmul.mubr.f32.gmra.mrb[0].mxu0 %v1403
      %v1548 = vpop.f32.mrb[0].mxu0
      %v1549 = vadd.f32 0.0, %v1548
      %v1550 = vpop.f32.mrb[0].mxu0
      %1551 = vdwg.mxu0
      %v1552 = vadd.f32 %v1379, %v1478
      %v1553 = vadd.f32 %v1380, %v1480
      %v1554 = vadd.f32 %v1381, %v1549
      %v1555 = vld [vmem:[%s165] sm:$0xff]
      %v1556 = vld [vmem:[%s165 + $0x8] sm:$0xff]
      %s1557 = scalar_lea.vmem %s1, 32
      %v1558 = vld [vmem:[%s1557] sm:$0xf]
      %v1561 = vcombine.high %v1555, %v1555
      %v1562 = vcombine.high %v1556, %v1556
      %1563 = vrot.lane.b32.xlu0 %v1555, 86
      %v1564 = vpop.permute.xlu0 %1563
      %1565 = vrot.lane.b32.xlu0 %v1561, 86
      %v1566 = vpop.permute.xlu0 %1565
      %1567 = vrot.lane.b32.xlu0 %v1556, 86
      %v1568 = vpop.permute.xlu0 %1567
      %1569 = vrot.lane.b32.xlu0 %v1562, 86
      %v1570 = vpop.permute.xlu0 %1569
      %vm1571 = vcmask 703488
      %v1572 = vsel %vm1571, %v1564, %v1566
      %v1573 = vsel %vm1571, %v1566, %v1568
      %v1574 = vsel %vm1571, %v1568, %v1570
      %v1576 = vsel %vm231, %v1558, 0
      %v1578 = vsel %vm235, %v1572, 0
      %v1580 = vsel %vm235, %v1573, 0
      %v1582 = vsel %vm235, %v1574, 0
      %1584 = vmatprep.subr.mxu0 %v1580
      %1585 = vmatpush1.msra.mxu0 %v1578
      %1586 = vmatprep.subr.mxu0 0.0
      %1587 = vmatpush1.msra.mxu0 0.0
      %1588 = vmatprep.subr.mxu0 0.0
      %1589 = vmatpush1.msra.mxu0 0.0
      %1590 = vmatprep.subr.mxu0 0.0
      %1591 = vmatpush1.msra.mxu0 0.0
      %1592 = vmatprep.subr.mxu0 0.0
      %1593 = vmatpush1.msra.mxu0 0.0
      %1594 = vmatprep.subr.mxu0 0.0
      %1595 = vmatpush1.msra.mxu0 0.0
      %1596 = vmatprep.subr.mxu0 0.0
      %1597 = vmatpush1.msra.mxu0 0.0
      %1598 = vmatprep.subr.mxu0 0.0
      %1599 = vmatpush1.msra.mxu0 0.0
      %1600 = vmatprep.subr.mxu0 0.0
      %1601 = vmatpush1.msra.mxu0 0.0
      %1602 = vmatprep.subr.mxu0 0.0
      %1603 = vmatpush1.msra.mxu0 0.0
      %1604 = vmatprep.subr.mxu0 0.0
      %1605 = vmatpush1.msra.mxu0 0.0
      %1606 = vmatprep.subr.mxu0 0.0
      %1607 = vmatpush1.msra.mxu0 0.0
      %1608 = vmatprep.subr.mxu0 0.0
      %1609 = vmatpush1.msra.mxu0 0.0
      %1610 = vmatprep.subr.mxu0 0.0
      %1611 = vmatpush1.msra.mxu0 0.0
      %1612 = vmatprep.subr.mxu0 0.0
      %1613 = vmatpush1.msra.mxu0 0.0
      %1614 = vmatprep.subr.mxu0 0.0
      %1615 = vmatpush1.msra.mxu0 0.0
      %1616 = vmatprep.subr.mxu0 0.0
      %1617 = vmatpush1.msra.mxu0 0.0
      %1618 = vmatprep.subr.mxu0 0.0
      %1619 = vmatpush1.msra.mxu0 0.0
      %1620 = vmatprep.subr.mxu0 0.0
      %1621 = vmatpush1.msra.mxu0 0.0
      %1622 = vmatprep.subr.mxu0 0.0
      %1623 = vmatpush1.msra.mxu0 0.0
      %1624 = vmatprep.subr.mxu0 0.0
      %1625 = vmatpush1.msra.mxu0 0.0
      %1626 = vmatprep.subr.mxu0 0.0
      %1627 = vmatpush1.msra.mxu0 0.0
      %1628 = vmatprep.subr.mxu0 0.0
      %1629 = vmatpush1.msra.mxu0 0.0
      %1630 = vmatprep.subr.mxu0 0.0
      %1631 = vmatpush1.msra.mxu0 0.0
      %1632 = vmatprep.subr.mxu0 0.0
      %1633 = vmatpush1.msra.mxu0 0.0
      %1634 = vmatprep.subr.mxu0 0.0
      %1635 = vmatpush1.msra.mxu0 0.0
      %1636 = vmatprep.subr.mxu0 0.0
      %1637 = vmatpush1.msra.mxu0 0.0
      %1638 = vmatprep.subr.mxu0 0.0
      %1639 = vmatpush1.msra.mxu0 0.0
      %1640 = vmatprep.subr.mxu0 0.0
      %1641 = vmatpush1.msra.mxu0 0.0
      %1642 = vmatprep.subr.mxu0 0.0
      %1643 = vmatpush1.msra.mxu0 0.0
      %1644 = vmatprep.subr.mxu0 0.0
      %1645 = vmatpush1.msra.mxu0 0.0
      %1646 = vmatprep.subr.mxu0 0.0
      %1647 = vmatpush1.msra.mxu0 0.0
      %1648 = vmatprep.mubr.f32.mxu0 0.0
      %1649 = vmatmul.mubr.f32.gmra.mrb[0].mxu0 %v1576
      %v1650 = vpop.f32.mrb[0].mxu0
      %v1651 = vadd.f32 0.0, %v1650
      %v1652 = vpop.f32.mrb[0].mxu0
      %v1653 = vadd.f32 0.0, %v1652
      %1654 = vdwg.mxu0
      %1655 = vmatprep.subr.mxu0 0.0
      %1656 = vmatpush1.msra.mxu0 %v1582
      %1657 = vmatprep.subr.mxu0 0.0
      %1658 = vmatpush1.msra.mxu0 0.0
      %1659 = vmatprep.subr.mxu0 0.0
      %1660 = vmatpush1.msra.mxu0 0.0
      %1661 = vmatprep.subr.mxu0 0.0
      %1662 = vmatpush1.msra.mxu0 0.0
      %1663 = vmatprep.subr.mxu0 0.0
      %1664 = vmatpush1.msra.mxu0 0.0
      %1665 = vmatprep.subr.mxu0 0.0
      %1666 = vmatpush1.msra.mxu0 0.0
      %1667 = vmatprep.subr.mxu0 0.0
      %1668 = vmatpush1.msra.mxu0 0.0
      %1669 = vmatprep.subr.mxu0 0.0
      %1670 = vmatpush1.msra.mxu0 0.0
      %1671 = vmatprep.subr.mxu0 0.0
      %1672 = vmatpush1.msra.mxu0 0.0
      %1673 = vmatprep.subr.mxu0 0.0
      %1674 = vmatpush1.msra.mxu0 0.0
      %1675 = vmatprep.subr.mxu0 0.0
      %1676 = vmatpush1.msra.mxu0 0.0
      %1677 = vmatprep.subr.mxu0 0.0
      %1678 = vmatpush1.msra.mxu0 0.0
      %1679 = vmatprep.subr.mxu0 0.0
      %1680 = vmatpush1.msra.mxu0 0.0
      %1681 = vmatprep.subr.mxu0 0.0
      %1682 = vmatpush1.msra.mxu0 0.0
      %1683 = vmatprep.subr.mxu0 0.0
      %1684 = vmatpush1.msra.mxu0 0.0
      %1685 = vmatprep.subr.mxu0 0.0
      %1686 = vmatpush1.msra.mxu0 0.0
      %1687 = vmatprep.subr.mxu0 0.0
      %1688 = vmatpush1.msra.mxu0 0.0
      %1689 = vmatprep.subr.mxu0 0.0
      %1690 = vmatpush1.msra.mxu0 0.0
      %1691 = vmatprep.subr.mxu0 0.0
      %1692 = vmatpush1.msra.mxu0 0.0
      %1693 = vmatprep.subr.mxu0 0.0
      %1694 = vmatpush1.msra.mxu0 0.0
      %1695 = vmatprep.subr.mxu0 0.0
      %1696 = vmatpush1.msra.mxu0 0.0
      %1697 = vmatprep.subr.mxu0 0.0
      %1698 = vmatpush1.msra.mxu0 0.0
      %1699 = vmatprep.subr.mxu0 0.0
      %1700 = vmatpush1.msra.mxu0 0.0
      %1701 = vmatprep.subr.mxu0 0.0
      %1702 = vmatpush1.msra.mxu0 0.0
      %1703 = vmatprep.subr.mxu0 0.0
      %1704 = vmatpush1.msra.mxu0 0.0
      %1705 = vmatprep.subr.mxu0 0.0
      %1706 = vmatpush1.msra.mxu0 0.0
      %1707 = vmatprep.subr.mxu0 0.0
      %1708 = vmatpush1.msra.mxu0 0.0
      %1709 = vmatprep.subr.mxu0 0.0
      %1710 = vmatpush1.msra.mxu0 0.0
      %1711 = vmatprep.subr.mxu0 0.0
      %1712 = vmatpush1.msra.mxu0 0.0
      %1713 = vmatprep.subr.mxu0 0.0
      %1714 = vmatpush1.msra.mxu0 0.0
      %1715 = vmatprep.subr.mxu0 0.0
      %1716 = vmatpush1.msra.mxu0 0.0
      %1717 = vmatprep.subr.mxu0 0.0
      %1718 = vmatpush1.msra.mxu0 0.0
      %1719 = vmatprep.mubr.f32.mxu0 0.0
      %1720 = vmatmul.mubr.f32.gmra.mrb[0].mxu0 %v1576
      %v1721 = vpop.f32.mrb[0].mxu0
      %v1722 = vadd.f32 0.0, %v1721
      %v1723 = vpop.f32.mrb[0].mxu0
      %1724 = vdwg.mxu0
      %v1725 = vadd.f32 %v1552, %v1651
      %v1726 = vadd.f32 %v1553, %v1653
      %v1727 = vadd.f32 %v1554, %v1722
      %v1728 = vmax.f32 %v1725, 0.0
      %v1729 = vmax.f32 %v1726, 0.0
      %v1730 = vmax.f32 %v1727, 0.0
      %v1731 = vsel %vm211, 1, 0
      %v1732 = vsel %vm212, 1, 0
      %v1733 = vsel %vm213, 1, 0
      %vm1734 = vcmp.eq.s32.totalorder %v1731, 1
      %vm1735 = vcmp.eq.s32.totalorder %v1732, 1
      %vm1736 = vcmp.eq.s32.totalorder %v1733, 1
      %v1737 = vsel %vm1734, %v1728, 0.0
      %v1738 = vsel %vm1735, %v1729, 0.0
      %v1739 = vsel %vm1736, %v1730, 0.0
      %v1740 = vld [vmem:[%s2] sm:$0xf]
      %s1741 = scalar_lea.vmem %s2, 4
      %v1742 = vld [vmem:[%s1741] sm:$0xf]
      %1746 = vrot.lane.b32.xlu0 %v1737, 127
      %v1747 = vpop.permute.xlu0 %1746
      %1748 = vrot.lane.b32.xlu0 %v1738, 127
      %v1749 = vpop.permute.xlu0 %1748
      %1750 = vrot.lane.b32.xlu0 %v1739, 127
      %v1751 = vpop.permute.xlu0 %1750
      %v1752 = vsel %vm228, %v1747, %v1749
      %v1753 = vsel %vm228, %v1749, %v1751
      %v1755 = vsel %vm231, %v1742, 0
      %v1757 = vsel %vm235, %v1752, 0
      %v1759 = vsel %vm235, %v1753, 0
      %v1761 = vsel %vm235, %v1751, 0
      %1763 = vmatprep.subr.mxu0 %v1759
      %1764 = vmatpush1.msra.mxu0 %v1757
      %1765 = vmatprep.subr.mxu0 0.0
      %1766 = vmatpush1.msra.mxu0 0.0
      %1767 = vmatprep.subr.mxu0 0.0
      %1768 = vmatpush1.msra.mxu0 0.0
      %1769 = vmatprep.subr.mxu0 0.0
      %1770 = vmatpush1.msra.mxu0 0.0
      %1771 = vmatprep.subr.mxu0 0.0
      %1772 = vmatpush1.msra.mxu0 0.0
      %1773 = vmatprep.subr.mxu0 0.0
      %1774 = vmatpush1.msra.mxu0 0.0
      %1775 = vmatprep.subr.mxu0 0.0
      %1776 = vmatpush1.msra.mxu0 0.0
      %1777 = vmatprep.subr.mxu0 0.0
      %1778 = vmatpush1.msra.mxu0 0.0
      %1779 = vmatprep.subr.mxu0 0.0
      %1780 = vmatpush1.msra.mxu0 0.0
      %1781 = vmatprep.subr.mxu0 0.0
      %1782 = vmatpush1.msra.mxu0 0.0
      %1783 = vmatprep.subr.mxu0 0.0
      %1784 = vmatpush1.msra.mxu0 0.0
      %1785 = vmatprep.subr.mxu0 0.0
      %1786 = vmatpush1.msra.mxu0 0.0
      %1787 = vmatprep.subr.mxu0 0.0
      %1788 = vmatpush1.msra.mxu0 0.0
      %1789 = vmatprep.subr.mxu0 0.0
      %1790 = vmatpush1.msra.mxu0 0.0
      %1791 = vmatprep.subr.mxu0 0.0
      %1792 = vmatpush1.msra.mxu0 0.0
      %1793 = vmatprep.subr.mxu0 0.0
      %1794 = vmatpush1.msra.mxu0 0.0
      %1795 = vmatprep.subr.mxu0 0.0
      %1796 = vmatpush1.msra.mxu0 0.0
      %1797 = vmatprep.subr.mxu0 0.0
      %1798 = vmatpush1.msra.mxu0 0.0
      %1799 = vmatprep.subr.mxu0 0.0
      %1800 = vmatpush1.msra.mxu0 0.0
      %1801 = vmatprep.subr.mxu0 0.0
      %1802 = vmatpush1.msra.mxu0 0.0
      %1803 = vmatprep.subr.mxu0 0.0
      %1804 = vmatpush1.msra.mxu0 0.0
      %1805 = vmatprep.subr.mxu0 0.0
      %1806 = vmatpush1.msra.mxu0 0.0
      %1807 = vmatprep.subr.mxu0 0.0
      %1808 = vmatpush1.msra.mxu0 0.0
      %1809 = vmatprep.subr.mxu0 0.0
      %1810 = vmatpush1.msra.mxu0 0.0
      %1811 = vmatprep.subr.mxu0 0.0
      %1812 = vmatpush1.msra.mxu0 0.0
      %1813 = vmatprep.subr.mxu0 0.0
      %1814 = vmatpush1.msra.mxu0 0.0
      %1815 = vmatprep.subr.mxu0 0.0
      %1816 = vmatpush1.msra.mxu0 0.0
      %1817 = vmatprep.subr.mxu0 0.0
      %1818 = vmatpush1.msra.mxu0 0.0
      %1819 = vmatprep.subr.mxu0 0.0
      %1820 = vmatpush1.msra.mxu0 0.0
      %1821 = vmatprep.subr.mxu0 0.0
      %1822 = vmatpush1.msra.mxu0 0.0
      %1823 = vmatprep.subr.mxu0 0.0
      %1824 = vmatpush1.msra.mxu0 0.0
      %1825 = vmatprep.subr.mxu0 0.0
      %1826 = vmatpush1.msra.mxu0 0.0
      %1827 = vmatprep.mubr.f32.mxu0 0.0
      %1828 = vmatmul.mubr.f32.gmra.mrb[0].mxu0 %v1755
      %v1829 = vpop.f32.mrb[0].mxu0
      %v1830 = vadd.f32 0.0, %v1829
      %v1831 = vpop.f32.mrb[0].mxu0
      %v1832 = vadd.f32 0.0, %v1831
      %1833 = vdwg.mxu0
      %1834 = vmatprep.subr.mxu0 0.0
      %1835 = vmatpush1.msra.mxu0 %v1761
      %1836 = vmatprep.subr.mxu0 0.0
      %1837 = vmatpush1.msra.mxu0 0.0
      %1838 = vmatprep.subr.mxu0 0.0
      %1839 = vmatpush1.msra.mxu0 0.0
      %1840 = vmatprep.subr.mxu0 0.0
      %1841 = vmatpush1.msra.mxu0 0.0
      %1842 = vmatprep.subr.mxu0 0.0
      %1843 = vmatpush1.msra.mxu0 0.0
      %1844 = vmatprep.subr.mxu0 0.0
      %1845 = vmatpush1.msra.mxu0 0.0
      %1846 = vmatprep.subr.mxu0 0.0
      %1847 = vmatpush1.msra.mxu0 0.0
      %1848 = vmatprep.subr.mxu0 0.0
      %1849 = vmatpush1.msra.mxu0 0.0
      %1850 = vmatprep.subr.mxu0 0.0
      %1851 = vmatpush1.msra.mxu0 0.0
      %1852 = vmatprep.subr.mxu0 0.0
      %1853 = vmatpush1.msra.mxu0 0.0
      %1854 = vmatprep.subr.mxu0 0.0
      %1855 = vmatpush1.msra.mxu0 0.0
      %1856 = vmatprep.subr.mxu0 0.0
      %1857 = vmatpush1.msra.mxu0 0.0
      %1858 = vmatprep.subr.mxu0 0.0
      %1859 = vmatpush1.msra.mxu0 0.0
      %1860 = vmatprep.subr.mxu0 0.0
      %1861 = vmatpush1.msra.mxu0 0.0
      %1862 = vmatprep.subr.mxu0 0.0
      %1863 = vmatpush1.msra.mxu0 0.0
      %1864 = vmatprep.subr.mxu0 0.0
      %1865 = vmatpush1.msra.mxu0 0.0
      %1866 = vmatprep.subr.mxu0 0.0
      %1867 = vmatpush1.msra.mxu0 0.0
      %1868 = vmatprep.subr.mxu0 0.0
      %1869 = vmatpush1.msra.mxu0 0.0
      %1870 = vmatprep.subr.mxu0 0.0
      %1871 = vmatpush1.msra.mxu0 0.0
      %1872 = vmatprep.subr.mxu0 0.0
      %1873 = vmatpush1.msra.mxu0 0.0
      %1874 = vmatprep.subr.mxu0 0.0
      %1875 = vmatpush1.msra.mxu0 0.0
      %1876 = vmatprep.subr.mxu0 0.0
      %1877 = vmatpush1.msra.mxu0 0.0
      %1878 = vmatprep.subr.mxu0 0.0
      %1879 = vmatpush1.msra.mxu0 0.0
      %1880 = vmatprep.subr.mxu0 0.0
      %1881 = vmatpush1.msra.mxu0 0.0
      %1882 = vmatprep.subr.mxu0 0.0
      %1883 = vmatpush1.msra.mxu0 0.0
      %1884 = vmatprep.subr.mxu0 0.0
      %1885 = vmatpush1.msra.mxu0 0.0
      %1886 = vmatprep.subr.mxu0 0.0
      %1887 = vmatpush1.msra.mxu0 0.0
      %1888 = vmatprep.subr.mxu0 0.0
      %1889 = vmatpush1.msra.mxu0 0.0
      %1890 = vmatprep.subr.mxu0 0.0
      %1891 = vmatpush1.msra.mxu0 0.0
      %1892 = vmatprep.subr.mxu0 0.0
      %1893 = vmatpush1.msra.mxu0 0.0
      %1894 = vmatprep.subr.mxu0 0.0
      %1895 = vmatpush1.msra.mxu0 0.0
      %1896 = vmatprep.subr.mxu0 0.0
      %1897 = vmatpush1.msra.mxu0 0.0
      %1898 = vmatprep.mubr.f32.mxu0 0.0
      %1899 = vmatmul.mubr.f32.gmra.mrb[0].mxu0 %v1755
      %v1900 = vpop.f32.mrb[0].mxu0
      %v1901 = vadd.f32 0.0, %v1900
      %v1902 = vpop.f32.mrb[0].mxu0
      %1903 = vdwg.mxu0
      %v1905 = vsel %vm231, %v1740, 0
      %v1907 = vsel %vm235, %v1737, 0
      %v1909 = vsel %vm235, %v1738, 0
      %v1911 = vsel %vm235, %v1739, 0
      %1913 = vmatprep.subr.mxu0 %v1909
      %1914 = vmatpush1.msra.mxu0 %v1907
      %1915 = vmatprep.subr.mxu0 0.0
      %1916 = vmatpush1.msra.mxu0 0.0
      %1917 = vmatprep.subr.mxu0 0.0
      %1918 = vmatpush1.msra.mxu0 0.0
      %1919 = vmatprep.subr.mxu0 0.0
      %1920 = vmatpush1.msra.mxu0 0.0
      %1921 = vmatprep.subr.mxu0 0.0
      %1922 = vmatpush1.msra.mxu0 0.0
      %1923 = vmatprep.subr.mxu0 0.0
      %1924 = vmatpush1.msra.mxu0 0.0
      %1925 = vmatprep.subr.mxu0 0.0
      %1926 = vmatpush1.msra.mxu0 0.0
      %1927 = vmatprep.subr.mxu0 0.0
      %1928 = vmatpush1.msra.mxu0 0.0
      %1929 = vmatprep.subr.mxu0 0.0
      %1930 = vmatpush1.msra.mxu0 0.0
      %1931 = vmatprep.subr.mxu0 0.0
      %1932 = vmatpush1.msra.mxu0 0.0
      %1933 = vmatprep.subr.mxu0 0.0
      %1934 = vmatpush1.msra.mxu0 0.0
      %1935 = vmatprep.subr.mxu0 0.0
      %1936 = vmatpush1.msra.mxu0 0.0
      %1937 = vmatprep.subr.mxu0 0.0
      %1938 = vmatpush1.msra.mxu0 0.0
      %1939 = vmatprep.subr.mxu0 0.0
      %1940 = vmatpush1.msra.mxu0 0.0
      %1941 = vmatprep.subr.mxu0 0.0
      %1942 = vmatpush1.msra.mxu0 0.0
      %1943 = vmatprep.subr.mxu0 0.0
      %1944 = vmatpush1.msra.mxu0 0.0
      %1945 = vmatprep.subr.mxu0 0.0
      %1946 = vmatpush1.msra.mxu0 0.0
      %1947 = vmatprep.subr.mxu0 0.0
      %1948 = vmatpush1.msra.mxu0 0.0
      %1949 = vmatprep.subr.mxu0 0.0
      %1950 = vmatpush1.msra.mxu0 0.0
      %1951 = vmatprep.subr.mxu0 0.0
      %1952 = vmatpush1.msra.mxu0 0.0
      %1953 = vmatprep.subr.mxu0 0.0
      %1954 = vmatpush1.msra.mxu0 0.0
      %1955 = vmatprep.subr.mxu0 0.0
      %1956 = vmatpush1.msra.mxu0 0.0
      %1957 = vmatprep.subr.mxu0 0.0
      %1958 = vmatpush1.msra.mxu0 0.0
      %1959 = vmatprep.subr.mxu0 0.0
      %1960 = vmatpush1.msra.mxu0 0.0
      %1961 = vmatprep.subr.mxu0 0.0
      %1962 = vmatpush1.msra.mxu0 0.0
      %1963 = vmatprep.subr.mxu0 0.0
      %1964 = vmatpush1.msra.mxu0 0.0
      %1965 = vmatprep.subr.mxu0 0.0
      %1966 = vmatpush1.msra.mxu0 0.0
      %1967 = vmatprep.subr.mxu0 0.0
      %1968 = vmatpush1.msra.mxu0 0.0
      %1969 = vmatprep.subr.mxu0 0.0
      %1970 = vmatpush1.msra.mxu0 0.0
      %1971 = vmatprep.subr.mxu0 0.0
      %1972 = vmatpush1.msra.mxu0 0.0
      %1973 = vmatprep.subr.mxu0 0.0
      %1974 = vmatpush1.msra.mxu0 0.0
      %1975 = vmatprep.subr.mxu0 0.0
      %1976 = vmatpush1.msra.mxu0 0.0
      %1977 = vmatprep.mubr.f32.mxu0 0.0
      %1978 = vmatmul.mubr.f32.gmra.mrb[0].mxu0 %v1905
      %v1979 = vpop.f32.mrb[0].mxu0
      %v1980 = vadd.f32 %v1830, %v1979
      %v1981 = vpop.f32.mrb[0].mxu0
      %v1982 = vadd.f32 %v1832, %v1981
      %1983 = vdwg.mxu0
      %1984 = vmatprep.subr.mxu0 0.0
      %1985 = vmatpush1.msra.mxu0 %v1911
      %1986 = vmatprep.subr.mxu0 0.0
      %1987 = vmatpush1.msra.mxu0 0.0
      %1988 = vmatprep.subr.mxu0 0.0
      %1989 = vmatpush1.msra.mxu0 0.0
      %1990 = vmatprep.subr.mxu0 0.0
      %1991 = vmatpush1.msra.mxu0 0.0
      %1992 = vmatprep.subr.mxu0 0.0
      %1993 = vmatpush1.msra.mxu0 0.0
      %1994 = vmatprep.subr.mxu0 0.0
      %1995 = vmatpush1.msra.mxu0 0.0
      %1996 = vmatprep.subr.mxu0 0.0
      %1997 = vmatpush1.msra.mxu0 0.0
      %1998 = vmatprep.subr.mxu0 0.0
      %1999 = vmatpush1.msra.mxu0 0.0
      %2000 = vmatprep.subr.mxu0 0.0
      %2001 = vmatpush1.msra.mxu0 0.0
      %2002 = vmatprep.subr.mxu0 0.0
      %2003 = vmatpush1.msra.mxu0 0.0
      %2004 = vmatprep.subr.mxu0 0.0
      %2005 = vmatpush1.msra.mxu0 0.0
      %2006 = vmatprep.subr.mxu0 0.0
      %2007 = vmatpush1.msra.mxu0 0.0
      %2008 = vmatprep.subr.mxu0 0.0
      %2009 = vmatpush1.msra.mxu0 0.0
      %2010 = vmatprep.subr.mxu0 0.0
      %2011 = vmatpush1.msra.mxu0 0.0
      %2012 = vmatprep.subr.mxu0 0.0
      %2013 = vmatpush1.msra.mxu0 0.0
      %2014 = vmatprep.subr.mxu0 0.0
      %2015 = vmatpush1.msra.mxu0 0.0
      %2016 = vmatprep.subr.mxu0 0.0
      %2017 = vmatpush1.msra.mxu0 0.0
      %2018 = vmatprep.subr.mxu0 0.0
      %2019 = vmatpush1.msra.mxu0 0.0
      %2020 = vmatprep.subr.mxu0 0.0
      %2021 = vmatpush1.msra.mxu0 0.0
      %2022 = vmatprep.subr.mxu0 0.0
      %2023 = vmatpush1.msra.mxu0 0.0
      %2024 = vmatprep.subr.mxu0 0.0
      %2025 = vmatpush1.msra.mxu0 0.0
      %2026 = vmatprep.subr.mxu0 0.0
      %2027 = vmatpush1.msra.mxu0 0.0
      %2028 = vmatprep.subr.mxu0 0.0
      %2029 = vmatpush1.msra.mxu0 0.0
      %2030 = vmatprep.subr.mxu0 0.0
      %2031 = vmatpush1.msra.mxu0 0.0
      %2032 = vmatprep.subr.mxu0 0.0
      %2033 = vmatpush1.msra.mxu0 0.0
      %2034 = vmatprep.subr.mxu0 0.0
      %2035 = vmatpush1.msra.mxu0 0.0
      %2036 = vmatprep.subr.mxu0 0.0
      %2037 = vmatpush1.msra.mxu0 0.0
      %2038 = vmatprep.subr.mxu0 0.0
      %2039 = vmatpush1.msra.mxu0 0.0
      %2040 = vmatprep.subr.mxu0 0.0
      %2041 = vmatpush1.msra.mxu0 0.0
      %2042 = vmatprep.subr.mxu0 0.0
      %2043 = vmatpush1.msra.mxu0 0.0
      %2044 = vmatprep.subr.mxu0 0.0
      %2045 = vmatpush1.msra.mxu0 0.0
      %2046 = vmatprep.subr.mxu0 0.0
      %2047 = vmatpush1.msra.mxu0 0.0
      %2048 = vmatprep.mubr.f32.mxu0 0.0
      %2049 = vmatmul.mubr.f32.gmra.mrb[0].mxu0 %v1905
      %v2050 = vpop.f32.mrb[0].mxu0
      %v2051 = vadd.f32 %v1901, %v2050
      %v2052 = vpop.f32.mrb[0].mxu0
      %2053 = vdwg.mxu0
      %s2054 = scalar_lea.vmem %s2, 8
      %v2055 = vld [vmem:[%s2054] sm:$0xf]
      %2056 = vrot.lane.b32.xlu0 %v1737, 126
      %v2057 = vpop.permute.xlu0 %2056
      %2058 = vrot.lane.b32.xlu0 %v1738, 126
      %v2059 = vpop.permute.xlu0 %2058
      %2060 = vrot.lane.b32.xlu0 %v1739, 126
      %v2061 = vpop.permute.xlu0 %2060
      %v2062 = vsel %vm546, %v2057, %v2059
      %v2063 = vsel %vm546, %v2059, %v2061
      %v2065 = vsel %vm231, %v2055, 0
      %v2067 = vsel %vm235, %v2062, 0
      %v2069 = vsel %vm235, %v2063, 0
      %v2071 = vsel %vm235, %v2061, 0
      %2073 = vmatprep.subr.mxu0 %v2069
      %2074 = vmatpush1.msra.mxu0 %v2067
      %2075 = vmatprep.subr.mxu0 0.0
      %2076 = vmatpush1.msra.mxu0 0.0
      %2077 = vmatprep.subr.mxu0 0.0
      %2078 = vmatpush1.msra.mxu0 0.0
      %2079 = vmatprep.subr.mxu0 0.0
      %2080 = vmatpush1.msra.mxu0 0.0
      %2081 = vmatprep.subr.mxu0 0.0
      %2082 = vmatpush1.msra.mxu0 0.0
      %2083 = vmatprep.subr.mxu0 0.0
      %2084 = vmatpush1.msra.mxu0 0.0
      %2085 = vmatprep.subr.mxu0 0.0
      %2086 = vmatpush1.msra.mxu0 0.0
      %2087 = vmatprep.subr.mxu0 0.0
      %2088 = vmatpush1.msra.mxu0 0.0
      %2089 = vmatprep.subr.mxu0 0.0
      %2090 = vmatpush1.msra.mxu0 0.0
      %2091 = vmatprep.subr.mxu0 0.0
      %2092 = vmatpush1.msra.mxu0 0.0
      %2093 = vmatprep.subr.mxu0 0.0
      %2094 = vmatpush1.msra.mxu0 0.0
      %2095 = vmatprep.subr.mxu0 0.0
      %2096 = vmatpush1.msra.mxu0 0.0
      %2097 = vmatprep.subr.mxu0 0.0
      %2098 = vmatpush1.msra.mxu0 0.0
      %2099 = vmatprep.subr.mxu0 0.0
      %2100 = vmatpush1.msra.mxu0 0.0
      %2101 = vmatprep.subr.mxu0 0.0
      %2102 = vmatpush1.msra.mxu0 0.0
      %2103 = vmatprep.subr.mxu0 0.0
      %2104 = vmatpush1.msra.mxu0 0.0
      %2105 = vmatprep.subr.mxu0 0.0
      %2106 = vmatpush1.msra.mxu0 0.0
      %2107 = vmatprep.subr.mxu0 0.0
      %2108 = vmatpush1.msra.mxu0 0.0
      %2109 = vmatprep.subr.mxu0 0.0
      %2110 = vmatpush1.msra.mxu0 0.0
      %2111 = vmatprep.subr.mxu0 0.0
      %2112 = vmatpush1.msra.mxu0 0.0
      %2113 = vmatprep.subr.mxu0 0.0
      %2114 = vmatpush1.msra.mxu0 0.0
      %2115 = vmatprep.subr.mxu0 0.0
      %2116 = vmatpush1.msra.mxu0 0.0
      %2117 = vmatprep.subr.mxu0 0.0
      %2118 = vmatpush1.msra.mxu0 0.0
      %2119 = vmatprep.subr.mxu0 0.0
      %2120 = vmatpush1.msra.mxu0 0.0
      %2121 = vmatprep.subr.mxu0 0.0
      %2122 = vmatpush1.msra.mxu0 0.0
      %2123 = vmatprep.subr.mxu0 0.0
      %2124 = vmatpush1.msra.mxu0 0.0
      %2125 = vmatprep.subr.mxu0 0.0
      %2126 = vmatpush1.msra.mxu0 0.0
      %2127 = vmatprep.subr.mxu0 0.0
      %2128 = vmatpush1.msra.mxu0 0.0
      %2129 = vmatprep.subr.mxu0 0.0
      %2130 = vmatpush1.msra.mxu0 0.0
      %2131 = vmatprep.subr.mxu0 0.0
      %2132 = vmatpush1.msra.mxu0 0.0
      %2133 = vmatprep.subr.mxu0 0.0
      %2134 = vmatpush1.msra.mxu0 0.0
      %2135 = vmatprep.subr.mxu0 0.0
      %2136 = vmatpush1.msra.mxu0 0.0
      %2137 = vmatprep.mubr.f32.mxu0 0.0
      %2138 = vmatmul.mubr.f32.gmra.mrb[0].mxu0 %v2065
      %v2139 = vpop.f32.mrb[0].mxu0
      %v2140 = vadd.f32 0.0, %v2139
      %v2141 = vpop.f32.mrb[0].mxu0
      %v2142 = vadd.f32 0.0, %v2141
      %2143 = vdwg.mxu0
      %2144 = vmatprep.subr.mxu0 0.0
      %2145 = vmatpush1.msra.mxu0 %v2071
      %2146 = vmatprep.subr.mxu0 0.0
      %2147 = vmatpush1.msra.mxu0 0.0
      %2148 = vmatprep.subr.mxu0 0.0
      %2149 = vmatpush1.msra.mxu0 0.0
      %2150 = vmatprep.subr.mxu0 0.0
      %2151 = vmatpush1.msra.mxu0 0.0
      %2152 = vmatprep.subr.mxu0 0.0
      %2153 = vmatpush1.msra.mxu0 0.0
      %2154 = vmatprep.subr.mxu0 0.0
      %2155 = vmatpush1.msra.mxu0 0.0
      %2156 = vmatprep.subr.mxu0 0.0
      %2157 = vmatpush1.msra.mxu0 0.0
      %2158 = vmatprep.subr.mxu0 0.0
      %2159 = vmatpush1.msra.mxu0 0.0
      %2160 = vmatprep.subr.mxu0 0.0
      %2161 = vmatpush1.msra.mxu0 0.0
      %2162 = vmatprep.subr.mxu0 0.0
      %2163 = vmatpush1.msra.mxu0 0.0
      %2164 = vmatprep.subr.mxu0 0.0
      %2165 = vmatpush1.msra.mxu0 0.0
      %2166 = vmatprep.subr.mxu0 0.0
      %2167 = vmatpush1.msra.mxu0 0.0
      %2168 = vmatprep.subr.mxu0 0.0
      %2169 = vmatpush1.msra.mxu0 0.0
      %2170 = vmatprep.subr.mxu0 0.0
      %2171 = vmatpush1.msra.mxu0 0.0
      %2172 = vmatprep.subr.mxu0 0.0
      %2173 = vmatpush1.msra.mxu0 0.0
      %2174 = vmatprep.subr.mxu0 0.0
      %2175 = vmatpush1.msra.mxu0 0.0
      %2176 = vmatprep.subr.mxu0 0.0
      %2177 = vmatpush1.msra.mxu0 0.0
      %2178 = vmatprep.subr.mxu0 0.0
      %2179 = vmatpush1.msra.mxu0 0.0
      %2180 = vmatprep.subr.mxu0 0.0
      %2181 = vmatpush1.msra.mxu0 0.0
      %2182 = vmatprep.subr.mxu0 0.0
      %2183 = vmatpush1.msra.mxu0 0.0
      %2184 = vmatprep.subr.mxu0 0.0
      %2185 = vmatpush1.msra.mxu0 0.0
      %2186 = vmatprep.subr.mxu0 0.0
      %2187 = vmatpush1.msra.mxu0 0.0
      %2188 = vmatprep.subr.mxu0 0.0
      %2189 = vmatpush1.msra.mxu0 0.0
      %2190 = vmatprep.subr.mxu0 0.0
      %2191 = vmatpush1.msra.mxu0 0.0
      %2192 = vmatprep.subr.mxu0 0.0
      %2193 = vmatpush1.msra.mxu0 0.0
      %2194 = vmatprep.subr.mxu0 0.0
      %2195 = vmatpush1.msra.mxu0 0.0
      %2196 = vmatprep.subr.mxu0 0.0
      %2197 = vmatpush1.msra.mxu0 0.0
      %2198 = vmatprep.subr.mxu0 0.0
      %2199 = vmatpush1.msra.mxu0 0.0
      %2200 = vmatprep.subr.mxu0 0.0
      %2201 = vmatpush1.msra.mxu0 0.0
      %2202 = vmatprep.subr.mxu0 0.0
      %2203 = vmatpush1.msra.mxu0 0.0
      %2204 = vmatprep.subr.mxu0 0.0
      %2205 = vmatpush1.msra.mxu0 0.0
      %2206 = vmatprep.subr.mxu0 0.0
      %2207 = vmatpush1.msra.mxu0 0.0
      %2208 = vmatprep.mubr.f32.mxu0 0.0
      %2209 = vmatmul.mubr.f32.gmra.mrb[0].mxu0 %v2065
      %v2210 = vpop.f32.mrb[0].mxu0
      %v2211 = vadd.f32 0.0, %v2210
      %v2212 = vpop.f32.mrb[0].mxu0
      %2213 = vdwg.mxu0
      %v2214 = vadd.f32 %v1980, %v2140
      %v2215 = vadd.f32 %v1982, %v2142
      %v2216 = vadd.f32 %v2051, %v2211
      %s2217 = scalar_lea.vmem %s2, 12
      %v2218 = vld [vmem:[%s2217] sm:$0xf]
      %2219 = vrot.lane.b32.xlu0 %v1737, 108
      %v2220 = vpop.permute.xlu0 %2219
      %2221 = vrot.lane.b32.xlu0 %v1738, 108
      %v2222 = vpop.permute.xlu0 %2221
      %2223 = vrot.lane.b32.xlu0 %v1739, 108
      %v2224 = vpop.permute.xlu0 %2223
      %v2225 = vsel %vm715, %v2220, %v2222
      %v2226 = vsel %vm715, %v2222, %v2224
      %v2228 = vsel %vm231, %v2218, 0
      %v2230 = vsel %vm235, %v2225, 0
      %v2232 = vsel %vm235, %v2226, 0
      %v2234 = vsel %vm235, %v2224, 0
      %2236 = vmatprep.subr.mxu0 %v2232
      %2237 = vmatpush1.msra.mxu0 %v2230
      %2238 = vmatprep.subr.mxu0 0.0
      %2239 = vmatpush1.msra.mxu0 0.0
      %2240 = vmatprep.subr.mxu0 0.0
      %2241 = vmatpush1.msra.mxu0 0.0
      %2242 = vmatprep.subr.mxu0 0.0
      %2243 = vmatpush1.msra.mxu0 0.0
      %2244 = vmatprep.subr.mxu0 0.0
      %2245 = vmatpush1.msra.mxu0 0.0
      %2246 = vmatprep.subr.mxu0 0.0
      %2247 = vmatpush1.msra.mxu0 0.0
      %2248 = vmatprep.subr.mxu0 0.0
      %2249 = vmatpush1.msra.mxu0 0.0
      %2250 = vmatprep.subr.mxu0 0.0
      %2251 = vmatpush1.msra.mxu0 0.0
      %2252 = vmatprep.subr.mxu0 0.0
      %2253 = vmatpush1.msra.mxu0 0.0
      %2254 = vmatprep.subr.mxu0 0.0
      %2255 = vmatpush1.msra.mxu0 0.0
      %2256 = vmatprep.subr.mxu0 0.0
      %2257 = vmatpush1.msra.mxu0 0.0
      %2258 = vmatprep.subr.mxu0 0.0
      %2259 = vmatpush1.msra.mxu0 0.0
      %2260 = vmatprep.subr.mxu0 0.0
      %2261 = vmatpush1.msra.mxu0 0.0
      %2262 = vmatprep.subr.mxu0 0.0
      %2263 = vmatpush1.msra.mxu0 0.0
      %2264 = vmatprep.subr.mxu0 0.0
      %2265 = vmatpush1.msra.mxu0 0.0
      %2266 = vmatprep.subr.mxu0 0.0
      %2267 = vmatpush1.msra.mxu0 0.0
      %2268 = vmatprep.subr.mxu0 0.0
      %2269 = vmatpush1.msra.mxu0 0.0
      %2270 = vmatprep.subr.mxu0 0.0
      %2271 = vmatpush1.msra.mxu0 0.0
      %2272 = vmatprep.subr.mxu0 0.0
      %2273 = vmatpush1.msra.mxu0 0.0
      %2274 = vmatprep.subr.mxu0 0.0
      %2275 = vmatpush1.msra.mxu0 0.0
      %2276 = vmatprep.subr.mxu0 0.0
      %2277 = vmatpush1.msra.mxu0 0.0
      %2278 = vmatprep.subr.mxu0 0.0
      %2279 = vmatpush1.msra.mxu0 0.0
      %2280 = vmatprep.subr.mxu0 0.0
      %2281 = vmatpush1.msra.mxu0 0.0
      %2282 = vmatprep.subr.mxu0 0.0
      %2283 = vmatpush1.msra.mxu0 0.0
      %2284 = vmatprep.subr.mxu0 0.0
      %2285 = vmatpush1.msra.mxu0 0.0
      %2286 = vmatprep.subr.mxu0 0.0
      %2287 = vmatpush1.msra.mxu0 0.0
      %2288 = vmatprep.subr.mxu0 0.0
      %2289 = vmatpush1.msra.mxu0 0.0
      %2290 = vmatprep.subr.mxu0 0.0
      %2291 = vmatpush1.msra.mxu0 0.0
      %2292 = vmatprep.subr.mxu0 0.0
      %2293 = vmatpush1.msra.mxu0 0.0
      %2294 = vmatprep.subr.mxu0 0.0
      %2295 = vmatpush1.msra.mxu0 0.0
      %2296 = vmatprep.subr.mxu0 0.0
      %2297 = vmatpush1.msra.mxu0 0.0
      %2298 = vmatprep.subr.mxu0 0.0
      %2299 = vmatpush1.msra.mxu0 0.0
      %2300 = vmatprep.mubr.f32.mxu0 0.0
      %2301 = vmatmul.mubr.f32.gmra.mrb[0].mxu0 %v2228
      %v2302 = vpop.f32.mrb[0].mxu0
      %v2303 = vadd.f32 0.0, %v2302
      %v2304 = vpop.f32.mrb[0].mxu0
      %v2305 = vadd.f32 0.0, %v2304
      %2306 = vdwg.mxu0
      %2307 = vmatprep.subr.mxu0 0.0
      %2308 = vmatpush1.msra.mxu0 %v2234
      %2309 = vmatprep.subr.mxu0 0.0
      %2310 = vmatpush1.msra.mxu0 0.0
      %2311 = vmatprep.subr.mxu0 0.0
      %2312 = vmatpush1.msra.mxu0 0.0
      %2313 = vmatprep.subr.mxu0 0.0
      %2314 = vmatpush1.msra.mxu0 0.0
      %2315 = vmatprep.subr.mxu0 0.0
      %2316 = vmatpush1.msra.mxu0 0.0
      %2317 = vmatprep.subr.mxu0 0.0
      %2318 = vmatpush1.msra.mxu0 0.0
      %2319 = vmatprep.subr.mxu0 0.0
      %2320 = vmatpush1.msra.mxu0 0.0
      %2321 = vmatprep.subr.mxu0 0.0
      %2322 = vmatpush1.msra.mxu0 0.0
      %2323 = vmatprep.subr.mxu0 0.0
      %2324 = vmatpush1.msra.mxu0 0.0
      %2325 = vmatprep.subr.mxu0 0.0
      %2326 = vmatpush1.msra.mxu0 0.0
      %2327 = vmatprep.subr.mxu0 0.0
      %2328 = vmatpush1.msra.mxu0 0.0
      %2329 = vmatprep.subr.mxu0 0.0
      %2330 = vmatpush1.msra.mxu0 0.0
      %2331 = vmatprep.subr.mxu0 0.0
      %2332 = vmatpush1.msra.mxu0 0.0
      %2333 = vmatprep.subr.mxu0 0.0
      %2334 = vmatpush1.msra.mxu0 0.0
      %2335 = vmatprep.subr.mxu0 0.0
      %2336 = vmatpush1.msra.mxu0 0.0
      %2337 = vmatprep.subr.mxu0 0.0
      %2338 = vmatpush1.msra.mxu0 0.0
      %2339 = vmatprep.subr.mxu0 0.0
      %2340 = vmatpush1.msra.mxu0 0.0
      %2341 = vmatprep.subr.mxu0 0.0
      %2342 = vmatpush1.msra.mxu0 0.0
      %2343 = vmatprep.subr.mxu0 0.0
      %2344 = vmatpush1.msra.mxu0 0.0
      %2345 = vmatprep.subr.mxu0 0.0
      %2346 = vmatpush1.msra.mxu0 0.0
      %2347 = vmatprep.subr.mxu0 0.0
      %2348 = vmatpush1.msra.mxu0 0.0
      %2349 = vmatprep.subr.mxu0 0.0
      %2350 = vmatpush1.msra.mxu0 0.0
      %2351 = vmatprep.subr.mxu0 0.0
      %2352 = vmatpush1.msra.mxu0 0.0
      %2353 = vmatprep.subr.mxu0 0.0
      %2354 = vmatpush1.msra.mxu0 0.0
      %2355 = vmatprep.subr.mxu0 0.0
      %2356 = vmatpush1.msra.mxu0 0.0
      %2357 = vmatprep.subr.mxu0 0.0
      %2358 = vmatpush1.msra.mxu0 0.0
      %2359 = vmatprep.subr.mxu0 0.0
      %2360 = vmatpush1.msra.mxu0 0.0
      %2361 = vmatprep.subr.mxu0 0.0
      %2362 = vmatpush1.msra.mxu0 0.0
      %2363 = vmatprep.subr.mxu0 0.0
      %2364 = vmatpush1.msra.mxu0 0.0
      %2365 = vmatprep.subr.mxu0 0.0
      %2366 = vmatpush1.msra.mxu0 0.0
      %2367 = vmatprep.subr.mxu0 0.0
      %2368 = vmatpush1.msra.mxu0 0.0
      %2369 = vmatprep.subr.mxu0 0.0
      %2370 = vmatpush1.msra.mxu0 0.0
      %2371 = vmatprep.mubr.f32.mxu0 0.0
      %2372 = vmatmul.mubr.f32.gmra.mrb[0].mxu0 %v2228
      %v2373 = vpop.f32.mrb[0].mxu0
      %v2374 = vadd.f32 0.0, %v2373
      %v2375 = vpop.f32.mrb[0].mxu0
      %2376 = vdwg.mxu0
      %v2377 = vadd.f32 %v2214, %v2303
      %v2378 = vadd.f32 %v2215, %v2305
      %v2379 = vadd.f32 %v2216, %v2374
      %s2380 = scalar_lea.vmem %s2, 16
      %v2381 = vld [vmem:[%s2380] sm:$0xf]
      %2382 = vrot.lane.b32.xlu0 %v1737, 107
      %v2383 = vpop.permute.xlu0 %2382
      %2384 = vrot.lane.b32.xlu0 %v1738, 107
      %v2385 = vpop.permute.xlu0 %2384
      %2386 = vrot.lane.b32.xlu0 %v1739, 107
      %v2387 = vpop.permute.xlu0 %2386
      %v2388 = vsel %vm884, %v2383, %v2385
      %v2389 = vsel %vm884, %v2385, %v2387
      %v2391 = vsel %vm231, %v2381, 0
      %v2393 = vsel %vm235, %v2388, 0
      %v2395 = vsel %vm235, %v2389, 0
      %v2397 = vsel %vm235, %v2387, 0
      %2399 = vmatprep.subr.mxu0 %v2395
      %2400 = vmatpush1.msra.mxu0 %v2393
      %2401 = vmatprep.subr.mxu0 0.0
      %2402 = vmatpush1.msra.mxu0 0.0
      %2403 = vmatprep.subr.mxu0 0.0
      %2404 = vmatpush1.msra.mxu0 0.0
      %2405 = vmatprep.subr.mxu0 0.0
      %2406 = vmatpush1.msra.mxu0 0.0
      %2407 = vmatprep.subr.mxu0 0.0
      %2408 = vmatpush1.msra.mxu0 0.0
      %2409 = vmatprep.subr.mxu0 0.0
      %2410 = vmatpush1.msra.mxu0 0.0
      %2411 = vmatprep.subr.mxu0 0.0
      %2412 = vmatpush1.msra.mxu0 0.0
      %2413 = vmatprep.subr.mxu0 0.0
      %2414 = vmatpush1.msra.mxu0 0.0
      %2415 = vmatprep.subr.mxu0 0.0
      %2416 = vmatpush1.msra.mxu0 0.0
      %2417 = vmatprep.subr.mxu0 0.0
      %2418 = vmatpush1.msra.mxu0 0.0
      %2419 = vmatprep.subr.mxu0 0.0
      %2420 = vmatpush1.msra.mxu0 0.0
      %2421 = vmatprep.subr.mxu0 0.0
      %2422 = vmatpush1.msra.mxu0 0.0
      %2423 = vmatprep.subr.mxu0 0.0
      %2424 = vmatpush1.msra.mxu0 0.0
      %2425 = vmatprep.subr.mxu0 0.0
      %2426 = vmatpush1.msra.mxu0 0.0
      %2427 = vmatprep.subr.mxu0 0.0
      %2428 = vmatpush1.msra.mxu0 0.0
      %2429 = vmatprep.subr.mxu0 0.0
      %2430 = vmatpush1.msra.mxu0 0.0
      %2431 = vmatprep.subr.mxu0 0.0
      %2432 = vmatpush1.msra.mxu0 0.0
      %2433 = vmatprep.subr.mxu0 0.0
      %2434 = vmatpush1.msra.mxu0 0.0
      %2435 = vmatprep.subr.mxu0 0.0
      %2436 = vmatpush1.msra.mxu0 0.0
      %2437 = vmatprep.subr.mxu0 0.0
      %2438 = vmatpush1.msra.mxu0 0.0
      %2439 = vmatprep.subr.mxu0 0.0
      %2440 = vmatpush1.msra.mxu0 0.0
      %2441 = vmatprep.subr.mxu0 0.0
      %2442 = vmatpush1.msra.mxu0 0.0
      %2443 = vmatprep.subr.mxu0 0.0
      %2444 = vmatpush1.msra.mxu0 0.0
      %2445 = vmatprep.subr.mxu0 0.0
      %2446 = vmatpush1.msra.mxu0 0.0
      %2447 = vmatprep.subr.mxu0 0.0
      %2448 = vmatpush1.msra.mxu0 0.0
      %2449 = vmatprep.subr.mxu0 0.0
      %2450 = vmatpush1.msra.mxu0 0.0
      %2451 = vmatprep.subr.mxu0 0.0
      %2452 = vmatpush1.msra.mxu0 0.0
      %2453 = vmatprep.subr.mxu0 0.0
      %2454 = vmatpush1.msra.mxu0 0.0
      %2455 = vmatprep.subr.mxu0 0.0
      %2456 = vmatpush1.msra.mxu0 0.0
      %2457 = vmatprep.subr.mxu0 0.0
      %2458 = vmatpush1.msra.mxu0 0.0
      %2459 = vmatprep.subr.mxu0 0.0
      %2460 = vmatpush1.msra.mxu0 0.0
      %2461 = vmatprep.subr.mxu0 0.0
      %2462 = vmatpush1.msra.mxu0 0.0
      %2463 = vmatprep.mubr.f32.mxu0 0.0
      %2464 = vmatmul.mubr.f32.gmra.mrb[0].mxu0 %v2391
      %v2465 = vpop.f32.mrb[0].mxu0
      %v2466 = vadd.f32 0.0, %v2465
      %v2467 = vpop.f32.mrb[0].mxu0
      %v2468 = vadd.f32 0.0, %v2467
      %2469 = vdwg.mxu0
      %2470 = vmatprep.subr.mxu0 0.0
      %2471 = vmatpush1.msra.mxu0 %v2397
      %2472 = vmatprep.subr.mxu0 0.0
      %2473 = vmatpush1.msra.mxu0 0.0
      %2474 = vmatprep.subr.mxu0 0.0
      %2475 = vmatpush1.msra.mxu0 0.0
      %2476 = vmatprep.subr.mxu0 0.0
      %2477 = vmatpush1.msra.mxu0 0.0
      %2478 = vmatprep.subr.mxu0 0.0
      %2479 = vmatpush1.msra.mxu0 0.0
      %2480 = vmatprep.subr.mxu0 0.0
      %2481 = vmatpush1.msra.mxu0 0.0
      %2482 = vmatprep.subr.mxu0 0.0
      %2483 = vmatpush1.msra.mxu0 0.0
      %2484 = vmatprep.subr.mxu0 0.0
      %2485 = vmatpush1.msra.mxu0 0.0
      %2486 = vmatprep.subr.mxu0 0.0
      %2487 = vmatpush1.msra.mxu0 0.0
      %2488 = vmatprep.subr.mxu0 0.0
      %2489 = vmatpush1.msra.mxu0 0.0
      %2490 = vmatprep.subr.mxu0 0.0
      %2491 = vmatpush1.msra.mxu0 0.0
      %2492 = vmatprep.subr.mxu0 0.0
      %2493 = vmatpush1.msra.mxu0 0.0
      %2494 = vmatprep.subr.mxu0 0.0
      %2495 = vmatpush1.msra.mxu0 0.0
      %2496 = vmatprep.subr.mxu0 0.0
      %2497 = vmatpush1.msra.mxu0 0.0
      %2498 = vmatprep.subr.mxu0 0.0
      %2499 = vmatpush1.msra.mxu0 0.0
      %2500 = vmatprep.subr.mxu0 0.0
      %2501 = vmatpush1.msra.mxu0 0.0
      %2502 = vmatprep.subr.mxu0 0.0
      %2503 = vmatpush1.msra.mxu0 0.0
      %2504 = vmatprep.subr.mxu0 0.0
      %2505 = vmatpush1.msra.mxu0 0.0
      %2506 = vmatprep.subr.mxu0 0.0
      %2507 = vmatpush1.msra.mxu0 0.0
      %2508 = vmatprep.subr.mxu0 0.0
      %2509 = vmatpush1.msra.mxu0 0.0
      %2510 = vmatprep.subr.mxu0 0.0
      %2511 = vmatpush1.msra.mxu0 0.0
      %2512 = vmatprep.subr.mxu0 0.0
      %2513 = vmatpush1.msra.mxu0 0.0
      %2514 = vmatprep.subr.mxu0 0.0
      %2515 = vmatpush1.msra.mxu0 0.0
      %2516 = vmatprep.subr.mxu0 0.0
      %2517 = vmatpush1.msra.mxu0 0.0
      %2518 = vmatprep.subr.mxu0 0.0
      %2519 = vmatpush1.msra.mxu0 0.0
      %2520 = vmatprep.subr.mxu0 0.0
      %2521 = vmatpush1.msra.mxu0 0.0
      %2522 = vmatprep.subr.mxu0 0.0
      %2523 = vmatpush1.msra.mxu0 0.0
      %2524 = vmatprep.subr.mxu0 0.0
      %2525 = vmatpush1.msra.mxu0 0.0
      %2526 = vmatprep.subr.mxu0 0.0
      %2527 = vmatpush1.msra.mxu0 0.0
      %2528 = vmatprep.subr.mxu0 0.0
      %2529 = vmatpush1.msra.mxu0 0.0
      %2530 = vmatprep.subr.mxu0 0.0
      %2531 = vmatpush1.msra.mxu0 0.0
      %2532 = vmatprep.subr.mxu0 0.0
      %2533 = vmatpush1.msra.mxu0 0.0
      %2534 = vmatprep.mubr.f32.mxu0 0.0
      %2535 = vmatmul.mubr.f32.gmra.mrb[0].mxu0 %v2391
      %v2536 = vpop.f32.mrb[0].mxu0
      %v2537 = vadd.f32 0.0, %v2536
      %v2538 = vpop.f32.mrb[0].mxu0
      %2539 = vdwg.mxu0
      %v2540 = vadd.f32 %v2377, %v2466
      %v2541 = vadd.f32 %v2378, %v2468
      %v2542 = vadd.f32 %v2379, %v2537
      %s2543 = scalar_lea.vmem %s2, 20
      %v2544 = vld [vmem:[%s2543] sm:$0xf]
      %2545 = vrot.lane.b32.xlu0 %v1737, 106
      %v2546 = vpop.permute.xlu0 %2545
      %2547 = vrot.lane.b32.xlu0 %v1738, 106
      %v2548 = vpop.permute.xlu0 %2547
      %2549 = vrot.lane.b32.xlu0 %v1739, 106
      %v2550 = vpop.permute.xlu0 %2549
      %v2551 = vsel %vm1053, %v2546, %v2548
      %v2552 = vsel %vm1053, %v2548, %v2550
      %v2554 = vsel %vm231, %v2544, 0
      %v2556 = vsel %vm235, %v2551, 0
      %v2558 = vsel %vm235, %v2552, 0
      %v2560 = vsel %vm235, %v2550, 0
      %2562 = vmatprep.subr.mxu0 %v2558
      %2563 = vmatpush1.msra.mxu0 %v2556
      %2564 = vmatprep.subr.mxu0 0.0
      %2565 = vmatpush1.msra.mxu0 0.0
      %2566 = vmatprep.subr.mxu0 0.0
      %2567 = vmatpush1.msra.mxu0 0.0
      %2568 = vmatprep.subr.mxu0 0.0
      %2569 = vmatpush1.msra.mxu0 0.0
      %2570 = vmatprep.subr.mxu0 0.0
      %2571 = vmatpush1.msra.mxu0 0.0
      %2572 = vmatprep.subr.mxu0 0.0
      %2573 = vmatpush1.msra.mxu0 0.0
      %2574 = vmatprep.subr.mxu0 0.0
      %2575 = vmatpush1.msra.mxu0 0.0
      %2576 = vmatprep.subr.mxu0 0.0
      %2577 = vmatpush1.msra.mxu0 0.0
      %2578 = vmatprep.subr.mxu0 0.0
      %2579 = vmatpush1.msra.mxu0 0.0
      %2580 = vmatprep.subr.mxu0 0.0
      %2581 = vmatpush1.msra.mxu0 0.0
      %2582 = vmatprep.subr.mxu0 0.0
      %2583 = vmatpush1.msra.mxu0 0.0
      %2584 = vmatprep.subr.mxu0 0.0
      %2585 = vmatpush1.msra.mxu0 0.0
      %2586 = vmatprep.subr.mxu0 0.0
      %2587 = vmatpush1.msra.mxu0 0.0
      %2588 = vmatprep.subr.mxu0 0.0
      %2589 = vmatpush1.msra.mxu0 0.0
      %2590 = vmatprep.subr.mxu0 0.0
      %2591 = vmatpush1.msra.mxu0 0.0
      %2592 = vmatprep.subr.mxu0 0.0
      %2593 = vmatpush1.msra.mxu0 0.0
      %2594 = vmatprep.subr.mxu0 0.0
      %2595 = vmatpush1.msra.mxu0 0.0
      %2596 = vmatprep.subr.mxu0 0.0
      %2597 = vmatpush1.msra.mxu0 0.0
      %2598 = vmatprep.subr.mxu0 0.0
      %2599 = vmatpush1.msra.mxu0 0.0
      %2600 = vmatprep.subr.mxu0 0.0
      %2601 = vmatpush1.msra.mxu0 0.0
      %2602 = vmatprep.subr.mxu0 0.0
      %2603 = vmatpush1.msra.mxu0 0.0
      %2604 = vmatprep.subr.mxu0 0.0
      %2605 = vmatpush1.msra.mxu0 0.0
      %2606 = vmatprep.subr.mxu0 0.0
      %2607 = vmatpush1.msra.mxu0 0.0
      %2608 = vmatprep.subr.mxu0 0.0
      %2609 = vmatpush1.msra.mxu0 0.0
      %2610 = vmatprep.subr.mxu0 0.0
      %2611 = vmatpush1.msra.mxu0 0.0
      %2612 = vmatprep.subr.mxu0 0.0
      %2613 = vmatpush1.msra.mxu0 0.0
      %2614 = vmatprep.subr.mxu0 0.0
      %2615 = vmatpush1.msra.mxu0 0.0
      %2616 = vmatprep.subr.mxu0 0.0
      %2617 = vmatpush1.msra.mxu0 0.0
      %2618 = vmatprep.subr.mxu0 0.0
      %2619 = vmatpush1.msra.mxu0 0.0
      %2620 = vmatprep.subr.mxu0 0.0
      %2621 = vmatpush1.msra.mxu0 0.0
      %2622 = vmatprep.subr.mxu0 0.0
      %2623 = vmatpush1.msra.mxu0 0.0
      %2624 = vmatprep.subr.mxu0 0.0
      %2625 = vmatpush1.msra.mxu0 0.0
      %2626 = vmatprep.mubr.f32.mxu0 0.0
      %2627 = vmatmul.mubr.f32.gmra.mrb[0].mxu0 %v2554
      %v2628 = vpop.f32.mrb[0].mxu0
      %v2629 = vadd.f32 0.0, %v2628
      %v2630 = vpop.f32.mrb[0].mxu0
      %v2631 = vadd.f32 0.0, %v2630
      %2632 = vdwg.mxu0
      %2633 = vmatprep.subr.mxu0 0.0
      %2634 = vmatpush1.msra.mxu0 %v2560
      %2635 = vmatprep.subr.mxu0 0.0
      %2636 = vmatpush1.msra.mxu0 0.0
      %2637 = vmatprep.subr.mxu0 0.0
      %2638 = vmatpush1.msra.mxu0 0.0
      %2639 = vmatprep.subr.mxu0 0.0
      %2640 = vmatpush1.msra.mxu0 0.0
      %2641 = vmatprep.subr.mxu0 0.0
      %2642 = vmatpush1.msra.mxu0 0.0
      %2643 = vmatprep.subr.mxu0 0.0
      %2644 = vmatpush1.msra.mxu0 0.0
      %2645 = vmatprep.subr.mxu0 0.0
      %2646 = vmatpush1.msra.mxu0 0.0
      %2647 = vmatprep.subr.mxu0 0.0
      %2648 = vmatpush1.msra.mxu0 0.0
      %2649 = vmatprep.subr.mxu0 0.0
      %2650 = vmatpush1.msra.mxu0 0.0
      %2651 = vmatprep.subr.mxu0 0.0
      %2652 = vmatpush1.msra.mxu0 0.0
      %2653 = vmatprep.subr.mxu0 0.0
      %2654 = vmatpush1.msra.mxu0 0.0
      %2655 = vmatprep.subr.mxu0 0.0
      %2656 = vmatpush1.msra.mxu0 0.0
      %2657 = vmatprep.subr.mxu0 0.0
      %2658 = vmatpush1.msra.mxu0 0.0
      %2659 = vmatprep.subr.mxu0 0.0
      %2660 = vmatpush1.msra.mxu0 0.0
      %2661 = vmatprep.subr.mxu0 0.0
      %2662 = vmatpush1.msra.mxu0 0.0
      %2663 = vmatprep.subr.mxu0 0.0
      %2664 = vmatpush1.msra.mxu0 0.0
      %2665 = vmatprep.subr.mxu0 0.0
      %2666 = vmatpush1.msra.mxu0 0.0
      %2667 = vmatprep.subr.mxu0 0.0
      %2668 = vmatpush1.msra.mxu0 0.0
      %2669 = vmatprep.subr.mxu0 0.0
      %2670 = vmatpush1.msra.mxu0 0.0
      %2671 = vmatprep.subr.mxu0 0.0
      %2672 = vmatpush1.msra.mxu0 0.0
      %2673 = vmatprep.subr.mxu0 0.0
      %2674 = vmatpush1.msra.mxu0 0.0
      %2675 = vmatprep.subr.mxu0 0.0
      %2676 = vmatpush1.msra.mxu0 0.0
      %2677 = vmatprep.subr.mxu0 0.0
      %2678 = vmatpush1.msra.mxu0 0.0
      %2679 = vmatprep.subr.mxu0 0.0
      %2680 = vmatpush1.msra.mxu0 0.0
      %2681 = vmatprep.subr.mxu0 0.0
      %2682 = vmatpush1.msra.mxu0 0.0
      %2683 = vmatprep.subr.mxu0 0.0
      %2684 = vmatpush1.msra.mxu0 0.0
      %2685 = vmatprep.subr.mxu0 0.0
      %2686 = vmatpush1.msra.mxu0 0.0
      %2687 = vmatprep.subr.mxu0 0.0
      %2688 = vmatpush1.msra.mxu0 0.0
      %2689 = vmatprep.subr.mxu0 0.0
      %2690 = vmatpush1.msra.mxu0 0.0
      %2691 = vmatprep.subr.mxu0 0.0
      %2692 = vmatpush1.msra.mxu0 0.0
      %2693 = vmatprep.subr.mxu0 0.0
      %2694 = vmatpush1.msra.mxu0 0.0
      %2695 = vmatprep.subr.mxu0 0.0
      %2696 = vmatpush1.msra.mxu0 0.0
      %2697 = vmatprep.mubr.f32.mxu0 0.0
      %2698 = vmatmul.mubr.f32.gmra.mrb[0].mxu0 %v2554
      %v2699 = vpop.f32.mrb[0].mxu0
      %v2700 = vadd.f32 0.0, %v2699
      %v2701 = vpop.f32.mrb[0].mxu0
      %2702 = vdwg.mxu0
      %v2703 = vadd.f32 %v2540, %v2629
      %v2704 = vadd.f32 %v2541, %v2631
      %v2705 = vadd.f32 %v2542, %v2700
      %s2706 = scalar_lea.vmem %s2, 24
      %v2707 = vld [vmem:[%s2706] sm:$0xf]
      %2708 = vrot.lane.b32.xlu0 %v1737, 88
      %v2709 = vpop.permute.xlu0 %2708
      %2710 = vrot.lane.b32.xlu0 %v1738, 88
      %v2711 = vpop.permute.xlu0 %2710
      %2712 = vrot.lane.b32.xlu0 %v1739, 88
      %v2713 = vpop.permute.xlu0 %2712
      %v2714 = vsel %vm1225, %v2709, %v2711
      %v2715 = vsel %vm1225, %v2711, %v2713
      %v2717 = vsel %vm231, %v2707, 0
      %v2719 = vsel %vm235, %v2714, 0
      %v2721 = vsel %vm235, %v2715, 0
      %v2723 = vsel %vm235, %v2713, 0
      %2725 = vmatprep.subr.mxu0 %v2721
      %2726 = vmatpush1.msra.mxu0 %v2719
      %2727 = vmatprep.subr.mxu0 0.0
      %2728 = vmatpush1.msra.mxu0 0.0
      %2729 = vmatprep.subr.mxu0 0.0
      %2730 = vmatpush1.msra.mxu0 0.0
      %2731 = vmatprep.subr.mxu0 0.0
      %2732 = vmatpush1.msra.mxu0 0.0
      %2733 = vmatprep.subr.mxu0 0.0
      %2734 = vmatpush1.msra.mxu0 0.0
      %2735 = vmatprep.subr.mxu0 0.0
      %2736 = vmatpush1.msra.mxu0 0.0
      %2737 = vmatprep.subr.mxu0 0.0
      %2738 = vmatpush1.msra.mxu0 0.0
      %2739 = vmatprep.subr.mxu0 0.0
      %2740 = vmatpush1.msra.mxu0 0.0
      %2741 = vmatprep.subr.mxu0 0.0
      %2742 = vmatpush1.msra.mxu0 0.0
      %2743 = vmatprep.subr.mxu0 0.0
      %2744 = vmatpush1.msra.mxu0 0.0
      %2745 = vmatprep.subr.mxu0 0.0
      %2746 = vmatpush1.msra.mxu0 0.0
      %2747 = vmatprep.subr.mxu0 0.0
      %2748 = vmatpush1.msra.mxu0 0.0
      %2749 = vmatprep.subr.mxu0 0.0
      %2750 = vmatpush1.msra.mxu0 0.0
      %2751 = vmatprep.subr.mxu0 0.0
      %2752 = vmatpush1.msra.mxu0 0.0
      %2753 = vmatprep.subr.mxu0 0.0
      %2754 = vmatpush1.msra.mxu0 0.0
      %2755 = vmatprep.subr.mxu0 0.0
      %2756 = vmatpush1.msra.mxu0 0.0
      %2757 = vmatprep.subr.mxu0 0.0
      %2758 = vmatpush1.msra.mxu0 0.0
      %2759 = vmatprep.subr.mxu0 0.0
      %2760 = vmatpush1.msra.mxu0 0.0
      %2761 = vmatprep.subr.mxu0 0.0
      %2762 = vmatpush1.msra.mxu0 0.0
      %2763 = vmatprep.subr.mxu0 0.0
      %2764 = vmatpush1.msra.mxu0 0.0
      %2765 = vmatprep.subr.mxu0 0.0
      %2766 = vmatpush1.msra.mxu0 0.0
      %2767 = vmatprep.subr.mxu0 0.0
      %2768 = vmatpush1.msra.mxu0 0.0
      %2769 = vmatprep.subr.mxu0 0.0
      %2770 = vmatpush1.msra.mxu0 0.0
      %2771 = vmatprep.subr.mxu0 0.0
      %2772 = vmatpush1.msra.mxu0 0.0
      %2773 = vmatprep.subr.mxu0 0.0
      %2774 = vmatpush1.msra.mxu0 0.0
      %2775 = vmatprep.subr.mxu0 0.0
      %2776 = vmatpush1.msra.mxu0 0.0
      %2777 = vmatprep.subr.mxu0 0.0
      %2778 = vmatpush1.msra.mxu0 0.0
      %2779 = vmatprep.subr.mxu0 0.0
      %2780 = vmatpush1.msra.mxu0 0.0
      %2781 = vmatprep.subr.mxu0 0.0
      %2782 = vmatpush1.msra.mxu0 0.0
      %2783 = vmatprep.subr.mxu0 0.0
      %2784 = vmatpush1.msra.mxu0 0.0
      %2785 = vmatprep.subr.mxu0 0.0
      %2786 = vmatpush1.msra.mxu0 0.0
      %2787 = vmatprep.subr.mxu0 0.0
      %2788 = vmatpush1.msra.mxu0 0.0
      %2789 = vmatprep.mubr.f32.mxu0 0.0
      %2790 = vmatmul.mubr.f32.gmra.mrb[0].mxu0 %v2717
      %v2791 = vpop.f32.mrb[0].mxu0
      %v2792 = vadd.f32 0.0, %v2791
      %v2793 = vpop.f32.mrb[0].mxu0
      %v2794 = vadd.f32 0.0, %v2793
      %2795 = vdwg.mxu0
      %2796 = vmatprep.subr.mxu0 0.0
      %2797 = vmatpush1.msra.mxu0 %v2723
      %2798 = vmatprep.subr.mxu0 0.0
      %2799 = vmatpush1.msra.mxu0 0.0
      %2800 = vmatprep.subr.mxu0 0.0
      %2801 = vmatpush1.msra.mxu0 0.0
      %2802 = vmatprep.subr.mxu0 0.0
      %2803 = vmatpush1.msra.mxu0 0.0
      %2804 = vmatprep.subr.mxu0 0.0
      %2805 = vmatpush1.msra.mxu0 0.0
      %2806 = vmatprep.subr.mxu0 0.0
      %2807 = vmatpush1.msra.mxu0 0.0
      %2808 = vmatprep.subr.mxu0 0.0
      %2809 = vmatpush1.msra.mxu0 0.0
      %2810 = vmatprep.subr.mxu0 0.0
      %2811 = vmatpush1.msra.mxu0 0.0
      %2812 = vmatprep.subr.mxu0 0.0
      %2813 = vmatpush1.msra.mxu0 0.0
      %2814 = vmatprep.subr.mxu0 0.0
      %2815 = vmatpush1.msra.mxu0 0.0
      %2816 = vmatprep.subr.mxu0 0.0
      %2817 = vmatpush1.msra.mxu0 0.0
      %2818 = vmatprep.subr.mxu0 0.0
      %2819 = vmatpush1.msra.mxu0 0.0
      %2820 = vmatprep.subr.mxu0 0.0
      %2821 = vmatpush1.msra.mxu0 0.0
      %2822 = vmatprep.subr.mxu0 0.0
      %2823 = vmatpush1.msra.mxu0 0.0
      %2824 = vmatprep.subr.mxu0 0.0
      %2825 = vmatpush1.msra.mxu0 0.0
      %2826 = vmatprep.subr.mxu0 0.0
      %2827 = vmatpush1.msra.mxu0 0.0
      %2828 = vmatprep.subr.mxu0 0.0
      %2829 = vmatpush1.msra.mxu0 0.0
      %2830 = vmatprep.subr.mxu0 0.0
      %2831 = vmatpush1.msra.mxu0 0.0
      %2832 = vmatprep.subr.mxu0 0.0
      %2833 = vmatpush1.msra.mxu0 0.0
      %2834 = vmatprep.subr.mxu0 0.0
      %2835 = vmatpush1.msra.mxu0 0.0
      %2836 = vmatprep.subr.mxu0 0.0
      %2837 = vmatpush1.msra.mxu0 0.0
      %2838 = vmatprep.subr.mxu0 0.0
      %2839 = vmatpush1.msra.mxu0 0.0
      %2840 = vmatprep.subr.mxu0 0.0
      %2841 = vmatpush1.msra.mxu0 0.0
      %2842 = vmatprep.subr.mxu0 0.0
      %2843 = vmatpush1.msra.mxu0 0.0
      %2844 = vmatprep.subr.mxu0 0.0
      %2845 = vmatpush1.msra.mxu0 0.0
      %2846 = vmatprep.subr.mxu0 0.0
      %2847 = vmatpush1.msra.mxu0 0.0
      %2848 = vmatprep.subr.mxu0 0.0
      %2849 = vmatpush1.msra.mxu0 0.0
      %2850 = vmatprep.subr.mxu0 0.0
      %2851 = vmatpush1.msra.mxu0 0.0
      %2852 = vmatprep.subr.mxu0 0.0
      %2853 = vmatpush1.msra.mxu0 0.0
      %2854 = vmatprep.subr.mxu0 0.0
      %2855 = vmatpush1.msra.mxu0 0.0
      %2856 = vmatprep.subr.mxu0 0.0
      %2857 = vmatpush1.msra.mxu0 0.0
      %2858 = vmatprep.subr.mxu0 0.0
      %2859 = vmatpush1.msra.mxu0 0.0
      %2860 = vmatprep.mubr.f32.mxu0 0.0
      %2861 = vmatmul.mubr.f32.gmra.mrb[0].mxu0 %v2717
      %v2862 = vpop.f32.mrb[0].mxu0
      %v2863 = vadd.f32 0.0, %v2862
      %v2864 = vpop.f32.mrb[0].mxu0
      %2865 = vdwg.mxu0
      %v2866 = vadd.f32 %v2703, %v2792
      %v2867 = vadd.f32 %v2704, %v2794
      %v2868 = vadd.f32 %v2705, %v2863
      %s2869 = scalar_lea.vmem %s2, 28
      %v2870 = vld [vmem:[%s2869] sm:$0xf]
      %2871 = vrot.lane.b32.xlu0 %v1737, 87
      %v2872 = vpop.permute.xlu0 %2871
      %2873 = vrot.lane.b32.xlu0 %v1738, 87
      %v2874 = vpop.permute.xlu0 %2873
      %2875 = vrot.lane.b32.xlu0 %v1739, 87
      %v2876 = vpop.permute.xlu0 %2875
      %v2877 = vsel %vm1398, %v2872, %v2874
      %v2878 = vsel %vm1398, %v2874, %v2876
      %v2880 = vsel %vm231, %v2870, 0
      %v2882 = vsel %vm235, %v2877, 0
      %v2884 = vsel %vm235, %v2878, 0
      %v2886 = vsel %vm235, %v2876, 0
      %2888 = vmatprep.subr.mxu0 %v2884
      %2889 = vmatpush1.msra.mxu0 %v2882
      %2890 = vmatprep.subr.mxu0 0.0
      %2891 = vmatpush1.msra.mxu0 0.0
      %2892 = vmatprep.subr.mxu0 0.0
      %2893 = vmatpush1.msra.mxu0 0.0
      %2894 = vmatprep.subr.mxu0 0.0
      %2895 = vmatpush1.msra.mxu0 0.0
      %2896 = vmatprep.subr.mxu0 0.0
      %2897 = vmatpush1.msra.mxu0 0.0
      %2898 = vmatprep.subr.mxu0 0.0
      %2899 = vmatpush1.msra.mxu0 0.0
      %2900 = vmatprep.subr.mxu0 0.0
      %2901 = vmatpush1.msra.mxu0 0.0
      %2902 = vmatprep.subr.mxu0 0.0
      %2903 = vmatpush1.msra.mxu0 0.0
      %2904 = vmatprep.subr.mxu0 0.0
      %2905 = vmatpush1.msra.mxu0 0.0
      %2906 = vmatprep.subr.mxu0 0.0
      %2907 = vmatpush1.msra.mxu0 0.0
      %2908 = vmatprep.subr.mxu0 0.0
      %2909 = vmatpush1.msra.mxu0 0.0
      %2910 = vmatprep.subr.mxu0 0.0
      %2911 = vmatpush1.msra.mxu0 0.0
      %2912 = vmatprep.subr.mxu0 0.0
      %2913 = vmatpush1.msra.mxu0 0.0
      %2914 = vmatprep.subr.mxu0 0.0
      %2915 = vmatpush1.msra.mxu0 0.0
      %2916 = vmatprep.subr.mxu0 0.0
      %2917 = vmatpush1.msra.mxu0 0.0
      %2918 = vmatprep.subr.mxu0 0.0
      %2919 = vmatpush1.msra.mxu0 0.0
      %2920 = vmatprep.subr.mxu0 0.0
      %2921 = vmatpush1.msra.mxu0 0.0
      %2922 = vmatprep.subr.mxu0 0.0
      %2923 = vmatpush1.msra.mxu0 0.0
      %2924 = vmatprep.subr.mxu0 0.0
      %2925 = vmatpush1.msra.mxu0 0.0
      %2926 = vmatprep.subr.mxu0 0.0
      %2927 = vmatpush1.msra.mxu0 0.0
      %2928 = vmatprep.subr.mxu0 0.0
      %2929 = vmatpush1.msra.mxu0 0.0
      %2930 = vmatprep.subr.mxu0 0.0
      %2931 = vmatpush1.msra.mxu0 0.0
      %2932 = vmatprep.subr.mxu0 0.0
      %2933 = vmatpush1.msra.mxu0 0.0
      %2934 = vmatprep.subr.mxu0 0.0
      %2935 = vmatpush1.msra.mxu0 0.0
      %2936 = vmatprep.subr.mxu0 0.0
      %2937 = vmatpush1.msra.mxu0 0.0
      %2938 = vmatprep.subr.mxu0 0.0
      %2939 = vmatpush1.msra.mxu0 0.0
      %2940 = vmatprep.subr.mxu0 0.0
      %2941 = vmatpush1.msra.mxu0 0.0
      %2942 = vmatprep.subr.mxu0 0.0
      %2943 = vmatpush1.msra.mxu0 0.0
      %2944 = vmatprep.subr.mxu0 0.0
      %2945 = vmatpush1.msra.mxu0 0.0
      %2946 = vmatprep.subr.mxu0 0.0
      %2947 = vmatpush1.msra.mxu0 0.0
      %2948 = vmatprep.subr.mxu0 0.0
      %2949 = vmatpush1.msra.mxu0 0.0
      %2950 = vmatprep.subr.mxu0 0.0
      %2951 = vmatpush1.msra.mxu0 0.0
      %2952 = vmatprep.mubr.f32.mxu0 0.0
      %2953 = vmatmul.mubr.f32.gmra.mrb[0].mxu0 %v2880
      %v2954 = vpop.f32.mrb[0].mxu0
      %v2955 = vadd.f32 0.0, %v2954
      %v2956 = vpop.f32.mrb[0].mxu0
      %v2957 = vadd.f32 0.0, %v2956
      %2958 = vdwg.mxu0
      %2959 = vmatprep.subr.mxu0 0.0
      %2960 = vmatpush1.msra.mxu0 %v2886
      %2961 = vmatprep.subr.mxu0 0.0
      %2962 = vmatpush1.msra.mxu0 0.0
      %2963 = vmatprep.subr.mxu0 0.0
      %2964 = vmatpush1.msra.mxu0 0.0
      %2965 = vmatprep.subr.mxu0 0.0
      %2966 = vmatpush1.msra.mxu0 0.0
      %2967 = vmatprep.subr.mxu0 0.0
      %2968 = vmatpush1.msra.mxu0 0.0
      %2969 = vmatprep.subr.mxu0 0.0
      %2970 = vmatpush1.msra.mxu0 0.0
      %2971 = vmatprep.subr.mxu0 0.0
      %2972 = vmatpush1.msra.mxu0 0.0
      %2973 = vmatprep.subr.mxu0 0.0
      %2974 = vmatpush1.msra.mxu0 0.0
      %2975 = vmatprep.subr.mxu0 0.0
      %2976 = vmatpush1.msra.mxu0 0.0
      %2977 = vmatprep.subr.mxu0 0.0
      %2978 = vmatpush1.msra.mxu0 0.0
      %2979 = vmatprep.subr.mxu0 0.0
      %2980 = vmatpush1.msra.mxu0 0.0
      %2981 = vmatprep.subr.mxu0 0.0
      %2982 = vmatpush1.msra.mxu0 0.0
      %2983 = vmatprep.subr.mxu0 0.0
      %2984 = vmatpush1.msra.mxu0 0.0
      %2985 = vmatprep.subr.mxu0 0.0
      %2986 = vmatpush1.msra.mxu0 0.0
      %2987 = vmatprep.subr.mxu0 0.0
      %2988 = vmatpush1.msra.mxu0 0.0
      %2989 = vmatprep.subr.mxu0 0.0
      %2990 = vmatpush1.msra.mxu0 0.0
      %2991 = vmatprep.subr.mxu0 0.0
      %2992 = vmatpush1.msra.mxu0 0.0
      %2993 = vmatprep.subr.mxu0 0.0
      %2994 = vmatpush1.msra.mxu0 0.0
      %2995 = vmatprep.subr.mxu0 0.0
      %2996 = vmatpush1.msra.mxu0 0.0
      %2997 = vmatprep.subr.mxu0 0.0
      %2998 = vmatpush1.msra.mxu0 0.0
      %2999 = vmatprep.subr.mxu0 0.0
      %3000 = vmatpush1.msra.mxu0 0.0
      %3001 = vmatprep.subr.mxu0 0.0
      %3002 = vmatpush1.msra.mxu0 0.0
      %3003 = vmatprep.subr.mxu0 0.0
      %3004 = vmatpush1.msra.mxu0 0.0
      %3005 = vmatprep.subr.mxu0 0.0
      %3006 = vmatpush1.msra.mxu0 0.0
      %3007 = vmatprep.subr.mxu0 0.0
      %3008 = vmatpush1.msra.mxu0 0.0
      %3009 = vmatprep.subr.mxu0 0.0
      %3010 = vmatpush1.msra.mxu0 0.0
      %3011 = vmatprep.subr.mxu0 0.0
      %3012 = vmatpush1.msra.mxu0 0.0
      %3013 = vmatprep.subr.mxu0 0.0
      %3014 = vmatpush1.msra.mxu0 0.0
      %3015 = vmatprep.subr.mxu0 0.0
      %3016 = vmatpush1.msra.mxu0 0.0
      %3017 = vmatprep.subr.mxu0 0.0
      %3018 = vmatpush1.msra.mxu0 0.0
      %3019 = vmatprep.subr.mxu0 0.0
      %3020 = vmatpush1.msra.mxu0 0.0
      %3021 = vmatprep.subr.mxu0 0.0
      %3022 = vmatpush1.msra.mxu0 0.0
      %3023 = vmatprep.mubr.f32.mxu0 0.0
      %3024 = vmatmul.mubr.f32.gmra.mrb[0].mxu0 %v2880
      %v3025 = vpop.f32.mrb[0].mxu0
      %v3026 = vadd.f32 0.0, %v3025
      %v3027 = vpop.f32.mrb[0].mxu0
      %3028 = vdwg.mxu0
      %v3029 = vadd.f32 %v2866, %v2955
      %v3030 = vadd.f32 %v2867, %v2957
      %v3031 = vadd.f32 %v2868, %v3026
      %s3032 = scalar_lea.vmem %s2, 32
      %v3033 = vld [vmem:[%s3032] sm:$0xf]
      %3034 = vrot.lane.b32.xlu0 %v1737, 86
      %v3035 = vpop.permute.xlu0 %3034
      %3036 = vrot.lane.b32.xlu0 %v1738, 86
      %v3037 = vpop.permute.xlu0 %3036
      %3038 = vrot.lane.b32.xlu0 %v1739, 86
      %v3039 = vpop.permute.xlu0 %3038
      %v3040 = vsel %vm1571, %v3035, %v3037
      %v3041 = vsel %vm1571, %v3037, %v3039
      %v3043 = vsel %vm231, %v3033, 0
      %v3045 = vsel %vm235, %v3040, 0
      %v3047 = vsel %vm235, %v3041, 0
      %v3049 = vsel %vm235, %v3039, 0
      %3051 = vmatprep.subr.mxu0 %v3047
      %3052 = vmatpush1.msra.mxu0 %v3045
      %3053 = vmatprep.subr.mxu0 0.0
      %3054 = vmatpush1.msra.mxu0 0.0
      %3055 = vmatprep.subr.mxu0 0.0
      %3056 = vmatpush1.msra.mxu0 0.0
      %3057 = vmatprep.subr.mxu0 0.0
      %3058 = vmatpush1.msra.mxu0 0.0
      %3059 = vmatprep.subr.mxu0 0.0
      %3060 = vmatpush1.msra.mxu0 0.0
      %3061 = vmatprep.subr.mxu0 0.0
      %3062 = vmatpush1.msra.mxu0 0.0
      %3063 = vmatprep.subr.mxu0 0.0
      %3064 = vmatpush1.msra.mxu0 0.0
      %3065 = vmatprep.subr.mxu0 0.0
      %3066 = vmatpush1.msra.mxu0 0.0
      %3067 = vmatprep.subr.mxu0 0.0
      %3068 = vmatpush1.msra.mxu0 0.0
      %3069 = vmatprep.subr.mxu0 0.0
      %3070 = vmatpush1.msra.mxu0 0.0
      %3071 = vmatprep.subr.mxu0 0.0
      %3072 = vmatpush1.msra.mxu0 0.0
      %3073 = vmatprep.subr.mxu0 0.0
      %3074 = vmatpush1.msra.mxu0 0.0
      %3075 = vmatprep.subr.mxu0 0.0
      %3076 = vmatpush1.msra.mxu0 0.0
      %3077 = vmatprep.subr.mxu0 0.0
      %3078 = vmatpush1.msra.mxu0 0.0
      %3079 = vmatprep.subr.mxu0 0.0
      %3080 = vmatpush1.msra.mxu0 0.0
      %3081 = vmatprep.subr.mxu0 0.0
      %3082 = vmatpush1.msra.mxu0 0.0
      %3083 = vmatprep.subr.mxu0 0.0
      %3084 = vmatpush1.msra.mxu0 0.0
      %3085 = vmatprep.subr.mxu0 0.0
      %3086 = vmatpush1.msra.mxu0 0.0
      %3087 = vmatprep.subr.mxu0 0.0
      %3088 = vmatpush1.msra.mxu0 0.0
      %3089 = vmatprep.subr.mxu0 0.0
      %3090 = vmatpush1.msra.mxu0 0.0
      %3091 = vmatprep.subr.mxu0 0.0
      %3092 = vmatpush1.msra.mxu0 0.0
      %3093 = vmatprep.subr.mxu0 0.0
      %3094 = vmatpush1.msra.mxu0 0.0
      %3095 = vmatprep.subr.mxu0 0.0
      %3096 = vmatpush1.msra.mxu0 0.0
      %3097 = vmatprep.subr.mxu0 0.0
      %3098 = vmatpush1.msra.mxu0 0.0
      %3099 = vmatprep.subr.mxu0 0.0
      %3100 = vmatpush1.msra.mxu0 0.0
      %3101 = vmatprep.subr.mxu0 0.0
      %3102 = vmatpush1.msra.mxu0 0.0
      %3103 = vmatprep.subr.mxu0 0.0
      %3104 = vmatpush1.msra.mxu0 0.0
      %3105 = vmatprep.subr.mxu0 0.0
      %3106 = vmatpush1.msra.mxu0 0.0
      %3107 = vmatprep.subr.mxu0 0.0
      %3108 = vmatpush1.msra.mxu0 0.0
      %3109 = vmatprep.subr.mxu0 0.0
      %3110 = vmatpush1.msra.mxu0 0.0
      %3111 = vmatprep.subr.mxu0 0.0
      %3112 = vmatpush1.msra.mxu0 0.0
      %3113 = vmatprep.subr.mxu0 0.0
      %3114 = vmatpush1.msra.mxu0 0.0
      %3115 = vmatprep.mubr.f32.mxu0 0.0
      %3116 = vmatmul.mubr.f32.gmra.mrb[0].mxu0 %v3043
      %v3117 = vpop.f32.mrb[0].mxu0
      %v3118 = vadd.f32 0.0, %v3117
      %v3119 = vpop.f32.mrb[0].mxu0
      %v3120 = vadd.f32 0.0, %v3119
      %3121 = vdwg.mxu0
      %3122 = vmatprep.subr.mxu0 0.0
      %3123 = vmatpush1.msra.mxu0 %v3049
      %3124 = vmatprep.subr.mxu0 0.0
      %3125 = vmatpush1.msra.mxu0 0.0
      %3126 = vmatprep.subr.mxu0 0.0
      %3127 = vmatpush1.msra.mxu0 0.0
      %3128 = vmatprep.subr.mxu0 0.0
      %3129 = vmatpush1.msra.mxu0 0.0
      %3130 = vmatprep.subr.mxu0 0.0
      %3131 = vmatpush1.msra.mxu0 0.0
      %3132 = vmatprep.subr.mxu0 0.0
      %3133 = vmatpush1.msra.mxu0 0.0
      %3134 = vmatprep.subr.mxu0 0.0
      %3135 = vmatpush1.msra.mxu0 0.0
      %3136 = vmatprep.subr.mxu0 0.0
      %3137 = vmatpush1.msra.mxu0 0.0
      %3138 = vmatprep.subr.mxu0 0.0
      %3139 = vmatpush1.msra.mxu0 0.0
      %3140 = vmatprep.subr.mxu0 0.0
      %3141 = vmatpush1.msra.mxu0 0.0
      %3142 = vmatprep.subr.mxu0 0.0
      %3143 = vmatpush1.msra.mxu0 0.0
      %3144 = vmatprep.subr.mxu0 0.0
      %3145 = vmatpush1.msra.mxu0 0.0
      %3146 = vmatprep.subr.mxu0 0.0
      %3147 = vmatpush1.msra.mxu0 0.0
      %3148 = vmatprep.subr.mxu0 0.0
      %3149 = vmatpush1.msra.mxu0 0.0
      %3150 = vmatprep.subr.mxu0 0.0
      %3151 = vmatpush1.msra.mxu0 0.0
      %3152 = vmatprep.subr.mxu0 0.0
      %3153 = vmatpush1.msra.mxu0 0.0
      %3154 = vmatprep.subr.mxu0 0.0
      %3155 = vmatpush1.msra.mxu0 0.0
      %3156 = vmatprep.subr.mxu0 0.0
      %3157 = vmatpush1.msra.mxu0 0.0
      %3158 = vmatprep.subr.mxu0 0.0
      %3159 = vmatpush1.msra.mxu0 0.0
      %3160 = vmatprep.subr.mxu0 0.0
      %3161 = vmatpush1.msra.mxu0 0.0
      %3162 = vmatprep.subr.mxu0 0.0
      %3163 = vmatpush1.msra.mxu0 0.0
      %3164 = vmatprep.subr.mxu0 0.0
      %3165 = vmatpush1.msra.mxu0 0.0
      %3166 = vmatprep.subr.mxu0 0.0
      %3167 = vmatpush1.msra.mxu0 0.0
      %3168 = vmatprep.subr.mxu0 0.0
      %3169 = vmatpush1.msra.mxu0 0.0
      %3170 = vmatprep.subr.mxu0 0.0
      %3171 = vmatpush1.msra.mxu0 0.0
      %3172 = vmatprep.subr.mxu0 0.0
      %3173 = vmatpush1.msra.mxu0 0.0
      %3174 = vmatprep.subr.mxu0 0.0
      %3175 = vmatpush1.msra.mxu0 0.0
      %3176 = vmatprep.subr.mxu0 0.0
      %3177 = vmatpush1.msra.mxu0 0.0
      %3178 = vmatprep.subr.mxu0 0.0
      %3179 = vmatpush1.msra.mxu0 0.0
      %3180 = vmatprep.subr.mxu0 0.0
      %3181 = vmatpush1.msra.mxu0 0.0
      %3182 = vmatprep.subr.mxu0 0.0
      %3183 = vmatpush1.msra.mxu0 0.0
      %3184 = vmatprep.subr.mxu0 0.0
      %3185 = vmatpush1.msra.mxu0 0.0
      %3186 = vmatprep.mubr.f32.mxu0 0.0
      %3187 = vmatmul.mubr.f32.gmra.mrb[0].mxu0 %v3043
      %v3188 = vpop.f32.mrb[0].mxu0
      %v3189 = vadd.f32 0.0, %v3188
      %v3190 = vpop.f32.mrb[0].mxu0
      %3191 = vdwg.mxu0
      %v3192 = vadd.f32 %v3029, %v3118
      %v3193 = vadd.f32 %v3030, %v3120
      %v3194 = vadd.f32 %v3031, %v3189
      %v3195 = vld [vmem:[%s165] sm:$0xff]
      %v3196 = vld [vmem:[%s165 + $0x8] sm:$0xf]
      %v3199 = vcombine.high %v3195, %v3195
      %3200 = vrot.lane.b32.xlu0 %v3195, 86
      %v3201 = vpop.permute.xlu0 %3200
      %3202 = vrot.lane.b32.xlu0 %v3199, 86
      %v3203 = vpop.permute.xlu0 %3202
      %3204 = vrot.lane.b32.xlu0 %v3196, 86
      %v3205 = vpop.permute.xlu0 %3204
      %v3206 = vsel %vm1571, %v3201, %v3203
      %v3207 = vsel %vm1571, %v3203, %v3205
      %v3211 = vadd.f32 %v3192, %v3206
      %v3212 = vadd.f32 %v3193, %v3207
      %v3213 = vadd.f32 %v3194, %v3205
      %v3214 = vmax.f32 %v3211, 0.0
      %v3215 = vmax.f32 %v3212, 0.0
      %v3216 = vmax.f32 %v3213, 0.0
      %v3219 = vcombine.low %v3214, %v3215
      %3221 = vst [vmem:[%s170] sm:$0xff] %v3219
      %vm3222 = vcmask 519168
      %3223 = vst.msk [vmem:[%s170 + $0x8] sm:$0xf] %vm3222, %v3216
      %p3224 = scmp.lt.s32.totalorder %s14, 1
      %s3225 = scalar_select %p3224, %s14, 1
      %s3226 = smul.addr %s3225, 3
      %s3227 = smul.addr %s3226, 4
      %s3228 = scalar_lea.vmem %s3, %s3227
      // Predicated region
      $region33: #{basic_block_pallas.1} parent=31 // pred_check
        %p3229 = pneg %p100
      $region34: #{basic_block_pallas.1} parent=31 // pred_check_branch
        %3231 = sbr.rel (%p3229) target = $region36
      $region35: #{basic_block_pallas.1} parent=31 // pred_region
        _
      $region36: #{basic_block_pallas.1} parent=31 // pred_fallthru
        _
    $region32: #{basic_block_pallas.1} parent=5 // pred_fallthru
      _
    %p3232 = scmp.le.s32.totalorder 2, %s9
    // Predicated region
    $region37: #{basic_block_pallas.1} parent=5 // pred_check
      %p3233 = pneg %p3232
    $region38: #{basic_block_pallas.1} parent=5 // pred_check_branch
      %3235 = sbr.rel (%p3233) target = $region40
    $region39: #{basic_block_pallas.1} parent=5 // pred_region
      %s3236 = ssub.s32 %s9, 2
      // Predicated region
      $region41: #{basic_block_pallas.1} parent=39 // pred_check
        %p3237 = pneg %p106
      $region42: #{basic_block_pallas.1} parent=39 // pred_check_branch
        %3239 = sbr.rel (%p3237) target = $region44
      $region43: #{basic_block_pallas.1} parent=39 // pred_region
        %p3240 = scmp.lt.s32.totalorder %s15, 1
        %s3241 = scalar_select %p3240, %s15, 1
        %s3242 = smul.addr %s3241, 3
        %s3243 = smul.addr %s3242, 4
        %s3244 = scalar_lea.vmem %s3, %s3243
      $region44: #{basic_block_pallas.1} parent=39 // pred_fallthru
        _
    $region40: #{basic_block_pallas.1} parent=5 // pred_fallthru
      _
  $region6: #{basic_block_pallas.1} parent=0 // loop_footer
    %s13 = sadd.s32 1, %s9
  $region7: #{basic_block_pallas.1} parent=0 // loop_footer_branch
    %8 = sbr.rel target = $region3
  $region8: #{basic_block_pallas.1} parent=0 // loop_exit
    _

</llo_original>
